<compile_context>
chip_gen: v7x
topology: tpu7x:2x2x1
jax: 0.10.0
libtpu: 0.0.40
codegen_flags: <defaults>
</compile_context>

<pallas_src>
import jax
import jax.numpy as jnp
from jax.experimental import pallas as pl
from jax.experimental.pallas import tpu as pltpu

N_TIMES = 22
STEP = 5
H, W = 5, 7
F = 6


def _shapenet_reshape_kernel(x_ref, o_ref):
    # x_ref: (T, HW, F) ; o_ref: (T, F*HW) — both fully resident in VMEM.
    # out2d[t, c*HW + hw] = x[t, hw, c]
    total, hw, f = x_ref.shape
    # One batched XLU transpose of the last two dims (pure data movement).
    y = jnp.transpose(x_ref[...], (0, 2, 1))        # (T, F, HW)
    # F static slice stores assemble the lane-dense (T, F*HW) output slab so
    # the HBM writeback is one contiguous DMA of an unpadded buffer.
    for c in range(f):
        o_ref[:, c * hw:(c + 1) * hw] = y[:, c, :]


def shapenet_reshape(data: jax.Array, n_times: int = N_TIMES, h: int = H, w: int = W) -> jax.Array:
    total, hw, f = data.shape
    assert total % n_times == 0, (total, n_times)
    assert hw == h * w, (hw, h, w)
    step = total // n_times

    itemsize = jnp.dtype(data.dtype).itemsize
    out2d = pl.pallas_call(
        _shapenet_reshape_kernel,
        out_shape=jax.ShapeDtypeStruct((total, f * hw), data.dtype),
        # Single invocation (no grid): whole arrays live in VMEM for the call.
        in_specs=[pl.BlockSpec(memory_space=pltpu.MemorySpace.VMEM)],
        out_specs=pl.BlockSpec(memory_space=pltpu.MemorySpace.VMEM),
        # Advise XLA this is a tiny pure-copy op so it schedules it cheaply.
        cost_estimate=pl.CostEstimate(
            flops=0,
            transcendentals=0,
            bytes_accessed=2 * data.size * itemsize,
        ),
    )(data)

    # Free (contiguous) reshape: (n*step, f*hw) -> (n, step*f, H, W).
    # Flat index order is identical (n, s, c, h, w), so this is metadata-only.
    return out2d.reshape(n_times, step * f, h, w)


def _reference(data: jax.Array, n_times: int = N_TIMES, h: int = H, w: int = W) -> jax.Array:
    total, hw, f = data.shape
    step = total // n_times
    y = data.reshape(n_times, step, h, w, f)
    y = jnp.transpose(y, (0, 1, 4, 2, 3))
    return y.reshape(n_times, step * f, h, w)


if __name__ == "__main__":
    key = jax.random.PRNGKey(0)
    # Actual ShapeNet shape from the module docstring: (110, 35, 6) with n_times=22.
    data = jax.random.normal(key, (N_TIMES * STEP, H * W, F), dtype=jnp.float32)

    out = shapenet_reshape(data, N_TIMES)
    out = jax.block_until_ready(out)

    ref = _reference(data, N_TIMES)
    assert out.shape == (22, 30, 5, 7), out.shape
    assert out.dtype == data.dtype
    assert jnp.array_equal(out, ref), "kernel output does not match reference rearrange"
    print("KERNEL_OK")
</pallas_src>

<mosaic_0001>
module attributes {stable_mosaic.version = 11 : i64} {
  func.func @_shapenet_reshape_kernel(%arg0: memref<110x35x6xf32, #tpu.memory_space<vmem>>, %arg1: memref<110x210xf32, #tpu.memory_space<vmem>>) attributes {dimension_semantics = [], scalar_prefetch = 0 : i64, scratch_operands = 0 : i64, tpu.core_type = #tpu.core_type<tc>} {
    %c0 = arith.constant 0 : index
    %c0_0 = arith.constant 0 : index
    %c0_1 = arith.constant 0 : index
    %0 = vector.load %arg0[%c0, %c0_0, %c0_1] : memref<110x35x6xf32, #tpu.memory_space<vmem>>, vector<110x35x6xf32>
    %1 = tpu.transpose %0, [0, 2, 1] : vector<110x35x6xf32> -> vector<110x6x35xf32>
    %2 = vector.extract_strided_slice %1 {offsets = [0, 0, 0], sizes = [110, 1, 35], strides = [1, 1, 1]} : vector<110x6x35xf32> to vector<110x1x35xf32>
    %3 = vector.shape_cast %2 : vector<110x1x35xf32> to vector<110x35xf32>
    %c0_2 = arith.constant 0 : index
    %c0_3 = arith.constant 0 : index
    %4 = vector.load %arg1[%c0_2, %c0_3] : memref<110x210xf32, #tpu.memory_space<vmem>>, vector<110x35xf32>
    tpu.vector_store %arg1[%c0_2, %c0_3], %3 {strides = array<i32>} : memref<110x210xf32, #tpu.memory_space<vmem>>, vector<110x35xf32>,
    %5 = vector.extract_strided_slice %1 {offsets = [0, 1, 0], sizes = [110, 1, 35], strides = [1, 1, 1]} : vector<110x6x35xf32> to vector<110x1x35xf32>
    %6 = vector.shape_cast %5 : vector<110x1x35xf32> to vector<110x35xf32>
    %c0_4 = arith.constant 0 : index
    %c35 = arith.constant 35 : index
    %7 = vector.load %arg1[%c0_4, %c35] : memref<110x210xf32, #tpu.memory_space<vmem>>, vector<110x35xf32>
    tpu.vector_store %arg1[%c0_4, %c35], %6 {strides = array<i32>} : memref<110x210xf32, #tpu.memory_space<vmem>>, vector<110x35xf32>,
    %8 = vector.extract_strided_slice %1 {offsets = [0, 2, 0], sizes = [110, 1, 35], strides = [1, 1, 1]} : vector<110x6x35xf32> to vector<110x1x35xf32>
    %9 = vector.shape_cast %8 : vector<110x1x35xf32> to vector<110x35xf32>
    %c0_5 = arith.constant 0 : index
    %c70 = arith.constant 70 : index
    %10 = vector.load %arg1[%c0_5, %c70] : memref<110x210xf32, #tpu.memory_space<vmem>>, vector<110x35xf32>
    tpu.vector_store %arg1[%c0_5, %c70], %9 {strides = array<i32>} : memref<110x210xf32, #tpu.memory_space<vmem>>, vector<110x35xf32>,
    %11 = vector.extract_strided_slice %1 {offsets = [0, 3, 0], sizes = [110, 1, 35], strides = [1, 1, 1]} : vector<110x6x35xf32> to vector<110x1x35xf32>
    %12 = vector.shape_cast %11 : vector<110x1x35xf32> to vector<110x35xf32>
    %c0_6 = arith.constant 0 : index
    %c105 = arith.constant 105 : index
    %13 = vector.load %arg1[%c0_6, %c105] : memref<110x210xf32, #tpu.memory_space<vmem>>, vector<110x35xf32>
    tpu.vector_store %arg1[%c0_6, %c105], %12 {strides = array<i32>} : memref<110x210xf32, #tpu.memory_space<vmem>>, vector<110x35xf32>,
    %14 = vector.extract_strided_slice %1 {offsets = [0, 4, 0], sizes = [110, 1, 35], strides = [1, 1, 1]} : vector<110x6x35xf32> to vector<110x1x35xf32>
    %15 = vector.shape_cast %14 : vector<110x1x35xf32> to vector<110x35xf32>
    %c0_7 = arith.constant 0 : index
    %c140 = arith.constant 140 : index
    %16 = vector.load %arg1[%c0_7, %c140] : memref<110x210xf32, #tpu.memory_space<vmem>>, vector<110x35xf32>
    tpu.vector_store %arg1[%c0_7, %c140], %15 {strides = array<i32>} : memref<110x210xf32, #tpu.memory_space<vmem>>, vector<110x35xf32>,
    %17 = vector.extract_strided_slice %1 {offsets = [0, 5, 0], sizes = [110, 1, 35], strides = [1, 1, 1]} : vector<110x6x35xf32> to vector<110x1x35xf32>
    %18 = vector.shape_cast %17 : vector<110x1x35xf32> to vector<110x35xf32>
    %c0_8 = arith.constant 0 : index
    %c175 = arith.constant 175 : index
    %19 = vector.load %arg1[%c0_8, %c175] : memref<110x210xf32, #tpu.memory_space<vmem>>, vector<110x35xf32>
    tpu.vector_store %arg1[%c0_8, %c175], %18 {strides = array<i32>} : memref<110x210xf32, #tpu.memory_space<vmem>>, vector<110x35xf32>,
    return
  }
}

</mosaic_0001>

<llo_original>
// kernel: tpu_custom_call.1
$region0: #{tpu_custom_call.1}
  #allocation0 [shape = 'u32[]', space=smem, size = 0x4, offset = 0x4, fixed_abs, tag = 'smem constant byte address 0x4 - core index']
  #allocation1 [shape = 'u32[144,128]{1,0:T(1,128)}', space=vmem, size = 0x12000, scoped, tag = 'internal scratch']
  %s0 = inlined_call_operand.vmem [shape: f32[110,35,6], index: 0, kind: input, shape index: {}]
  %s1 = inlined_call_operand.vmem [shape: f32[110,210], index: 1, kind: output, shape index: {}]
  %s2 = sld [smem:[#allocation0]]
  $region14: #{tpu_custom_call.1} parent=0
    _
  %s4 = ssub.s32 1, %s2
  %s5 = scalar_select 0, %s4, %s2
  // Predicated region
  $region2: #{tpu_custom_call.1} parent=0 // pred_check
    _
  $region3: #{tpu_custom_call.1} parent=0 // pred_check_branch
    %7 = sbr.rel (0) target = $region5
  $region4: #{tpu_custom_call.1} parent=0 // pred_region
    _
  $region5: #{tpu_custom_call.1} parent=0 // pred_fallthru
    _
  %v8 = vld [vmem:[%s0] sm:$0xff]
  %v9 = vld [vmem:[%s0 + $0x8] sm:$0xff]
  %v10 = vld [vmem:[%s0 + $0x10] sm:$0xff]
  %v11 = vld [vmem:[%s0 + $0x18] sm:$0xff]
  %v12 = vld [vmem:[%s0 + $0x20] sm:$0x7]
  %v13 = vld [vmem:[%s0 + $0x28] sm:$0xff]
  %v14 = vld [vmem:[%s0 + $0x30] sm:$0xff]
  %v15 = vld [vmem:[%s0 + $0x38] sm:$0xff]
  %v16 = vld [vmem:[%s0 + $0x40] sm:$0xff]
  %v17 = vld [vmem:[%s0 + $0x48] sm:$0x7]
  %v18 = vld [vmem:[%s0 + $0x50] sm:$0xff]
  %v19 = vld [vmem:[%s0 + $0x58] sm:$0xff]
  %v20 = vld [vmem:[%s0 + $0x60] sm:$0xff]
  %v21 = vld [vmem:[%s0 + $0x68] sm:$0xff]
  %v22 = vld [vmem:[%s0 + $0x70] sm:$0x7]
  %v23 = vld [vmem:[%s0 + $0x78] sm:$0xff]
  %v24 = vld [vmem:[%s0 + $0x80] sm:$0xff]
  %v25 = vld [vmem:[%s0 + $0x88] sm:$0xff]
  %v26 = vld [vmem:[%s0 + $0x90] sm:$0xff]
  %v27 = vld [vmem:[%s0 + $0x98] sm:$0x7]
  %v28 = vld [vmem:[%s0 + $0xa0] sm:$0xff]
  %v29 = vld [vmem:[%s0 + $0xa8] sm:$0xff]
  %v30 = vld [vmem:[%s0 + $0xb0] sm:$0xff]
  %v31 = vld [vmem:[%s0 + $0xb8] sm:$0xff]
  %v32 = vld [vmem:[%s0 + $0xc0] sm:$0x7]
  %v33 = vld [vmem:[%s0 + $0xc8] sm:$0xff]
  %v34 = vld [vmem:[%s0 + $0xd0] sm:$0xff]
  %v35 = vld [vmem:[%s0 + $0xd8] sm:$0xff]
  %v36 = vld [vmem:[%s0 + $0xe0] sm:$0xff]
  %v37 = vld [vmem:[%s0 + $0xe8] sm:$0x7]
  %v38 = vld [vmem:[%s0 + $0xf0] sm:$0xff]
  %v39 = vld [vmem:[%s0 + $0xf8] sm:$0xff]
  %v40 = vld [vmem:[%s0 + $0x100] sm:$0xff]
  %v41 = vld [vmem:[%s0 + $0x108] sm:$0xff]
  %v42 = vld [vmem:[%s0 + $0x110] sm:$0x7]
  %v43 = vld [vmem:[%s0 + $0x118] sm:$0xff]
  %v44 = vld [vmem:[%s0 + $0x120] sm:$0xff]
  %v45 = vld [vmem:[%s0 + $0x128] sm:$0xff]
  %v46 = vld [vmem:[%s0 + $0x130] sm:$0xff]
  %v47 = vld [vmem:[%s0 + $0x138] sm:$0x7]
  %v48 = vld [vmem:[%s0 + $0x140] sm:$0xff]
  %v49 = vld [vmem:[%s0 + $0x148] sm:$0xff]
  %v50 = vld [vmem:[%s0 + $0x150] sm:$0xff]
  %v51 = vld [vmem:[%s0 + $0x158] sm:$0xff]
  %v52 = vld [vmem:[%s0 + $0x160] sm:$0x7]
  %v53 = vld [vmem:[%s0 + $0x168] sm:$0xff]
  %v54 = vld [vmem:[%s0 + $0x170] sm:$0xff]
  %v55 = vld [vmem:[%s0 + $0x178] sm:$0xff]
  %v56 = vld [vmem:[%s0 + $0x180] sm:$0xff]
  %v57 = vld [vmem:[%s0 + $0x188] sm:$0x7]
  %v58 = vld [vmem:[%s0 + $0x190] sm:$0xff]
  %v59 = vld [vmem:[%s0 + $0x198] sm:$0xff]
  %v60 = vld [vmem:[%s0 + $0x1a0] sm:$0xff]
  %v61 = vld [vmem:[%s0 + $0x1a8] sm:$0xff]
  %v62 = vld [vmem:[%s0 + $0x1b0] sm:$0x7]
  %v63 = vld [vmem:[%s0 + $0x1b8] sm:$0xff]
  %v64 = vld [vmem:[%s0 + $0x1c0] sm:$0xff]
  %v65 = vld [vmem:[%s0 + $0x1c8] sm:$0xff]
  %v66 = vld [vmem:[%s0 + $0x1d0] sm:$0xff]
  %v67 = vld [vmem:[%s0 + $0x1d8] sm:$0x7]
  %v68 = vld [vmem:[%s0 + $0x1e0] sm:$0xff]
  %v69 = vld [vmem:[%s0 + $0x1e8] sm:$0xff]
  %v70 = vld [vmem:[%s0 + $0x1f0] sm:$0xff]
  %v71 = vld [vmem:[%s0 + $0x1f8] sm:$0xff]
  %v72 = vld [vmem:[%s0 + $0x200] sm:$0x7]
  %v73 = vld [vmem:[%s0 + $0x208] sm:$0xff]
  %v74 = vld [vmem:[%s0 + $0x210] sm:$0xff]
  %v75 = vld [vmem:[%s0 + $0x218] sm:$0xff]
  %v76 = vld [vmem:[%s0 + $0x220] sm:$0xff]
  %v77 = vld [vmem:[%s0 + $0x228] sm:$0x7]
  %v78 = vld [vmem:[%s0 + $0x230] sm:$0xff]
  %v79 = vld [vmem:[%s0 + $0x238] sm:$0xff]
  %v80 = vld [vmem:[%s0 + $0x240] sm:$0xff]
  %v81 = vld [vmem:[%s0 + $0x248] sm:$0xff]
  %v82 = vld [vmem:[%s0 + $0x250] sm:$0x7]
  %v83 = vld [vmem:[%s0 + $0x258] sm:$0xff]
  %v84 = vld [vmem:[%s0 + $0x260] sm:$0xff]
  %v85 = vld [vmem:[%s0 + $0x268] sm:$0xff]
  %v86 = vld [vmem:[%s0 + $0x270] sm:$0xff]
  %v87 = vld [vmem:[%s0 + $0x278] sm:$0x7]
  %v88 = vld [vmem:[%s0 + $0x280] sm:$0xff]
  %v89 = vld [vmem:[%s0 + $0x288] sm:$0xff]
  %v90 = vld [vmem:[%s0 + $0x290] sm:$0xff]
  %v91 = vld [vmem:[%s0 + $0x298] sm:$0xff]
  %v92 = vld [vmem:[%s0 + $0x2a0] sm:$0x7]
  %v93 = vld [vmem:[%s0 + $0x2a8] sm:$0xff]
  %v94 = vld [vmem:[%s0 + $0x2b0] sm:$0xff]
  %v95 = vld [vmem:[%s0 + $0x2b8] sm:$0xff]
  %v96 = vld [vmem:[%s0 + $0x2c0] sm:$0xff]
  %v97 = vld [vmem:[%s0 + $0x2c8] sm:$0x7]
  %v98 = vld [vmem:[%s0 + $0x2d0] sm:$0xff]
  %v99 = vld [vmem:[%s0 + $0x2d8] sm:$0xff]
  %v100 = vld [vmem:[%s0 + $0x2e0] sm:$0xff]
  %v101 = vld [vmem:[%s0 + $0x2e8] sm:$0xff]
  %v102 = vld [vmem:[%s0 + $0x2f0] sm:$0x7]
  %v103 = vld [vmem:[%s0 + $0x2f8] sm:$0xff]
  %v104 = vld [vmem:[%s0 + $0x300] sm:$0xff]
  %v105 = vld [vmem:[%s0 + $0x308] sm:$0xff]
  %v106 = vld [vmem:[%s0 + $0x310] sm:$0xff]
  %v107 = vld [vmem:[%s0 + $0x318] sm:$0x7]
  %v108 = vld [vmem:[%s0 + $0x320] sm:$0xff]
  %v109 = vld [vmem:[%s0 + $0x328] sm:$0xff]
  %v110 = vld [vmem:[%s0 + $0x330] sm:$0xff]
  %v111 = vld [vmem:[%s0 + $0x338] sm:$0xff]
  %v112 = vld [vmem:[%s0 + $0x340] sm:$0x7]
  %v113 = vld [vmem:[%s0 + $0x348] sm:$0xff]
  %v114 = vld [vmem:[%s0 + $0x350] sm:$0xff]
  %v115 = vld [vmem:[%s0 + $0x358] sm:$0xff]
  %v116 = vld [vmem:[%s0 + $0x360] sm:$0xff]
  %v117 = vld [vmem:[%s0 + $0x368] sm:$0x7]
  %v118 = vld [vmem:[%s0 + $0x370] sm:$0xff]
  %v119 = vld [vmem:[%s0 + $0x378] sm:$0xff]
  %v120 = vld [vmem:[%s0 + $0x380] sm:$0xff]
  %v121 = vld [vmem:[%s0 + $0x388] sm:$0xff]
  %v122 = vld [vmem:[%s0 + $0x390] sm:$0x7]
  %v123 = vld [vmem:[%s0 + $0x398] sm:$0xff]
  %v124 = vld [vmem:[%s0 + $0x3a0] sm:$0xff]
  %v125 = vld [vmem:[%s0 + $0x3a8] sm:$0xff]
  %v126 = vld [vmem:[%s0 + $0x3b0] sm:$0xff]
  %v127 = vld [vmem:[%s0 + $0x3b8] sm:$0x7]
  %v128 = vld [vmem:[%s0 + $0x3c0] sm:$0xff]
  %v129 = vld [vmem:[%s0 + $0x3c8] sm:$0xff]
  %v130 = vld [vmem:[%s0 + $0x3d0] sm:$0xff]
  %v131 = vld [vmem:[%s0 + $0x3d8] sm:$0xff]
  %v132 = vld [vmem:[%s0 + $0x3e0] sm:$0x7]
  %v133 = vld [vmem:[%s0 + $0x3e8] sm:$0xff]
  %v134 = vld [vmem:[%s0 + $0x3f0] sm:$0xff]
  %v135 = vld [vmem:[%s0 + $0x3f8] sm:$0xff]
  %v136 = vld [vmem:[%s0 + $0x400] sm:$0xff]
  %v137 = vld [vmem:[%s0 + $0x408] sm:$0x7]
  %v138 = vld [vmem:[%s0 + $0x410] sm:$0xff]
  %v139 = vld [vmem:[%s0 + $0x418] sm:$0xff]
  %v140 = vld [vmem:[%s0 + $0x420] sm:$0xff]
  %v141 = vld [vmem:[%s0 + $0x428] sm:$0xff]
  %v142 = vld [vmem:[%s0 + $0x430] sm:$0x7]
  %v143 = vld [vmem:[%s0 + $0x438] sm:$0xff]
  %v144 = vld [vmem:[%s0 + $0x440] sm:$0xff]
  %v145 = vld [vmem:[%s0 + $0x448] sm:$0xff]
  %v146 = vld [vmem:[%s0 + $0x450] sm:$0xff]
  %v147 = vld [vmem:[%s0 + $0x458] sm:$0x7]
  %v148 = vld [vmem:[%s0 + $0x460] sm:$0xff]
  %v149 = vld [vmem:[%s0 + $0x468] sm:$0xff]
  %v150 = vld [vmem:[%s0 + $0x470] sm:$0xff]
  %v151 = vld [vmem:[%s0 + $0x478] sm:$0xff]
  %v152 = vld [vmem:[%s0 + $0x480] sm:$0x7]
  %v153 = vld [vmem:[%s0 + $0x488] sm:$0xff]
  %v154 = vld [vmem:[%s0 + $0x490] sm:$0xff]
  %v155 = vld [vmem:[%s0 + $0x498] sm:$0xff]
  %v156 = vld [vmem:[%s0 + $0x4a0] sm:$0xff]
  %v157 = vld [vmem:[%s0 + $0x4a8] sm:$0x7]
  %v158 = vld [vmem:[%s0 + $0x4b0] sm:$0xff]
  %v159 = vld [vmem:[%s0 + $0x4b8] sm:$0xff]
  %v160 = vld [vmem:[%s0 + $0x4c0] sm:$0xff]
  %v161 = vld [vmem:[%s0 + $0x4c8] sm:$0xff]
  %v162 = vld [vmem:[%s0 + $0x4d0] sm:$0x7]
  %v163 = vld [vmem:[%s0 + $0x4d8] sm:$0xff]
  %v164 = vld [vmem:[%s0 + $0x4e0] sm:$0xff]
  %v165 = vld [vmem:[%s0 + $0x4e8] sm:$0xff]
  %v166 = vld [vmem:[%s0 + $0x4f0] sm:$0xff]
  %v167 = vld [vmem:[%s0 + $0x4f8] sm:$0x7]
  %v168 = vld [vmem:[%s0 + $0x500] sm:$0xff]
  %v169 = vld [vmem:[%s0 + $0x508] sm:$0xff]
  %v170 = vld [vmem:[%s0 + $0x510] sm:$0xff]
  %v171 = vld [vmem:[%s0 + $0x518] sm:$0xff]
  %v172 = vld [vmem:[%s0 + $0x520] sm:$0x7]
  %v173 = vld [vmem:[%s0 + $0x528] sm:$0xff]
  %v174 = vld [vmem:[%s0 + $0x530] sm:$0xff]
  %v175 = vld [vmem:[%s0 + $0x538] sm:$0xff]
  %v176 = vld [vmem:[%s0 + $0x540] sm:$0xff]
  %v177 = vld [vmem:[%s0 + $0x548] sm:$0x7]
  %v178 = vld [vmem:[%s0 + $0x550] sm:$0xff]
  %v179 = vld [vmem:[%s0 + $0x558] sm:$0xff]
  %v180 = vld [vmem:[%s0 + $0x560] sm:$0xff]
  %v181 = vld [vmem:[%s0 + $0x568] sm:$0xff]
  %v182 = vld [vmem:[%s0 + $0x570] sm:$0x7]
  %v183 = vld [vmem:[%s0 + $0x578] sm:$0xff]
  %v184 = vld [vmem:[%s0 + $0x580] sm:$0xff]
  %v185 = vld [vmem:[%s0 + $0x588] sm:$0xff]
  %v186 = vld [vmem:[%s0 + $0x590] sm:$0xff]
  %v187 = vld [vmem:[%s0 + $0x598] sm:$0x7]
  %v188 = vld [vmem:[%s0 + $0x5a0] sm:$0xff]
  %v189 = vld [vmem:[%s0 + $0x5a8] sm:$0xff]
  %v190 = vld [vmem:[%s0 + $0x5b0] sm:$0xff]
  %v191 = vld [vmem:[%s0 + $0x5b8] sm:$0xff]
  %v192 = vld [vmem:[%s0 + $0x5c0] sm:$0x7]
  %v193 = vld [vmem:[%s0 + $0x5c8] sm:$0xff]
  %v194 = vld [vmem:[%s0 + $0x5d0] sm:$0xff]
  %v195 = vld [vmem:[%s0 + $0x5d8] sm:$0xff]
  %v196 = vld [vmem:[%s0 + $0x5e0] sm:$0xff]
  %v197 = vld [vmem:[%s0 + $0x5e8] sm:$0x7]
  %v198 = vld [vmem:[%s0 + $0x5f0] sm:$0xff]
  %v199 = vld [vmem:[%s0 + $0x5f8] sm:$0xff]
  %v200 = vld [vmem:[%s0 + $0x600] sm:$0xff]
  %v201 = vld [vmem:[%s0 + $0x608] sm:$0xff]
  %v202 = vld [vmem:[%s0 + $0x610] sm:$0x7]
  %v203 = vld [vmem:[%s0 + $0x618] sm:$0xff]
  %v204 = vld [vmem:[%s0 + $0x620] sm:$0xff]
  %v205 = vld [vmem:[%s0 + $0x628] sm:$0xff]
  %v206 = vld [vmem:[%s0 + $0x630] sm:$0xff]
  %v207 = vld [vmem:[%s0 + $0x638] sm:$0x7]
  %v208 = vld [vmem:[%s0 + $0x640] sm:$0xff]
  %v209 = vld [vmem:[%s0 + $0x648] sm:$0xff]
  %v210 = vld [vmem:[%s0 + $0x650] sm:$0xff]
  %v211 = vld [vmem:[%s0 + $0x658] sm:$0xff]
  %v212 = vld [vmem:[%s0 + $0x660] sm:$0x7]
  %v213 = vld [vmem:[%s0 + $0x668] sm:$0xff]
  %v214 = vld [vmem:[%s0 + $0x670] sm:$0xff]
  %v215 = vld [vmem:[%s0 + $0x678] sm:$0xff]
  %v216 = vld [vmem:[%s0 + $0x680] sm:$0xff]
  %v217 = vld [vmem:[%s0 + $0x688] sm:$0x7]
  %v218 = vld [vmem:[%s0 + $0x690] sm:$0xff]
  %v219 = vld [vmem:[%s0 + $0x698] sm:$0xff]
  %v220 = vld [vmem:[%s0 + $0x6a0] sm:$0xff]
  %v221 = vld [vmem:[%s0 + $0x6a8] sm:$0xff]
  %v222 = vld [vmem:[%s0 + $0x6b0] sm:$0x7]
  %v223 = vld [vmem:[%s0 + $0x6b8] sm:$0xff]
  %v224 = vld [vmem:[%s0 + $0x6c0] sm:$0xff]
  %v225 = vld [vmem:[%s0 + $0x6c8] sm:$0xff]
  %v226 = vld [vmem:[%s0 + $0x6d0] sm:$0xff]
  %v227 = vld [vmem:[%s0 + $0x6d8] sm:$0x7]
  %v228 = vld [vmem:[%s0 + $0x6e0] sm:$0xff]
  %v229 = vld [vmem:[%s0 + $0x6e8] sm:$0xff]
  %v230 = vld [vmem:[%s0 + $0x6f0] sm:$0xff]
  %v231 = vld [vmem:[%s0 + $0x6f8] sm:$0xff]
  %v232 = vld [vmem:[%s0 + $0x700] sm:$0x7]
  %v233 = vld [vmem:[%s0 + $0x708] sm:$0xff]
  %v234 = vld [vmem:[%s0 + $0x710] sm:$0xff]
  %v235 = vld [vmem:[%s0 + $0x718] sm:$0xff]
  %v236 = vld [vmem:[%s0 + $0x720] sm:$0xff]
  %v237 = vld [vmem:[%s0 + $0x728] sm:$0x7]
  %v238 = vld [vmem:[%s0 + $0x730] sm:$0xff]
  %v239 = vld [vmem:[%s0 + $0x738] sm:$0xff]
  %v240 = vld [vmem:[%s0 + $0x740] sm:$0xff]
  %v241 = vld [vmem:[%s0 + $0x748] sm:$0xff]
  %v242 = vld [vmem:[%s0 + $0x750] sm:$0x7]
  %v243 = vld [vmem:[%s0 + $0x758] sm:$0xff]
  %v244 = vld [vmem:[%s0 + $0x760] sm:$0xff]
  %v245 = vld [vmem:[%s0 + $0x768] sm:$0xff]
  %v246 = vld [vmem:[%s0 + $0x770] sm:$0xff]
  %v247 = vld [vmem:[%s0 + $0x778] sm:$0x7]
  %v248 = vld [vmem:[%s0 + $0x780] sm:$0xff]
  %v249 = vld [vmem:[%s0 + $0x788] sm:$0xff]
  %v250 = vld [vmem:[%s0 + $0x790] sm:$0xff]
  %v251 = vld [vmem:[%s0 + $0x798] sm:$0xff]
  %v252 = vld [vmem:[%s0 + $0x7a0] sm:$0x7]
  %v253 = vld [vmem:[%s0 + $0x7a8] sm:$0xff]
  %v254 = vld [vmem:[%s0 + $0x7b0] sm:$0xff]
  %v255 = vld [vmem:[%s0 + $0x7b8] sm:$0xff]
  %v256 = vld [vmem:[%s0 + $0x7c0] sm:$0xff]
  %v257 = vld [vmem:[%s0 + $0x7c8] sm:$0x7]
  %v258 = vld [vmem:[%s0 + $0x7d0] sm:$0xff]
  %v259 = vld [vmem:[%s0 + $0x7d8] sm:$0xff]
  %v260 = vld [vmem:[%s0 + $0x7e0] sm:$0xff]
  %v261 = vld [vmem:[%s0 + $0x7e8] sm:$0xff]
  %v262 = vld [vmem:[%s0 + $0x7f0] sm:$0x7]
  %v263 = vld [vmem:[%s0 + $0x7f8] sm:$0xff]
  %v264 = vld [vmem:[%s0 + $0x800] sm:$0xff]
  %v265 = vld [vmem:[%s0 + $0x808] sm:$0xff]
  %v266 = vld [vmem:[%s0 + $0x810] sm:$0xff]
  %v267 = vld [vmem:[%s0 + $0x818] sm:$0x7]
  %v268 = vld [vmem:[%s0 + $0x820] sm:$0xff]
  %v269 = vld [vmem:[%s0 + $0x828] sm:$0xff]
  %v270 = vld [vmem:[%s0 + $0x830] sm:$0xff]
  %v271 = vld [vmem:[%s0 + $0x838] sm:$0xff]
  %v272 = vld [vmem:[%s0 + $0x840] sm:$0x7]
  %v273 = vld [vmem:[%s0 + $0x848] sm:$0xff]
  %v274 = vld [vmem:[%s0 + $0x850] sm:$0xff]
  %v275 = vld [vmem:[%s0 + $0x858] sm:$0xff]
  %v276 = vld [vmem:[%s0 + $0x860] sm:$0xff]
  %v277 = vld [vmem:[%s0 + $0x868] sm:$0x7]
  %v278 = vld [vmem:[%s0 + $0x870] sm:$0xff]
  %v279 = vld [vmem:[%s0 + $0x878] sm:$0xff]
  %v280 = vld [vmem:[%s0 + $0x880] sm:$0xff]
  %v281 = vld [vmem:[%s0 + $0x888] sm:$0xff]
  %v282 = vld [vmem:[%s0 + $0x890] sm:$0x7]
  %v283 = vld [vmem:[%s0 + $0x898] sm:$0xff]
  %v284 = vld [vmem:[%s0 + $0x8a0] sm:$0xff]
  %v285 = vld [vmem:[%s0 + $0x8a8] sm:$0xff]
  %v286 = vld [vmem:[%s0 + $0x8b0] sm:$0xff]
  %v287 = vld [vmem:[%s0 + $0x8b8] sm:$0x7]
  %v288 = vld [vmem:[%s0 + $0x8c0] sm:$0xff]
  %v289 = vld [vmem:[%s0 + $0x8c8] sm:$0xff]
  %v290 = vld [vmem:[%s0 + $0x8d0] sm:$0xff]
  %v291 = vld [vmem:[%s0 + $0x8d8] sm:$0xff]
  %v292 = vld [vmem:[%s0 + $0x8e0] sm:$0x7]
  %v293 = vld [vmem:[%s0 + $0x8e8] sm:$0xff]
  %v294 = vld [vmem:[%s0 + $0x8f0] sm:$0xff]
  %v295 = vld [vmem:[%s0 + $0x8f8] sm:$0xff]
  %v296 = vld [vmem:[%s0 + $0x900] sm:$0xff]
  %v297 = vld [vmem:[%s0 + $0x908] sm:$0x7]
  %v298 = vld [vmem:[%s0 + $0x910] sm:$0xff]
  %v299 = vld [vmem:[%s0 + $0x918] sm:$0xff]
  %v300 = vld [vmem:[%s0 + $0x920] sm:$0xff]
  %v301 = vld [vmem:[%s0 + $0x928] sm:$0xff]
  %v302 = vld [vmem:[%s0 + $0x930] sm:$0x7]
  %v303 = vld [vmem:[%s0 + $0x938] sm:$0xff]
  %v304 = vld [vmem:[%s0 + $0x940] sm:$0xff]
  %v305 = vld [vmem:[%s0 + $0x948] sm:$0xff]
  %v306 = vld [vmem:[%s0 + $0x950] sm:$0xff]
  %v307 = vld [vmem:[%s0 + $0x958] sm:$0x7]
  %v308 = vld [vmem:[%s0 + $0x960] sm:$0xff]
  %v309 = vld [vmem:[%s0 + $0x968] sm:$0xff]
  %v310 = vld [vmem:[%s0 + $0x970] sm:$0xff]
  %v311 = vld [vmem:[%s0 + $0x978] sm:$0xff]
  %v312 = vld [vmem:[%s0 + $0x980] sm:$0x7]
  %v313 = vld [vmem:[%s0 + $0x988] sm:$0xff]
  %v314 = vld [vmem:[%s0 + $0x990] sm:$0xff]
  %v315 = vld [vmem:[%s0 + $0x998] sm:$0xff]
  %v316 = vld [vmem:[%s0 + $0x9a0] sm:$0xff]
  %v317 = vld [vmem:[%s0 + $0x9a8] sm:$0x7]
  %v318 = vld [vmem:[%s0 + $0x9b0] sm:$0xff]
  %v319 = vld [vmem:[%s0 + $0x9b8] sm:$0xff]
  %v320 = vld [vmem:[%s0 + $0x9c0] sm:$0xff]
  %v321 = vld [vmem:[%s0 + $0x9c8] sm:$0xff]
  %v322 = vld [vmem:[%s0 + $0x9d0] sm:$0x7]
  %v323 = vld [vmem:[%s0 + $0x9d8] sm:$0xff]
  %v324 = vld [vmem:[%s0 + $0x9e0] sm:$0xff]
  %v325 = vld [vmem:[%s0 + $0x9e8] sm:$0xff]
  %v326 = vld [vmem:[%s0 + $0x9f0] sm:$0xff]
  %v327 = vld [vmem:[%s0 + $0x9f8] sm:$0x7]
  %v328 = vld [vmem:[%s0 + $0xa00] sm:$0xff]
  %v329 = vld [vmem:[%s0 + $0xa08] sm:$0xff]
  %v330 = vld [vmem:[%s0 + $0xa10] sm:$0xff]
  %v331 = vld [vmem:[%s0 + $0xa18] sm:$0xff]
  %v332 = vld [vmem:[%s0 + $0xa20] sm:$0x7]
  %v333 = vld [vmem:[%s0 + $0xa28] sm:$0xff]
  %v334 = vld [vmem:[%s0 + $0xa30] sm:$0xff]
  %v335 = vld [vmem:[%s0 + $0xa38] sm:$0xff]
  %v336 = vld [vmem:[%s0 + $0xa40] sm:$0xff]
  %v337 = vld [vmem:[%s0 + $0xa48] sm:$0x7]
  %v338 = vld [vmem:[%s0 + $0xa50] sm:$0xff]
  %v339 = vld [vmem:[%s0 + $0xa58] sm:$0xff]
  %v340 = vld [vmem:[%s0 + $0xa60] sm:$0xff]
  %v341 = vld [vmem:[%s0 + $0xa68] sm:$0xff]
  %v342 = vld [vmem:[%s0 + $0xa70] sm:$0x7]
  %v343 = vld [vmem:[%s0 + $0xa78] sm:$0xff]
  %v344 = vld [vmem:[%s0 + $0xa80] sm:$0xff]
  %v345 = vld [vmem:[%s0 + $0xa88] sm:$0xff]
  %v346 = vld [vmem:[%s0 + $0xa90] sm:$0xff]
  %v347 = vld [vmem:[%s0 + $0xa98] sm:$0x7]
  %v348 = vld [vmem:[%s0 + $0xaa0] sm:$0xff]
  %v349 = vld [vmem:[%s0 + $0xaa8] sm:$0xff]
  %v350 = vld [vmem:[%s0 + $0xab0] sm:$0xff]
  %v351 = vld [vmem:[%s0 + $0xab8] sm:$0xff]
  %v352 = vld [vmem:[%s0 + $0xac0] sm:$0x7]
  %v353 = vld [vmem:[%s0 + $0xac8] sm:$0xff]
  %v354 = vld [vmem:[%s0 + $0xad0] sm:$0xff]
  %v355 = vld [vmem:[%s0 + $0xad8] sm:$0xff]
  %v356 = vld [vmem:[%s0 + $0xae0] sm:$0xff]
  %v357 = vld [vmem:[%s0 + $0xae8] sm:$0x7]
  %v358 = vld [vmem:[%s0 + $0xaf0] sm:$0xff]
  %v359 = vld [vmem:[%s0 + $0xaf8] sm:$0xff]
  %v360 = vld [vmem:[%s0 + $0xb00] sm:$0xff]
  %v361 = vld [vmem:[%s0 + $0xb08] sm:$0xff]
  %v362 = vld [vmem:[%s0 + $0xb10] sm:$0x7]
  %v363 = vld [vmem:[%s0 + $0xb18] sm:$0xff]
  %v364 = vld [vmem:[%s0 + $0xb20] sm:$0xff]
  %v365 = vld [vmem:[%s0 + $0xb28] sm:$0xff]
  %v366 = vld [vmem:[%s0 + $0xb30] sm:$0xff]
  %v367 = vld [vmem:[%s0 + $0xb38] sm:$0x7]
  %v368 = vld [vmem:[%s0 + $0xb40] sm:$0xff]
  %v369 = vld [vmem:[%s0 + $0xb48] sm:$0xff]
  %v370 = vld [vmem:[%s0 + $0xb50] sm:$0xff]
  %v371 = vld [vmem:[%s0 + $0xb58] sm:$0xff]
  %v372 = vld [vmem:[%s0 + $0xb60] sm:$0x7]
  %v373 = vld [vmem:[%s0 + $0xb68] sm:$0xff]
  %v374 = vld [vmem:[%s0 + $0xb70] sm:$0xff]
  %v375 = vld [vmem:[%s0 + $0xb78] sm:$0xff]
  %v376 = vld [vmem:[%s0 + $0xb80] sm:$0xff]
  %v377 = vld [vmem:[%s0 + $0xb88] sm:$0x7]
  %v378 = vld [vmem:[%s0 + $0xb90] sm:$0xff]
  %v379 = vld [vmem:[%s0 + $0xb98] sm:$0xff]
  %v380 = vld [vmem:[%s0 + $0xba0] sm:$0xff]
  %v381 = vld [vmem:[%s0 + $0xba8] sm:$0xff]
  %v382 = vld [vmem:[%s0 + $0xbb0] sm:$0x7]
  %v383 = vld [vmem:[%s0 + $0xbb8] sm:$0xff]
  %v384 = vld [vmem:[%s0 + $0xbc0] sm:$0xff]
  %v385 = vld [vmem:[%s0 + $0xbc8] sm:$0xff]
  %v386 = vld [vmem:[%s0 + $0xbd0] sm:$0xff]
  %v387 = vld [vmem:[%s0 + $0xbd8] sm:$0x7]
  %v388 = vld [vmem:[%s0 + $0xbe0] sm:$0xff]
  %v389 = vld [vmem:[%s0 + $0xbe8] sm:$0xff]
  %v390 = vld [vmem:[%s0 + $0xbf0] sm:$0xff]
  %v391 = vld [vmem:[%s0 + $0xbf8] sm:$0xff]
  %v392 = vld [vmem:[%s0 + $0xc00] sm:$0x7]
  %v393 = vld [vmem:[%s0 + $0xc08] sm:$0xff]
  %v394 = vld [vmem:[%s0 + $0xc10] sm:$0xff]
  %v395 = vld [vmem:[%s0 + $0xc18] sm:$0xff]
  %v396 = vld [vmem:[%s0 + $0xc20] sm:$0xff]
  %v397 = vld [vmem:[%s0 + $0xc28] sm:$0x7]
  %v398 = vld [vmem:[%s0 + $0xc30] sm:$0xff]
  %v399 = vld [vmem:[%s0 + $0xc38] sm:$0xff]
  %v400 = vld [vmem:[%s0 + $0xc40] sm:$0xff]
  %v401 = vld [vmem:[%s0 + $0xc48] sm:$0xff]
  %v402 = vld [vmem:[%s0 + $0xc50] sm:$0x7]
  %v403 = vld [vmem:[%s0 + $0xc58] sm:$0xff]
  %v404 = vld [vmem:[%s0 + $0xc60] sm:$0xff]
  %v405 = vld [vmem:[%s0 + $0xc68] sm:$0xff]
  %v406 = vld [vmem:[%s0 + $0xc70] sm:$0xff]
  %v407 = vld [vmem:[%s0 + $0xc78] sm:$0x7]
  %v408 = vld [vmem:[%s0 + $0xc80] sm:$0xff]
  %v409 = vld [vmem:[%s0 + $0xc88] sm:$0xff]
  %v410 = vld [vmem:[%s0 + $0xc90] sm:$0xff]
  %v411 = vld [vmem:[%s0 + $0xc98] sm:$0xff]
  %v412 = vld [vmem:[%s0 + $0xca0] sm:$0x7]
  %v413 = vld [vmem:[%s0 + $0xca8] sm:$0xff]
  %v414 = vld [vmem:[%s0 + $0xcb0] sm:$0xff]
  %v415 = vld [vmem:[%s0 + $0xcb8] sm:$0xff]
  %v416 = vld [vmem:[%s0 + $0xcc0] sm:$0xff]
  %v417 = vld [vmem:[%s0 + $0xcc8] sm:$0x7]
  %v418 = vld [vmem:[%s0 + $0xcd0] sm:$0xff]
  %v419 = vld [vmem:[%s0 + $0xcd8] sm:$0xff]
  %v420 = vld [vmem:[%s0 + $0xce0] sm:$0xff]
  %v421 = vld [vmem:[%s0 + $0xce8] sm:$0xff]
  %v422 = vld [vmem:[%s0 + $0xcf0] sm:$0x7]
  %v423 = vld [vmem:[%s0 + $0xcf8] sm:$0xff]
  %v424 = vld [vmem:[%s0 + $0xd00] sm:$0xff]
  %v425 = vld [vmem:[%s0 + $0xd08] sm:$0xff]
  %v426 = vld [vmem:[%s0 + $0xd10] sm:$0xff]
  %v427 = vld [vmem:[%s0 + $0xd18] sm:$0x7]
  %v428 = vld [vmem:[%s0 + $0xd20] sm:$0xff]
  %v429 = vld [vmem:[%s0 + $0xd28] sm:$0xff]
  %v430 = vld [vmem:[%s0 + $0xd30] sm:$0xff]
  %v431 = vld [vmem:[%s0 + $0xd38] sm:$0xff]
  %v432 = vld [vmem:[%s0 + $0xd40] sm:$0x7]
  %v433 = vld [vmem:[%s0 + $0xd48] sm:$0xff]
  %v434 = vld [vmem:[%s0 + $0xd50] sm:$0xff]
  %v435 = vld [vmem:[%s0 + $0xd58] sm:$0xff]
  %v436 = vld [vmem:[%s0 + $0xd60] sm:$0xff]
  %v437 = vld [vmem:[%s0 + $0xd68] sm:$0x7]
  %v438 = vld [vmem:[%s0 + $0xd70] sm:$0xff]
  %v439 = vld [vmem:[%s0 + $0xd78] sm:$0xff]
  %v440 = vld [vmem:[%s0 + $0xd80] sm:$0xff]
  %v441 = vld [vmem:[%s0 + $0xd88] sm:$0xff]
  %v442 = vld [vmem:[%s0 + $0xd90] sm:$0x7]
  %v443 = vld [vmem:[%s0 + $0xd98] sm:$0xff]
  %v444 = vld [vmem:[%s0 + $0xda0] sm:$0xff]
  %v445 = vld [vmem:[%s0 + $0xda8] sm:$0xff]
  %v446 = vld [vmem:[%s0 + $0xdb0] sm:$0xff]
  %v447 = vld [vmem:[%s0 + $0xdb8] sm:$0x7]
  %v448 = vld [vmem:[%s0 + $0xdc0] sm:$0xff]
  %v449 = vld [vmem:[%s0 + $0xdc8] sm:$0xff]
  %v450 = vld [vmem:[%s0 + $0xdd0] sm:$0xff]
  %v451 = vld [vmem:[%s0 + $0xdd8] sm:$0xff]
  %v452 = vld [vmem:[%s0 + $0xde0] sm:$0x7]
  %v453 = vld [vmem:[%s0 + $0xde8] sm:$0xff]
  %v454 = vld [vmem:[%s0 + $0xdf0] sm:$0xff]
  %v455 = vld [vmem:[%s0 + $0xdf8] sm:$0xff]
  %v456 = vld [vmem:[%s0 + $0xe00] sm:$0xff]
  %v457 = vld [vmem:[%s0 + $0xe08] sm:$0x7]
  %v458 = vld [vmem:[%s0 + $0xe10] sm:$0xff]
  %v459 = vld [vmem:[%s0 + $0xe18] sm:$0xff]
  %v460 = vld [vmem:[%s0 + $0xe20] sm:$0xff]
  %v461 = vld [vmem:[%s0 + $0xe28] sm:$0xff]
  %v462 = vld [vmem:[%s0 + $0xe30] sm:$0x7]
  %v463 = vld [vmem:[%s0 + $0xe38] sm:$0xff]
  %v464 = vld [vmem:[%s0 + $0xe40] sm:$0xff]
  %v465 = vld [vmem:[%s0 + $0xe48] sm:$0xff]
  %v466 = vld [vmem:[%s0 + $0xe50] sm:$0xff]
  %v467 = vld [vmem:[%s0 + $0xe58] sm:$0x7]
  %v468 = vld [vmem:[%s0 + $0xe60] sm:$0xff]
  %v469 = vld [vmem:[%s0 + $0xe68] sm:$0xff]
  %v470 = vld [vmem:[%s0 + $0xe70] sm:$0xff]
  %v471 = vld [vmem:[%s0 + $0xe78] sm:$0xff]
  %v472 = vld [vmem:[%s0 + $0xe80] sm:$0x7]
  %v473 = vld [vmem:[%s0 + $0xe88] sm:$0xff]
  %v474 = vld [vmem:[%s0 + $0xe90] sm:$0xff]
  %v475 = vld [vmem:[%s0 + $0xe98] sm:$0xff]
  %v476 = vld [vmem:[%s0 + $0xea0] sm:$0xff]
  %v477 = vld [vmem:[%s0 + $0xea8] sm:$0x7]
  %v478 = vld [vmem:[%s0 + $0xeb0] sm:$0xff]
  %v479 = vld [vmem:[%s0 + $0xeb8] sm:$0xff]
  %v480 = vld [vmem:[%s0 + $0xec0] sm:$0xff]
  %v481 = vld [vmem:[%s0 + $0xec8] sm:$0xff]
  %v482 = vld [vmem:[%s0 + $0xed0] sm:$0x7]
  %v483 = vld [vmem:[%s0 + $0xed8] sm:$0xff]
  %v484 = vld [vmem:[%s0 + $0xee0] sm:$0xff]
  %v485 = vld [vmem:[%s0 + $0xee8] sm:$0xff]
  %v486 = vld [vmem:[%s0 + $0xef0] sm:$0xff]
  %v487 = vld [vmem:[%s0 + $0xef8] sm:$0x7]
  %v488 = vld [vmem:[%s0 + $0xf00] sm:$0xff]
  %v489 = vld [vmem:[%s0 + $0xf08] sm:$0xff]
  %v490 = vld [vmem:[%s0 + $0xf10] sm:$0xff]
  %v491 = vld [vmem:[%s0 + $0xf18] sm:$0xff]
  %v492 = vld [vmem:[%s0 + $0xf20] sm:$0x7]
  %v493 = vld [vmem:[%s0 + $0xf28] sm:$0xff]
  %v494 = vld [vmem:[%s0 + $0xf30] sm:$0xff]
  %v495 = vld [vmem:[%s0 + $0xf38] sm:$0xff]
  %v496 = vld [vmem:[%s0 + $0xf40] sm:$0xff]
  %v497 = vld [vmem:[%s0 + $0xf48] sm:$0x7]
  %v498 = vld [vmem:[%s0 + $0xf50] sm:$0xff]
  %v499 = vld [vmem:[%s0 + $0xf58] sm:$0xff]
  %v500 = vld [vmem:[%s0 + $0xf60] sm:$0xff]
  %v501 = vld [vmem:[%s0 + $0xf68] sm:$0xff]
  %v502 = vld [vmem:[%s0 + $0xf70] sm:$0x7]
  %v503 = vld [vmem:[%s0 + $0xf78] sm:$0xff]
  %v504 = vld [vmem:[%s0 + $0xf80] sm:$0xff]
  %v505 = vld [vmem:[%s0 + $0xf88] sm:$0xff]
  %v506 = vld [vmem:[%s0 + $0xf90] sm:$0xff]
  %v507 = vld [vmem:[%s0 + $0xf98] sm:$0x7]
  %v508 = vld [vmem:[%s0 + $0xfa0] sm:$0xff]
  %v509 = vld [vmem:[%s0 + $0xfa8] sm:$0xff]
  %v510 = vld [vmem:[%s0 + $0xfb0] sm:$0xff]
  %v511 = vld [vmem:[%s0 + $0xfb8] sm:$0xff]
  %v512 = vld [vmem:[%s0 + $0xfc0] sm:$0x7]
  %v513 = vld [vmem:[%s0 + $0xfc8] sm:$0xff]
  %v514 = vld [vmem:[%s0 + $0xfd0] sm:$0xff]
  %v515 = vld [vmem:[%s0 + $0xfd8] sm:$0xff]
  %v516 = vld [vmem:[%s0 + $0xfe0] sm:$0xff]
  %v517 = vld [vmem:[%s0 + $0xfe8] sm:$0x7]
  %v518 = vld [vmem:[%s0 + $0xff0] sm:$0xff]
  %v519 = vld [vmem:[%s0 + $0xff8] sm:$0xff]
  %v520 = vld [vmem:[%s0 + $0x1000] sm:$0xff]
  %v521 = vld [vmem:[%s0 + $0x1008] sm:$0xff]
  %v522 = vld [vmem:[%s0 + $0x1010] sm:$0x7]
  %v523 = vld [vmem:[%s0 + $0x1018] sm:$0xff]
  %v524 = vld [vmem:[%s0 + $0x1020] sm:$0xff]
  %v525 = vld [vmem:[%s0 + $0x1028] sm:$0xff]
  %v526 = vld [vmem:[%s0 + $0x1030] sm:$0xff]
  %v527 = vld [vmem:[%s0 + $0x1038] sm:$0x7]
  %v528 = vld [vmem:[%s0 + $0x1040] sm:$0xff]
  %v529 = vld [vmem:[%s0 + $0x1048] sm:$0xff]
  %v530 = vld [vmem:[%s0 + $0x1050] sm:$0xff]
  %v531 = vld [vmem:[%s0 + $0x1058] sm:$0xff]
  %v532 = vld [vmem:[%s0 + $0x1060] sm:$0x7]
  %v533 = vld [vmem:[%s0 + $0x1068] sm:$0xff]
  %v534 = vld [vmem:[%s0 + $0x1070] sm:$0xff]
  %v535 = vld [vmem:[%s0 + $0x1078] sm:$0xff]
  %v536 = vld [vmem:[%s0 + $0x1080] sm:$0xff]
  %v537 = vld [vmem:[%s0 + $0x1088] sm:$0x7]
  %v538 = vld [vmem:[%s0 + $0x1090] sm:$0xff]
  %v539 = vld [vmem:[%s0 + $0x1098] sm:$0xff]
  %v540 = vld [vmem:[%s0 + $0x10a0] sm:$0xff]
  %v541 = vld [vmem:[%s0 + $0x10a8] sm:$0xff]
  %v542 = vld [vmem:[%s0 + $0x10b0] sm:$0x7]
  %v543 = vld [vmem:[%s0 + $0x10b8] sm:$0xff]
  %v544 = vld [vmem:[%s0 + $0x10c0] sm:$0xff]
  %v545 = vld [vmem:[%s0 + $0x10c8] sm:$0xff]
  %v546 = vld [vmem:[%s0 + $0x10d0] sm:$0xff]
  %v547 = vld [vmem:[%s0 + $0x10d8] sm:$0x7]
  %v548 = vld [vmem:[%s0 + $0x10e0] sm:$0xff]
  %v549 = vld [vmem:[%s0 + $0x10e8] sm:$0xff]
  %v550 = vld [vmem:[%s0 + $0x10f0] sm:$0xff]
  %v551 = vld [vmem:[%s0 + $0x10f8] sm:$0xff]
  %v552 = vld [vmem:[%s0 + $0x1100] sm:$0x7]
  %v553 = vld [vmem:[%s0 + $0x1108] sm:$0xff]
  %v554 = vld [vmem:[%s0 + $0x1110] sm:$0xff]
  %v555 = vld [vmem:[%s0 + $0x1118] sm:$0xff]
  %v556 = vld [vmem:[%s0 + $0x1120] sm:$0xff]
  %v557 = vld [vmem:[%s0 + $0x1128] sm:$0x7]
  %558 = vxpose.xlu0.b32.start [1/16] %v8, 128
  %559 = vxpose.xlu0.b32.cont [2/16] %v9, 128
  %560 = vxpose.xlu0.b32.cont [3/16] %v10, 128
  %561 = vxpose.xlu0.b32.cont [4/16] %v11, 128
  %562 = vxpose.xlu0.b32.cont [5/16] %v12, 128
  %563 = vxpose.xlu0.b32.cont [6/16] 0.0, 128
  %564 = vxpose.xlu0.b32.cont [7/16] 0.0, 128
  %565 = vxpose.xlu0.b32.cont [8/16] 0.0, 128
  %566 = vxpose.xlu0.b32.cont [9/16] 0.0, 128
  %567 = vxpose.xlu0.b32.cont [10/16] 0.0, 128
  %568 = vxpose.xlu0.b32.cont [11/16] 0.0, 128
  %569 = vxpose.xlu0.b32.cont [12/16] 0.0, 128
  %570 = vxpose.xlu0.b32.cont [13/16] 0.0, 128
  %571 = vxpose.xlu0.b32.cont [14/16] 0.0, 128
  %572 = vxpose.xlu0.b32.cont [15/16] 0.0, 128
  %573 = vxpose.xlu0.b32.end [16/16] 0.0, 128
  %v574 = vpop.trf.xlu0
  %v575 = vpop.trf.xlu0
  %v576 = vpop.trf.xlu0
  %v577 = vpop.trf.xlu0
  %v578 = vpop.trf.xlu0
  %v579 = vpop.trf.xlu0
  %v580 = vpop.trf.xlu0
  %v581 = vpop.trf.xlu0
  %v582 = vpop.trf.xlu0
  %v583 = vpop.trf.xlu0
  %v584 = vpop.trf.xlu0
  %v585 = vpop.trf.xlu0
  %v586 = vpop.trf.xlu0
  %v587 = vpop.trf.xlu0
  %v588 = vpop.trf.xlu0
  %v589 = vpop.trf.xlu0
  %590 = vxpose.xlu0.b32.start [1/16] %v13, 128
  %591 = vxpose.xlu0.b32.cont [2/16] %v14, 128
  %592 = vxpose.xlu0.b32.cont [3/16] %v15, 128
  %593 = vxpose.xlu0.b32.cont [4/16] %v16, 128
  %594 = vxpose.xlu0.b32.cont [5/16] %v17, 128
  %595 = vxpose.xlu0.b32.cont [6/16] 0.0, 128
  %596 = vxpose.xlu0.b32.cont [7/16] 0.0, 128
  %597 = vxpose.xlu0.b32.cont [8/16] 0.0, 128
  %598 = vxpose.xlu0.b32.cont [9/16] 0.0, 128
  %599 = vxpose.xlu0.b32.cont [10/16] 0.0, 128
  %600 = vxpose.xlu0.b32.cont [11/16] 0.0, 128
  %601 = vxpose.xlu0.b32.cont [12/16] 0.0, 128
  %602 = vxpose.xlu0.b32.cont [13/16] 0.0, 128
  %603 = vxpose.xlu0.b32.cont [14/16] 0.0, 128
  %604 = vxpose.xlu0.b32.cont [15/16] 0.0, 128
  %605 = vxpose.xlu0.b32.end [16/16] 0.0, 128
  %v606 = vpop.trf.xlu0
  %v607 = vpop.trf.xlu0
  %v608 = vpop.trf.xlu0
  %v609 = vpop.trf.xlu0
  %v610 = vpop.trf.xlu0
  %v611 = vpop.trf.xlu0
  %v612 = vpop.trf.xlu0
  %v613 = vpop.trf.xlu0
  %v614 = vpop.trf.xlu0
  %v615 = vpop.trf.xlu0
  %v616 = vpop.trf.xlu0
  %v617 = vpop.trf.xlu0
  %v618 = vpop.trf.xlu0
  %v619 = vpop.trf.xlu0
  %v620 = vpop.trf.xlu0
  %v621 = vpop.trf.xlu0
  %622 = vxpose.xlu0.b32.start [1/16] %v18, 128
  %623 = vxpose.xlu0.b32.cont [2/16] %v19, 128
  %624 = vxpose.xlu0.b32.cont [3/16] %v20, 128
  %625 = vxpose.xlu0.b32.cont [4/16] %v21, 128
  %626 = vxpose.xlu0.b32.cont [5/16] %v22, 128
  %627 = vxpose.xlu0.b32.cont [6/16] 0.0, 128
  %628 = vxpose.xlu0.b32.cont [7/16] 0.0, 128
  %629 = vxpose.xlu0.b32.cont [8/16] 0.0, 128
  %630 = vxpose.xlu0.b32.cont [9/16] 0.0, 128
  %631 = vxpose.xlu0.b32.cont [10/16] 0.0, 128
  %632 = vxpose.xlu0.b32.cont [11/16] 0.0, 128
  %633 = vxpose.xlu0.b32.cont [12/16] 0.0, 128
  %634 = vxpose.xlu0.b32.cont [13/16] 0.0, 128
  %635 = vxpose.xlu0.b32.cont [14/16] 0.0, 128
  %636 = vxpose.xlu0.b32.cont [15/16] 0.0, 128
  %637 = vxpose.xlu0.b32.end [16/16] 0.0, 128
  %v638 = vpop.trf.xlu0
  %v639 = vpop.trf.xlu0
  %v640 = vpop.trf.xlu0
  %v641 = vpop.trf.xlu0
  %v642 = vpop.trf.xlu0
  %v643 = vpop.trf.xlu0
  %v644 = vpop.trf.xlu0
  %v645 = vpop.trf.xlu0
  %v646 = vpop.trf.xlu0
  %v647 = vpop.trf.xlu0
  %v648 = vpop.trf.xlu0
  %v649 = vpop.trf.xlu0
  %v650 = vpop.trf.xlu0
  %v651 = vpop.trf.xlu0
  %v652 = vpop.trf.xlu0
  %v653 = vpop.trf.xlu0
  %654 = vxpose.xlu0.b32.start [1/16] %v23, 128
  %655 = vxpose.xlu0.b32.cont [2/16] %v24, 128
  %656 = vxpose.xlu0.b32.cont [3/16] %v25, 128
  %657 = vxpose.xlu0.b32.cont [4/16] %v26, 128
  %658 = vxpose.xlu0.b32.cont [5/16] %v27, 128
  %659 = vxpose.xlu0.b32.cont [6/16] 0.0, 128
  %660 = vxpose.xlu0.b32.cont [7/16] 0.0, 128
  %661 = vxpose.xlu0.b32.cont [8/16] 0.0, 128
  %662 = vxpose.xlu0.b32.cont [9/16] 0.0, 128
  %663 = vxpose.xlu0.b32.cont [10/16] 0.0, 128
  %664 = vxpose.xlu0.b32.cont [11/16] 0.0, 128
  %665 = vxpose.xlu0.b32.cont [12/16] 0.0, 128
  %666 = vxpose.xlu0.b32.cont [13/16] 0.0, 128
  %667 = vxpose.xlu0.b32.cont [14/16] 0.0, 128
  %668 = vxpose.xlu0.b32.cont [15/16] 0.0, 128
  %669 = vxpose.xlu0.b32.end [16/16] 0.0, 128
  %v670 = vpop.trf.xlu0
  %v671 = vpop.trf.xlu0
  %v672 = vpop.trf.xlu0
  %v673 = vpop.trf.xlu0
  %v674 = vpop.trf.xlu0
  %v675 = vpop.trf.xlu0
  %v676 = vpop.trf.xlu0
  %v677 = vpop.trf.xlu0
  %v678 = vpop.trf.xlu0
  %v679 = vpop.trf.xlu0
  %v680 = vpop.trf.xlu0
  %v681 = vpop.trf.xlu0
  %v682 = vpop.trf.xlu0
  %v683 = vpop.trf.xlu0
  %v684 = vpop.trf.xlu0
  %v685 = vpop.trf.xlu0
  %686 = vxpose.xlu0.b32.start [1/16] %v28, 128
  %687 = vxpose.xlu0.b32.cont [2/16] %v29, 128
  %688 = vxpose.xlu0.b32.cont [3/16] %v30, 128
  %689 = vxpose.xlu0.b32.cont [4/16] %v31, 128
  %690 = vxpose.xlu0.b32.cont [5/16] %v32, 128
  %691 = vxpose.xlu0.b32.cont [6/16] 0.0, 128
  %692 = vxpose.xlu0.b32.cont [7/16] 0.0, 128
  %693 = vxpose.xlu0.b32.cont [8/16] 0.0, 128
  %694 = vxpose.xlu0.b32.cont [9/16] 0.0, 128
  %695 = vxpose.xlu0.b32.cont [10/16] 0.0, 128
  %696 = vxpose.xlu0.b32.cont [11/16] 0.0, 128
  %697 = vxpose.xlu0.b32.cont [12/16] 0.0, 128
  %698 = vxpose.xlu0.b32.cont [13/16] 0.0, 128
  %699 = vxpose.xlu0.b32.cont [14/16] 0.0, 128
  %700 = vxpose.xlu0.b32.cont [15/16] 0.0, 128
  %701 = vxpose.xlu0.b32.end [16/16] 0.0, 128
  %v702 = vpop.trf.xlu0
  %v703 = vpop.trf.xlu0
  %v704 = vpop.trf.xlu0
  %v705 = vpop.trf.xlu0
  %v706 = vpop.trf.xlu0
  %v707 = vpop.trf.xlu0
  %v708 = vpop.trf.xlu0
  %v709 = vpop.trf.xlu0
  %v710 = vpop.trf.xlu0
  %v711 = vpop.trf.xlu0
  %v712 = vpop.trf.xlu0
  %v713 = vpop.trf.xlu0
  %v714 = vpop.trf.xlu0
  %v715 = vpop.trf.xlu0
  %v716 = vpop.trf.xlu0
  %v717 = vpop.trf.xlu0
  %718 = vxpose.xlu0.b32.start [1/16] %v33, 128
  %719 = vxpose.xlu0.b32.cont [2/16] %v34, 128
  %720 = vxpose.xlu0.b32.cont [3/16] %v35, 128
  %721 = vxpose.xlu0.b32.cont [4/16] %v36, 128
  %722 = vxpose.xlu0.b32.cont [5/16] %v37, 128
  %723 = vxpose.xlu0.b32.cont [6/16] 0.0, 128
  %724 = vxpose.xlu0.b32.cont [7/16] 0.0, 128
  %725 = vxpose.xlu0.b32.cont [8/16] 0.0, 128
  %726 = vxpose.xlu0.b32.cont [9/16] 0.0, 128
  %727 = vxpose.xlu0.b32.cont [10/16] 0.0, 128
  %728 = vxpose.xlu0.b32.cont [11/16] 0.0, 128
  %729 = vxpose.xlu0.b32.cont [12/16] 0.0, 128
  %730 = vxpose.xlu0.b32.cont [13/16] 0.0, 128
  %731 = vxpose.xlu0.b32.cont [14/16] 0.0, 128
  %732 = vxpose.xlu0.b32.cont [15/16] 0.0, 128
  %733 = vxpose.xlu0.b32.end [16/16] 0.0, 128
  %v734 = vpop.trf.xlu0
  %v735 = vpop.trf.xlu0
  %v736 = vpop.trf.xlu0
  %v737 = vpop.trf.xlu0
  %v738 = vpop.trf.xlu0
  %v739 = vpop.trf.xlu0
  %v740 = vpop.trf.xlu0
  %v741 = vpop.trf.xlu0
  %v742 = vpop.trf.xlu0
  %v743 = vpop.trf.xlu0
  %v744 = vpop.trf.xlu0
  %v745 = vpop.trf.xlu0
  %v746 = vpop.trf.xlu0
  %v747 = vpop.trf.xlu0
  %v748 = vpop.trf.xlu0
  %v749 = vpop.trf.xlu0
  %750 = vxpose.xlu0.b32.start [1/16] %v38, 128
  %751 = vxpose.xlu0.b32.cont [2/16] %v39, 128
  %752 = vxpose.xlu0.b32.cont [3/16] %v40, 128
  %753 = vxpose.xlu0.b32.cont [4/16] %v41, 128
  %754 = vxpose.xlu0.b32.cont [5/16] %v42, 128
  %755 = vxpose.xlu0.b32.cont [6/16] 0.0, 128
  %756 = vxpose.xlu0.b32.cont [7/16] 0.0, 128
  %757 = vxpose.xlu0.b32.cont [8/16] 0.0, 128
  %758 = vxpose.xlu0.b32.cont [9/16] 0.0, 128
  %759 = vxpose.xlu0.b32.cont [10/16] 0.0, 128
  %760 = vxpose.xlu0.b32.cont [11/16] 0.0, 128
  %761 = vxpose.xlu0.b32.cont [12/16] 0.0, 128
  %762 = vxpose.xlu0.b32.cont [13/16] 0.0, 128
  %763 = vxpose.xlu0.b32.cont [14/16] 0.0, 128
  %764 = vxpose.xlu0.b32.cont [15/16] 0.0, 128
  %765 = vxpose.xlu0.b32.end [16/16] 0.0, 128
  %v766 = vpop.trf.xlu0
  %v767 = vpop.trf.xlu0
  %v768 = vpop.trf.xlu0
  %v769 = vpop.trf.xlu0
  %v770 = vpop.trf.xlu0
  %v771 = vpop.trf.xlu0
  %v772 = vpop.trf.xlu0
  %v773 = vpop.trf.xlu0
  %v774 = vpop.trf.xlu0
  %v775 = vpop.trf.xlu0
  %v776 = vpop.trf.xlu0
  %v777 = vpop.trf.xlu0
  %v778 = vpop.trf.xlu0
  %v779 = vpop.trf.xlu0
  %v780 = vpop.trf.xlu0
  %v781 = vpop.trf.xlu0
  %782 = vxpose.xlu0.b32.start [1/16] %v43, 128
  %783 = vxpose.xlu0.b32.cont [2/16] %v44, 128
  %784 = vxpose.xlu0.b32.cont [3/16] %v45, 128
  %785 = vxpose.xlu0.b32.cont [4/16] %v46, 128
  %786 = vxpose.xlu0.b32.cont [5/16] %v47, 128
  %787 = vxpose.xlu0.b32.cont [6/16] 0.0, 128
  %788 = vxpose.xlu0.b32.cont [7/16] 0.0, 128
  %789 = vxpose.xlu0.b32.cont [8/16] 0.0, 128
  %790 = vxpose.xlu0.b32.cont [9/16] 0.0, 128
  %791 = vxpose.xlu0.b32.cont [10/16] 0.0, 128
  %792 = vxpose.xlu0.b32.cont [11/16] 0.0, 128
  %793 = vxpose.xlu0.b32.cont [12/16] 0.0, 128
  %794 = vxpose.xlu0.b32.cont [13/16] 0.0, 128
  %795 = vxpose.xlu0.b32.cont [14/16] 0.0, 128
  %796 = vxpose.xlu0.b32.cont [15/16] 0.0, 128
  %797 = vxpose.xlu0.b32.end [16/16] 0.0, 128
  %v798 = vpop.trf.xlu0
  %v799 = vpop.trf.xlu0
  %v800 = vpop.trf.xlu0
  %v801 = vpop.trf.xlu0
  %v802 = vpop.trf.xlu0
  %v803 = vpop.trf.xlu0
  %v804 = vpop.trf.xlu0
  %v805 = vpop.trf.xlu0
  %v806 = vpop.trf.xlu0
  %v807 = vpop.trf.xlu0
  %v808 = vpop.trf.xlu0
  %v809 = vpop.trf.xlu0
  %v810 = vpop.trf.xlu0
  %v811 = vpop.trf.xlu0
  %v812 = vpop.trf.xlu0
  %v813 = vpop.trf.xlu0
  %814 = vxpose.xlu0.b32.start [1/16] %v48, 128
  %815 = vxpose.xlu0.b32.cont [2/16] %v49, 128
  %816 = vxpose.xlu0.b32.cont [3/16] %v50, 128
  %817 = vxpose.xlu0.b32.cont [4/16] %v51, 128
  %818 = vxpose.xlu0.b32.cont [5/16] %v52, 128
  %819 = vxpose.xlu0.b32.cont [6/16] 0.0, 128
  %820 = vxpose.xlu0.b32.cont [7/16] 0.0, 128
  %821 = vxpose.xlu0.b32.cont [8/16] 0.0, 128
  %822 = vxpose.xlu0.b32.cont [9/16] 0.0, 128
  %823 = vxpose.xlu0.b32.cont [10/16] 0.0, 128
  %824 = vxpose.xlu0.b32.cont [11/16] 0.0, 128
  %825 = vxpose.xlu0.b32.cont [12/16] 0.0, 128
  %826 = vxpose.xlu0.b32.cont [13/16] 0.0, 128
  %827 = vxpose.xlu0.b32.cont [14/16] 0.0, 128
  %828 = vxpose.xlu0.b32.cont [15/16] 0.0, 128
  %829 = vxpose.xlu0.b32.end [16/16] 0.0, 128
  %v830 = vpop.trf.xlu0
  %v831 = vpop.trf.xlu0
  %v832 = vpop.trf.xlu0
  %v833 = vpop.trf.xlu0
  %v834 = vpop.trf.xlu0
  %v835 = vpop.trf.xlu0
  %v836 = vpop.trf.xlu0
  %v837 = vpop.trf.xlu0
  %v838 = vpop.trf.xlu0
  %v839 = vpop.trf.xlu0
  %v840 = vpop.trf.xlu0
  %v841 = vpop.trf.xlu0
  %v842 = vpop.trf.xlu0
  %v843 = vpop.trf.xlu0
  %v844 = vpop.trf.xlu0
  %v845 = vpop.trf.xlu0
  %846 = vxpose.xlu0.b32.start [1/16] %v53, 128
  %847 = vxpose.xlu0.b32.cont [2/16] %v54, 128
  %848 = vxpose.xlu0.b32.cont [3/16] %v55, 128
  %849 = vxpose.xlu0.b32.cont [4/16] %v56, 128
  %850 = vxpose.xlu0.b32.cont [5/16] %v57, 128
  %851 = vxpose.xlu0.b32.cont [6/16] 0.0, 128
  %852 = vxpose.xlu0.b32.cont [7/16] 0.0, 128
  %853 = vxpose.xlu0.b32.cont [8/16] 0.0, 128
  %854 = vxpose.xlu0.b32.cont [9/16] 0.0, 128
  %855 = vxpose.xlu0.b32.cont [10/16] 0.0, 128
  %856 = vxpose.xlu0.b32.cont [11/16] 0.0, 128
  %857 = vxpose.xlu0.b32.cont [12/16] 0.0, 128
  %858 = vxpose.xlu0.b32.cont [13/16] 0.0, 128
  %859 = vxpose.xlu0.b32.cont [14/16] 0.0, 128
  %860 = vxpose.xlu0.b32.cont [15/16] 0.0, 128
  %861 = vxpose.xlu0.b32.end [16/16] 0.0, 128
  %v862 = vpop.trf.xlu0
  %v863 = vpop.trf.xlu0
  %v864 = vpop.trf.xlu0
  %v865 = vpop.trf.xlu0
  %v866 = vpop.trf.xlu0
  %v867 = vpop.trf.xlu0
  %v868 = vpop.trf.xlu0
  %v869 = vpop.trf.xlu0
  %v870 = vpop.trf.xlu0
  %v871 = vpop.trf.xlu0
  %v872 = vpop.trf.xlu0
  %v873 = vpop.trf.xlu0
  %v874 = vpop.trf.xlu0
  %v875 = vpop.trf.xlu0
  %v876 = vpop.trf.xlu0
  %v877 = vpop.trf.xlu0
  %878 = vxpose.xlu0.b32.start [1/16] %v58, 128
  %879 = vxpose.xlu0.b32.cont [2/16] %v59, 128
  %880 = vxpose.xlu0.b32.cont [3/16] %v60, 128
  %881 = vxpose.xlu0.b32.cont [4/16] %v61, 128
  %882 = vxpose.xlu0.b32.cont [5/16] %v62, 128
  %883 = vxpose.xlu0.b32.cont [6/16] 0.0, 128
  %884 = vxpose.xlu0.b32.cont [7/16] 0.0, 128
  %885 = vxpose.xlu0.b32.cont [8/16] 0.0, 128
  %886 = vxpose.xlu0.b32.cont [9/16] 0.0, 128
  %887 = vxpose.xlu0.b32.cont [10/16] 0.0, 128
  %888 = vxpose.xlu0.b32.cont [11/16] 0.0, 128
  %889 = vxpose.xlu0.b32.cont [12/16] 0.0, 128
  %890 = vxpose.xlu0.b32.cont [13/16] 0.0, 128
  %891 = vxpose.xlu0.b32.cont [14/16] 0.0, 128
  %892 = vxpose.xlu0.b32.cont [15/16] 0.0, 128
  %893 = vxpose.xlu0.b32.end [16/16] 0.0, 128
  %v894 = vpop.trf.xlu0
  %v895 = vpop.trf.xlu0
  %v896 = vpop.trf.xlu0
  %v897 = vpop.trf.xlu0
  %v898 = vpop.trf.xlu0
  %v899 = vpop.trf.xlu0
  %v900 = vpop.trf.xlu0
  %v901 = vpop.trf.xlu0
  %v902 = vpop.trf.xlu0
  %v903 = vpop.trf.xlu0
  %v904 = vpop.trf.xlu0
  %v905 = vpop.trf.xlu0
  %v906 = vpop.trf.xlu0
  %v907 = vpop.trf.xlu0
  %v908 = vpop.trf.xlu0
  %v909 = vpop.trf.xlu0
  %910 = vxpose.xlu0.b32.start [1/16] %v63, 128
  %911 = vxpose.xlu0.b32.cont [2/16] %v64, 128
  %912 = vxpose.xlu0.b32.cont [3/16] %v65, 128
  %913 = vxpose.xlu0.b32.cont [4/16] %v66, 128
  %914 = vxpose.xlu0.b32.cont [5/16] %v67, 128
  %915 = vxpose.xlu0.b32.cont [6/16] 0.0, 128
  %916 = vxpose.xlu0.b32.cont [7/16] 0.0, 128
  %917 = vxpose.xlu0.b32.cont [8/16] 0.0, 128
  %918 = vxpose.xlu0.b32.cont [9/16] 0.0, 128
  %919 = vxpose.xlu0.b32.cont [10/16] 0.0, 128
  %920 = vxpose.xlu0.b32.cont [11/16] 0.0, 128
  %921 = vxpose.xlu0.b32.cont [12/16] 0.0, 128
  %922 = vxpose.xlu0.b32.cont [13/16] 0.0, 128
  %923 = vxpose.xlu0.b32.cont [14/16] 0.0, 128
  %924 = vxpose.xlu0.b32.cont [15/16] 0.0, 128
  %925 = vxpose.xlu0.b32.end [16/16] 0.0, 128
  %v926 = vpop.trf.xlu0
  %v927 = vpop.trf.xlu0
  %v928 = vpop.trf.xlu0
  %v929 = vpop.trf.xlu0
  %v930 = vpop.trf.xlu0
  %v931 = vpop.trf.xlu0
  %v932 = vpop.trf.xlu0
  %v933 = vpop.trf.xlu0
  %v934 = vpop.trf.xlu0
  %v935 = vpop.trf.xlu0
  %v936 = vpop.trf.xlu0
  %v937 = vpop.trf.xlu0
  %v938 = vpop.trf.xlu0
  %v939 = vpop.trf.xlu0
  %v940 = vpop.trf.xlu0
  %v941 = vpop.trf.xlu0
  %942 = vxpose.xlu0.b32.start [1/16] %v68, 128
  %943 = vxpose.xlu0.b32.cont [2/16] %v69, 128
  %944 = vxpose.xlu0.b32.cont [3/16] %v70, 128
  %945 = vxpose.xlu0.b32.cont [4/16] %v71, 128
  %946 = vxpose.xlu0.b32.cont [5/16] %v72, 128
  %947 = vxpose.xlu0.b32.cont [6/16] 0.0, 128
  %948 = vxpose.xlu0.b32.cont [7/16] 0.0, 128
  %949 = vxpose.xlu0.b32.cont [8/16] 0.0, 128
  %950 = vxpose.xlu0.b32.cont [9/16] 0.0, 128
  %951 = vxpose.xlu0.b32.cont [10/16] 0.0, 128
  %952 = vxpose.xlu0.b32.cont [11/16] 0.0, 128
  %953 = vxpose.xlu0.b32.cont [12/16] 0.0, 128
  %954 = vxpose.xlu0.b32.cont [13/16] 0.0, 128
  %955 = vxpose.xlu0.b32.cont [14/16] 0.0, 128
  %956 = vxpose.xlu0.b32.cont [15/16] 0.0, 128
  %957 = vxpose.xlu0.b32.end [16/16] 0.0, 128
  %v958 = vpop.trf.xlu0
  %v959 = vpop.trf.xlu0
  %v960 = vpop.trf.xlu0
  %v961 = vpop.trf.xlu0
  %v962 = vpop.trf.xlu0
  %v963 = vpop.trf.xlu0
  %v964 = vpop.trf.xlu0
  %v965 = vpop.trf.xlu0
  %v966 = vpop.trf.xlu0
  %v967 = vpop.trf.xlu0
  %v968 = vpop.trf.xlu0
  %v969 = vpop.trf.xlu0
  %v970 = vpop.trf.xlu0
  %v971 = vpop.trf.xlu0
  %v972 = vpop.trf.xlu0
  %v973 = vpop.trf.xlu0
  %974 = vxpose.xlu0.b32.start [1/16] %v73, 128
  %975 = vxpose.xlu0.b32.cont [2/16] %v74, 128
  %976 = vxpose.xlu0.b32.cont [3/16] %v75, 128
  %977 = vxpose.xlu0.b32.cont [4/16] %v76, 128
  %978 = vxpose.xlu0.b32.cont [5/16] %v77, 128
  %979 = vxpose.xlu0.b32.cont [6/16] 0.0, 128
  %980 = vxpose.xlu0.b32.cont [7/16] 0.0, 128
  %981 = vxpose.xlu0.b32.cont [8/16] 0.0, 128
  %982 = vxpose.xlu0.b32.cont [9/16] 0.0, 128
  %983 = vxpose.xlu0.b32.cont [10/16] 0.0, 128
  %984 = vxpose.xlu0.b32.cont [11/16] 0.0, 128
  %985 = vxpose.xlu0.b32.cont [12/16] 0.0, 128
  %986 = vxpose.xlu0.b32.cont [13/16] 0.0, 128
  %987 = vxpose.xlu0.b32.cont [14/16] 0.0, 128
  %988 = vxpose.xlu0.b32.cont [15/16] 0.0, 128
  %989 = vxpose.xlu0.b32.end [16/16] 0.0, 128
  %v990 = vpop.trf.xlu0
  %v991 = vpop.trf.xlu0
  %v992 = vpop.trf.xlu0
  %v993 = vpop.trf.xlu0
  %v994 = vpop.trf.xlu0
  %v995 = vpop.trf.xlu0
  %v996 = vpop.trf.xlu0
  %v997 = vpop.trf.xlu0
  %v998 = vpop.trf.xlu0
  %v999 = vpop.trf.xlu0
  %v1000 = vpop.trf.xlu0
  %v1001 = vpop.trf.xlu0
  %v1002 = vpop.trf.xlu0
  %v1003 = vpop.trf.xlu0
  %v1004 = vpop.trf.xlu0
  %v1005 = vpop.trf.xlu0
  %1006 = vxpose.xlu0.b32.start [1/16] %v78, 128
  %1007 = vxpose.xlu0.b32.cont [2/16] %v79, 128
  %1008 = vxpose.xlu0.b32.cont [3/16] %v80, 128
  %1009 = vxpose.xlu0.b32.cont [4/16] %v81, 128
  %1010 = vxpose.xlu0.b32.cont [5/16] %v82, 128
  %1011 = vxpose.xlu0.b32.cont [6/16] 0.0, 128
  %1012 = vxpose.xlu0.b32.cont [7/16] 0.0, 128
  %1013 = vxpose.xlu0.b32.cont [8/16] 0.0, 128
  %1014 = vxpose.xlu0.b32.cont [9/16] 0.0, 128
  %1015 = vxpose.xlu0.b32.cont [10/16] 0.0, 128
  %1016 = vxpose.xlu0.b32.cont [11/16] 0.0, 128
  %1017 = vxpose.xlu0.b32.cont [12/16] 0.0, 128
  %1018 = vxpose.xlu0.b32.cont [13/16] 0.0, 128
  %1019 = vxpose.xlu0.b32.cont [14/16] 0.0, 128
  %1020 = vxpose.xlu0.b32.cont [15/16] 0.0, 128
  %1021 = vxpose.xlu0.b32.end [16/16] 0.0, 128
  %v1022 = vpop.trf.xlu0
  %v1023 = vpop.trf.xlu0
  %v1024 = vpop.trf.xlu0
  %v1025 = vpop.trf.xlu0
  %v1026 = vpop.trf.xlu0
  %v1027 = vpop.trf.xlu0
  %v1028 = vpop.trf.xlu0
  %v1029 = vpop.trf.xlu0
  %v1030 = vpop.trf.xlu0
  %v1031 = vpop.trf.xlu0
  %v1032 = vpop.trf.xlu0
  %v1033 = vpop.trf.xlu0
  %v1034 = vpop.trf.xlu0
  %v1035 = vpop.trf.xlu0
  %v1036 = vpop.trf.xlu0
  %v1037 = vpop.trf.xlu0
  %1038 = vxpose.xlu0.b32.start [1/16] %v83, 128
  %1039 = vxpose.xlu0.b32.cont [2/16] %v84, 128
  %1040 = vxpose.xlu0.b32.cont [3/16] %v85, 128
  %1041 = vxpose.xlu0.b32.cont [4/16] %v86, 128
  %1042 = vxpose.xlu0.b32.cont [5/16] %v87, 128
  %1043 = vxpose.xlu0.b32.cont [6/16] 0.0, 128
  %1044 = vxpose.xlu0.b32.cont [7/16] 0.0, 128
  %1045 = vxpose.xlu0.b32.cont [8/16] 0.0, 128
  %1046 = vxpose.xlu0.b32.cont [9/16] 0.0, 128
  %1047 = vxpose.xlu0.b32.cont [10/16] 0.0, 128
  %1048 = vxpose.xlu0.b32.cont [11/16] 0.0, 128
  %1049 = vxpose.xlu0.b32.cont [12/16] 0.0, 128
  %1050 = vxpose.xlu0.b32.cont [13/16] 0.0, 128
  %1051 = vxpose.xlu0.b32.cont [14/16] 0.0, 128
  %1052 = vxpose.xlu0.b32.cont [15/16] 0.0, 128
  %1053 = vxpose.xlu0.b32.end [16/16] 0.0, 128
  %v1054 = vpop.trf.xlu0
  %v1055 = vpop.trf.xlu0
  %v1056 = vpop.trf.xlu0
  %v1057 = vpop.trf.xlu0
  %v1058 = vpop.trf.xlu0
  %v1059 = vpop.trf.xlu0
  %v1060 = vpop.trf.xlu0
  %v1061 = vpop.trf.xlu0
  %v1062 = vpop.trf.xlu0
  %v1063 = vpop.trf.xlu0
  %v1064 = vpop.trf.xlu0
  %v1065 = vpop.trf.xlu0
  %v1066 = vpop.trf.xlu0
  %v1067 = vpop.trf.xlu0
  %v1068 = vpop.trf.xlu0
  %v1069 = vpop.trf.xlu0
  %1070 = vxpose.xlu0.b32.start [1/16] %v88, 128
  %1071 = vxpose.xlu0.b32.cont [2/16] %v89, 128
  %1072 = vxpose.xlu0.b32.cont [3/16] %v90, 128
  %1073 = vxpose.xlu0.b32.cont [4/16] %v91, 128
  %1074 = vxpose.xlu0.b32.cont [5/16] %v92, 128
  %1075 = vxpose.xlu0.b32.cont [6/16] 0.0, 128
  %1076 = vxpose.xlu0.b32.cont [7/16] 0.0, 128
  %1077 = vxpose.xlu0.b32.cont [8/16] 0.0, 128
  %1078 = vxpose.xlu0.b32.cont [9/16] 0.0, 128
  %1079 = vxpose.xlu0.b32.cont [10/16] 0.0, 128
  %1080 = vxpose.xlu0.b32.cont [11/16] 0.0, 128
  %1081 = vxpose.xlu0.b32.cont [12/16] 0.0, 128
  %1082 = vxpose.xlu0.b32.cont [13/16] 0.0, 128
  %1083 = vxpose.xlu0.b32.cont [14/16] 0.0, 128
  %1084 = vxpose.xlu0.b32.cont [15/16] 0.0, 128
  %1085 = vxpose.xlu0.b32.end [16/16] 0.0, 128
  %v1086 = vpop.trf.xlu0
  %v1087 = vpop.trf.xlu0
  %v1088 = vpop.trf.xlu0
  %v1089 = vpop.trf.xlu0
  %v1090 = vpop.trf.xlu0
  %v1091 = vpop.trf.xlu0
  %v1092 = vpop.trf.xlu0
  %v1093 = vpop.trf.xlu0
  %v1094 = vpop.trf.xlu0
  %v1095 = vpop.trf.xlu0
  %v1096 = vpop.trf.xlu0
  %v1097 = vpop.trf.xlu0
  %v1098 = vpop.trf.xlu0
  %v1099 = vpop.trf.xlu0
  %v1100 = vpop.trf.xlu0
  %v1101 = vpop.trf.xlu0
  %1102 = vxpose.xlu0.b32.start [1/16] %v93, 128
  %1103 = vxpose.xlu0.b32.cont [2/16] %v94, 128
  %1104 = vxpose.xlu0.b32.cont [3/16] %v95, 128
  %1105 = vxpose.xlu0.b32.cont [4/16] %v96, 128
  %1106 = vxpose.xlu0.b32.cont [5/16] %v97, 128
  %1107 = vxpose.xlu0.b32.cont [6/16] 0.0, 128
  %1108 = vxpose.xlu0.b32.cont [7/16] 0.0, 128
  %1109 = vxpose.xlu0.b32.cont [8/16] 0.0, 128
  %1110 = vxpose.xlu0.b32.cont [9/16] 0.0, 128
  %1111 = vxpose.xlu0.b32.cont [10/16] 0.0, 128
  %1112 = vxpose.xlu0.b32.cont [11/16] 0.0, 128
  %1113 = vxpose.xlu0.b32.cont [12/16] 0.0, 128
  %1114 = vxpose.xlu0.b32.cont [13/16] 0.0, 128
  %1115 = vxpose.xlu0.b32.cont [14/16] 0.0, 128
  %1116 = vxpose.xlu0.b32.cont [15/16] 0.0, 128
  %1117 = vxpose.xlu0.b32.end [16/16] 0.0, 128
  %v1118 = vpop.trf.xlu0
  %v1119 = vpop.trf.xlu0
  %v1120 = vpop.trf.xlu0
  %v1121 = vpop.trf.xlu0
  %v1122 = vpop.trf.xlu0
  %v1123 = vpop.trf.xlu0
  %v1124 = vpop.trf.xlu0
  %v1125 = vpop.trf.xlu0
  %v1126 = vpop.trf.xlu0
  %v1127 = vpop.trf.xlu0
  %v1128 = vpop.trf.xlu0
  %v1129 = vpop.trf.xlu0
  %v1130 = vpop.trf.xlu0
  %v1131 = vpop.trf.xlu0
  %v1132 = vpop.trf.xlu0
  %v1133 = vpop.trf.xlu0
  %1134 = vxpose.xlu0.b32.start [1/16] %v98, 128
  %1135 = vxpose.xlu0.b32.cont [2/16] %v99, 128
  %1136 = vxpose.xlu0.b32.cont [3/16] %v100, 128
  %1137 = vxpose.xlu0.b32.cont [4/16] %v101, 128
  %1138 = vxpose.xlu0.b32.cont [5/16] %v102, 128
  %1139 = vxpose.xlu0.b32.cont [6/16] 0.0, 128
  %1140 = vxpose.xlu0.b32.cont [7/16] 0.0, 128
  %1141 = vxpose.xlu0.b32.cont [8/16] 0.0, 128
  %1142 = vxpose.xlu0.b32.cont [9/16] 0.0, 128
  %1143 = vxpose.xlu0.b32.cont [10/16] 0.0, 128
  %1144 = vxpose.xlu0.b32.cont [11/16] 0.0, 128
  %1145 = vxpose.xlu0.b32.cont [12/16] 0.0, 128
  %1146 = vxpose.xlu0.b32.cont [13/16] 0.0, 128
  %1147 = vxpose.xlu0.b32.cont [14/16] 0.0, 128
  %1148 = vxpose.xlu0.b32.cont [15/16] 0.0, 128
  %1149 = vxpose.xlu0.b32.end [16/16] 0.0, 128
  %v1150 = vpop.trf.xlu0
  %v1151 = vpop.trf.xlu0
  %v1152 = vpop.trf.xlu0
  %v1153 = vpop.trf.xlu0
  %v1154 = vpop.trf.xlu0
  %v1155 = vpop.trf.xlu0
  %v1156 = vpop.trf.xlu0
  %v1157 = vpop.trf.xlu0
  %v1158 = vpop.trf.xlu0
  %v1159 = vpop.trf.xlu0
  %v1160 = vpop.trf.xlu0
  %v1161 = vpop.trf.xlu0
  %v1162 = vpop.trf.xlu0
  %v1163 = vpop.trf.xlu0
  %v1164 = vpop.trf.xlu0
  %v1165 = vpop.trf.xlu0
  %1166 = vxpose.xlu0.b32.start [1/16] %v103, 128
  %1167 = vxpose.xlu0.b32.cont [2/16] %v104, 128
  %1168 = vxpose.xlu0.b32.cont [3/16] %v105, 128
  %1169 = vxpose.xlu0.b32.cont [4/16] %v106, 128
  %1170 = vxpose.xlu0.b32.cont [5/16] %v107, 128
  %1171 = vxpose.xlu0.b32.cont [6/16] 0.0, 128
  %1172 = vxpose.xlu0.b32.cont [7/16] 0.0, 128
  %1173 = vxpose.xlu0.b32.cont [8/16] 0.0, 128
  %1174 = vxpose.xlu0.b32.cont [9/16] 0.0, 128
  %1175 = vxpose.xlu0.b32.cont [10/16] 0.0, 128
  %1176 = vxpose.xlu0.b32.cont [11/16] 0.0, 128
  %1177 = vxpose.xlu0.b32.cont [12/16] 0.0, 128
  %1178 = vxpose.xlu0.b32.cont [13/16] 0.0, 128
  %1179 = vxpose.xlu0.b32.cont [14/16] 0.0, 128
  %1180 = vxpose.xlu0.b32.cont [15/16] 0.0, 128
  %1181 = vxpose.xlu0.b32.end [16/16] 0.0, 128
  %v1182 = vpop.trf.xlu0
  %v1183 = vpop.trf.xlu0
  %v1184 = vpop.trf.xlu0
  %v1185 = vpop.trf.xlu0
  %v1186 = vpop.trf.xlu0
  %v1187 = vpop.trf.xlu0
  %v1188 = vpop.trf.xlu0
  %v1189 = vpop.trf.xlu0
  %v1190 = vpop.trf.xlu0
  %v1191 = vpop.trf.xlu0
  %v1192 = vpop.trf.xlu0
  %v1193 = vpop.trf.xlu0
  %v1194 = vpop.trf.xlu0
  %v1195 = vpop.trf.xlu0
  %v1196 = vpop.trf.xlu0
  %v1197 = vpop.trf.xlu0
  %1198 = vxpose.xlu0.b32.start [1/16] %v108, 128
  %1199 = vxpose.xlu0.b32.cont [2/16] %v109, 128
  %1200 = vxpose.xlu0.b32.cont [3/16] %v110, 128
  %1201 = vxpose.xlu0.b32.cont [4/16] %v111, 128
  %1202 = vxpose.xlu0.b32.cont [5/16] %v112, 128
  %1203 = vxpose.xlu0.b32.cont [6/16] 0.0, 128
  %1204 = vxpose.xlu0.b32.cont [7/16] 0.0, 128
  %1205 = vxpose.xlu0.b32.cont [8/16] 0.0, 128
  %1206 = vxpose.xlu0.b32.cont [9/16] 0.0, 128
  %1207 = vxpose.xlu0.b32.cont [10/16] 0.0, 128
  %1208 = vxpose.xlu0.b32.cont [11/16] 0.0, 128
  %1209 = vxpose.xlu0.b32.cont [12/16] 0.0, 128
  %1210 = vxpose.xlu0.b32.cont [13/16] 0.0, 128
  %1211 = vxpose.xlu0.b32.cont [14/16] 0.0, 128
  %1212 = vxpose.xlu0.b32.cont [15/16] 0.0, 128
  %1213 = vxpose.xlu0.b32.end [16/16] 0.0, 128
  %v1214 = vpop.trf.xlu0
  %v1215 = vpop.trf.xlu0
  %v1216 = vpop.trf.xlu0
  %v1217 = vpop.trf.xlu0
  %v1218 = vpop.trf.xlu0
  %v1219 = vpop.trf.xlu0
  %v1220 = vpop.trf.xlu0
  %v1221 = vpop.trf.xlu0
  %v1222 = vpop.trf.xlu0
  %v1223 = vpop.trf.xlu0
  %v1224 = vpop.trf.xlu0
  %v1225 = vpop.trf.xlu0
  %v1226 = vpop.trf.xlu0
  %v1227 = vpop.trf.xlu0
  %v1228 = vpop.trf.xlu0
  %v1229 = vpop.trf.xlu0
  %1230 = vxpose.xlu0.b32.start [1/16] %v113, 128
  %1231 = vxpose.xlu0.b32.cont [2/16] %v114, 128
  %1232 = vxpose.xlu0.b32.cont [3/16] %v115, 128
  %1233 = vxpose.xlu0.b32.cont [4/16] %v116, 128
  %1234 = vxpose.xlu0.b32.cont [5/16] %v117, 128
  %1235 = vxpose.xlu0.b32.cont [6/16] 0.0, 128
  %1236 = vxpose.xlu0.b32.cont [7/16] 0.0, 128
  %1237 = vxpose.xlu0.b32.cont [8/16] 0.0, 128
  %1238 = vxpose.xlu0.b32.cont [9/16] 0.0, 128
  %1239 = vxpose.xlu0.b32.cont [10/16] 0.0, 128
  %1240 = vxpose.xlu0.b32.cont [11/16] 0.0, 128
  %1241 = vxpose.xlu0.b32.cont [12/16] 0.0, 128
  %1242 = vxpose.xlu0.b32.cont [13/16] 0.0, 128
  %1243 = vxpose.xlu0.b32.cont [14/16] 0.0, 128
  %1244 = vxpose.xlu0.b32.cont [15/16] 0.0, 128
  %1245 = vxpose.xlu0.b32.end [16/16] 0.0, 128
  %v1246 = vpop.trf.xlu0
  %v1247 = vpop.trf.xlu0
  %v1248 = vpop.trf.xlu0
  %v1249 = vpop.trf.xlu0
  %v1250 = vpop.trf.xlu0
  %v1251 = vpop.trf.xlu0
  %v1252 = vpop.trf.xlu0
  %v1253 = vpop.trf.xlu0
  %v1254 = vpop.trf.xlu0
  %v1255 = vpop.trf.xlu0
  %v1256 = vpop.trf.xlu0
  %v1257 = vpop.trf.xlu0
  %v1258 = vpop.trf.xlu0
  %v1259 = vpop.trf.xlu0
  %v1260 = vpop.trf.xlu0
  %v1261 = vpop.trf.xlu0
  %1262 = vxpose.xlu0.b32.start [1/16] %v118, 128
  %1263 = vxpose.xlu0.b32.cont [2/16] %v119, 128
  %1264 = vxpose.xlu0.b32.cont [3/16] %v120, 128
  %1265 = vxpose.xlu0.b32.cont [4/16] %v121, 128
  %1266 = vxpose.xlu0.b32.cont [5/16] %v122, 128
  %1267 = vxpose.xlu0.b32.cont [6/16] 0.0, 128
  %1268 = vxpose.xlu0.b32.cont [7/16] 0.0, 128
  %1269 = vxpose.xlu0.b32.cont [8/16] 0.0, 128
  %1270 = vxpose.xlu0.b32.cont [9/16] 0.0, 128
  %1271 = vxpose.xlu0.b32.cont [10/16] 0.0, 128
  %1272 = vxpose.xlu0.b32.cont [11/16] 0.0, 128
  %1273 = vxpose.xlu0.b32.cont [12/16] 0.0, 128
  %1274 = vxpose.xlu0.b32.cont [13/16] 0.0, 128
  %1275 = vxpose.xlu0.b32.cont [14/16] 0.0, 128
  %1276 = vxpose.xlu0.b32.cont [15/16] 0.0, 128
  %1277 = vxpose.xlu0.b32.end [16/16] 0.0, 128
  %v1278 = vpop.trf.xlu0
  %v1279 = vpop.trf.xlu0
  %v1280 = vpop.trf.xlu0
  %v1281 = vpop.trf.xlu0
  %v1282 = vpop.trf.xlu0
  %v1283 = vpop.trf.xlu0
  %v1284 = vpop.trf.xlu0
  %v1285 = vpop.trf.xlu0
  %v1286 = vpop.trf.xlu0
  %v1287 = vpop.trf.xlu0
  %v1288 = vpop.trf.xlu0
  %v1289 = vpop.trf.xlu0
  %v1290 = vpop.trf.xlu0
  %v1291 = vpop.trf.xlu0
  %v1292 = vpop.trf.xlu0
  %v1293 = vpop.trf.xlu0
  %1294 = vxpose.xlu0.b32.start [1/16] %v123, 128
  %1295 = vxpose.xlu0.b32.cont [2/16] %v124, 128
  %1296 = vxpose.xlu0.b32.cont [3/16] %v125, 128
  %1297 = vxpose.xlu0.b32.cont [4/16] %v126, 128
  %1298 = vxpose.xlu0.b32.cont [5/16] %v127, 128
  %1299 = vxpose.xlu0.b32.cont [6/16] 0.0, 128
  %1300 = vxpose.xlu0.b32.cont [7/16] 0.0, 128
  %1301 = vxpose.xlu0.b32.cont [8/16] 0.0, 128
  %1302 = vxpose.xlu0.b32.cont [9/16] 0.0, 128
  %1303 = vxpose.xlu0.b32.cont [10/16] 0.0, 128
  %1304 = vxpose.xlu0.b32.cont [11/16] 0.0, 128
  %1305 = vxpose.xlu0.b32.cont [12/16] 0.0, 128
  %1306 = vxpose.xlu0.b32.cont [13/16] 0.0, 128
  %1307 = vxpose.xlu0.b32.cont [14/16] 0.0, 128
  %1308 = vxpose.xlu0.b32.cont [15/16] 0.0, 128
  %1309 = vxpose.xlu0.b32.end [16/16] 0.0, 128
  %v1310 = vpop.trf.xlu0
  %v1311 = vpop.trf.xlu0
  %v1312 = vpop.trf.xlu0
  %v1313 = vpop.trf.xlu0
  %v1314 = vpop.trf.xlu0
  %v1315 = vpop.trf.xlu0
  %v1316 = vpop.trf.xlu0
  %v1317 = vpop.trf.xlu0
  %v1318 = vpop.trf.xlu0
  %v1319 = vpop.trf.xlu0
  %v1320 = vpop.trf.xlu0
  %v1321 = vpop.trf.xlu0
  %v1322 = vpop.trf.xlu0
  %v1323 = vpop.trf.xlu0
  %v1324 = vpop.trf.xlu0
  %v1325 = vpop.trf.xlu0
  %1326 = vxpose.xlu0.b32.start [1/16] %v128, 128
  %1327 = vxpose.xlu0.b32.cont [2/16] %v129, 128
  %1328 = vxpose.xlu0.b32.cont [3/16] %v130, 128
  %1329 = vxpose.xlu0.b32.cont [4/16] %v131, 128
  %1330 = vxpose.xlu0.b32.cont [5/16] %v132, 128
  %1331 = vxpose.xlu0.b32.cont [6/16] 0.0, 128
  %1332 = vxpose.xlu0.b32.cont [7/16] 0.0, 128
  %1333 = vxpose.xlu0.b32.cont [8/16] 0.0, 128
  %1334 = vxpose.xlu0.b32.cont [9/16] 0.0, 128
  %1335 = vxpose.xlu0.b32.cont [10/16] 0.0, 128
  %1336 = vxpose.xlu0.b32.cont [11/16] 0.0, 128
  %1337 = vxpose.xlu0.b32.cont [12/16] 0.0, 128
  %1338 = vxpose.xlu0.b32.cont [13/16] 0.0, 128
  %1339 = vxpose.xlu0.b32.cont [14/16] 0.0, 128
  %1340 = vxpose.xlu0.b32.cont [15/16] 0.0, 128
  %1341 = vxpose.xlu0.b32.end [16/16] 0.0, 128
  %v1342 = vpop.trf.xlu0
  %v1343 = vpop.trf.xlu0
  %v1344 = vpop.trf.xlu0
  %v1345 = vpop.trf.xlu0
  %v1346 = vpop.trf.xlu0
  %v1347 = vpop.trf.xlu0
  %v1348 = vpop.trf.xlu0
  %v1349 = vpop.trf.xlu0
  %v1350 = vpop.trf.xlu0
  %v1351 = vpop.trf.xlu0
  %v1352 = vpop.trf.xlu0
  %v1353 = vpop.trf.xlu0
  %v1354 = vpop.trf.xlu0
  %v1355 = vpop.trf.xlu0
  %v1356 = vpop.trf.xlu0
  %v1357 = vpop.trf.xlu0
  %1358 = vxpose.xlu0.b32.start [1/16] %v133, 128
  %1359 = vxpose.xlu0.b32.cont [2/16] %v134, 128
  %1360 = vxpose.xlu0.b32.cont [3/16] %v135, 128
  %1361 = vxpose.xlu0.b32.cont [4/16] %v136, 128
  %1362 = vxpose.xlu0.b32.cont [5/16] %v137, 128
  %1363 = vxpose.xlu0.b32.cont [6/16] 0.0, 128
  %1364 = vxpose.xlu0.b32.cont [7/16] 0.0, 128
  %1365 = vxpose.xlu0.b32.cont [8/16] 0.0, 128
  %1366 = vxpose.xlu0.b32.cont [9/16] 0.0, 128
  %1367 = vxpose.xlu0.b32.cont [10/16] 0.0, 128
  %1368 = vxpose.xlu0.b32.cont [11/16] 0.0, 128
  %1369 = vxpose.xlu0.b32.cont [12/16] 0.0, 128
  %1370 = vxpose.xlu0.b32.cont [13/16] 0.0, 128
  %1371 = vxpose.xlu0.b32.cont [14/16] 0.0, 128
  %1372 = vxpose.xlu0.b32.cont [15/16] 0.0, 128
  %1373 = vxpose.xlu0.b32.end [16/16] 0.0, 128
  %v1374 = vpop.trf.xlu0
  %v1375 = vpop.trf.xlu0
  %v1376 = vpop.trf.xlu0
  %v1377 = vpop.trf.xlu0
  %v1378 = vpop.trf.xlu0
  %v1379 = vpop.trf.xlu0
  %v1380 = vpop.trf.xlu0
  %v1381 = vpop.trf.xlu0
  %v1382 = vpop.trf.xlu0
  %v1383 = vpop.trf.xlu0
  %v1384 = vpop.trf.xlu0
  %v1385 = vpop.trf.xlu0
  %v1386 = vpop.trf.xlu0
  %v1387 = vpop.trf.xlu0
  %v1388 = vpop.trf.xlu0
  %v1389 = vpop.trf.xlu0
  %1390 = vxpose.xlu0.b32.start [1/16] %v138, 128
  %1391 = vxpose.xlu0.b32.cont [2/16] %v139, 128
  %1392 = vxpose.xlu0.b32.cont [3/16] %v140, 128
  %1393 = vxpose.xlu0.b32.cont [4/16] %v141, 128
  %1394 = vxpose.xlu0.b32.cont [5/16] %v142, 128
  %1395 = vxpose.xlu0.b32.cont [6/16] 0.0, 128
  %1396 = vxpose.xlu0.b32.cont [7/16] 0.0, 128
  %1397 = vxpose.xlu0.b32.cont [8/16] 0.0, 128
  %1398 = vxpose.xlu0.b32.cont [9/16] 0.0, 128
  %1399 = vxpose.xlu0.b32.cont [10/16] 0.0, 128
  %1400 = vxpose.xlu0.b32.cont [11/16] 0.0, 128
  %1401 = vxpose.xlu0.b32.cont [12/16] 0.0, 128
  %1402 = vxpose.xlu0.b32.cont [13/16] 0.0, 128
  %1403 = vxpose.xlu0.b32.cont [14/16] 0.0, 128
  %1404 = vxpose.xlu0.b32.cont [15/16] 0.0, 128
  %1405 = vxpose.xlu0.b32.end [16/16] 0.0, 128
  %v1406 = vpop.trf.xlu0
  %v1407 = vpop.trf.xlu0
  %v1408 = vpop.trf.xlu0
  %v1409 = vpop.trf.xlu0
  %v1410 = vpop.trf.xlu0
  %v1411 = vpop.trf.xlu0
  %v1412 = vpop.trf.xlu0
  %v1413 = vpop.trf.xlu0
  %v1414 = vpop.trf.xlu0
  %v1415 = vpop.trf.xlu0
  %v1416 = vpop.trf.xlu0
  %v1417 = vpop.trf.xlu0
  %v1418 = vpop.trf.xlu0
  %v1419 = vpop.trf.xlu0
  %v1420 = vpop.trf.xlu0
  %v1421 = vpop.trf.xlu0
  %1422 = vxpose.xlu0.b32.start [1/16] %v143, 128
  %1423 = vxpose.xlu0.b32.cont [2/16] %v144, 128
  %1424 = vxpose.xlu0.b32.cont [3/16] %v145, 128
  %1425 = vxpose.xlu0.b32.cont [4/16] %v146, 128
  %1426 = vxpose.xlu0.b32.cont [5/16] %v147, 128
  %1427 = vxpose.xlu0.b32.cont [6/16] 0.0, 128
  %1428 = vxpose.xlu0.b32.cont [7/16] 0.0, 128
  %1429 = vxpose.xlu0.b32.cont [8/16] 0.0, 128
  %1430 = vxpose.xlu0.b32.cont [9/16] 0.0, 128
  %1431 = vxpose.xlu0.b32.cont [10/16] 0.0, 128
  %1432 = vxpose.xlu0.b32.cont [11/16] 0.0, 128
  %1433 = vxpose.xlu0.b32.cont [12/16] 0.0, 128
  %1434 = vxpose.xlu0.b32.cont [13/16] 0.0, 128
  %1435 = vxpose.xlu0.b32.cont [14/16] 0.0, 128
  %1436 = vxpose.xlu0.b32.cont [15/16] 0.0, 128
  %1437 = vxpose.xlu0.b32.end [16/16] 0.0, 128
  %v1438 = vpop.trf.xlu0
  %v1439 = vpop.trf.xlu0
  %v1440 = vpop.trf.xlu0
  %v1441 = vpop.trf.xlu0
  %v1442 = vpop.trf.xlu0
  %v1443 = vpop.trf.xlu0
  %v1444 = vpop.trf.xlu0
  %v1445 = vpop.trf.xlu0
  %v1446 = vpop.trf.xlu0
  %v1447 = vpop.trf.xlu0
  %v1448 = vpop.trf.xlu0
  %v1449 = vpop.trf.xlu0
  %v1450 = vpop.trf.xlu0
  %v1451 = vpop.trf.xlu0
  %v1452 = vpop.trf.xlu0
  %v1453 = vpop.trf.xlu0
  %1454 = vxpose.xlu0.b32.start [1/16] %v148, 128
  %1455 = vxpose.xlu0.b32.cont [2/16] %v149, 128
  %1456 = vxpose.xlu0.b32.cont [3/16] %v150, 128
  %1457 = vxpose.xlu0.b32.cont [4/16] %v151, 128
  %1458 = vxpose.xlu0.b32.cont [5/16] %v152, 128
  %1459 = vxpose.xlu0.b32.cont [6/16] 0.0, 128
  %1460 = vxpose.xlu0.b32.cont [7/16] 0.0, 128
  %1461 = vxpose.xlu0.b32.cont [8/16] 0.0, 128
  %1462 = vxpose.xlu0.b32.cont [9/16] 0.0, 128
  %1463 = vxpose.xlu0.b32.cont [10/16] 0.0, 128
  %1464 = vxpose.xlu0.b32.cont [11/16] 0.0, 128
  %1465 = vxpose.xlu0.b32.cont [12/16] 0.0, 128
  %1466 = vxpose.xlu0.b32.cont [13/16] 0.0, 128
  %1467 = vxpose.xlu0.b32.cont [14/16] 0.0, 128
  %1468 = vxpose.xlu0.b32.cont [15/16] 0.0, 128
  %1469 = vxpose.xlu0.b32.end [16/16] 0.0, 128
  %v1470 = vpop.trf.xlu0
  %v1471 = vpop.trf.xlu0
  %v1472 = vpop.trf.xlu0
  %v1473 = vpop.trf.xlu0
  %v1474 = vpop.trf.xlu0
  %v1475 = vpop.trf.xlu0
  %v1476 = vpop.trf.xlu0
  %v1477 = vpop.trf.xlu0
  %v1478 = vpop.trf.xlu0
  %v1479 = vpop.trf.xlu0
  %v1480 = vpop.trf.xlu0
  %v1481 = vpop.trf.xlu0
  %v1482 = vpop.trf.xlu0
  %v1483 = vpop.trf.xlu0
  %v1484 = vpop.trf.xlu0
  %v1485 = vpop.trf.xlu0
  %1486 = vxpose.xlu0.b32.start [1/16] %v153, 128
  %1487 = vxpose.xlu0.b32.cont [2/16] %v154, 128
  %1488 = vxpose.xlu0.b32.cont [3/16] %v155, 128
  %1489 = vxpose.xlu0.b32.cont [4/16] %v156, 128
  %1490 = vxpose.xlu0.b32.cont [5/16] %v157, 128
  %1491 = vxpose.xlu0.b32.cont [6/16] 0.0, 128
  %1492 = vxpose.xlu0.b32.cont [7/16] 0.0, 128
  %1493 = vxpose.xlu0.b32.cont [8/16] 0.0, 128
  %1494 = vxpose.xlu0.b32.cont [9/16] 0.0, 128
  %1495 = vxpose.xlu0.b32.cont [10/16] 0.0, 128
  %1496 = vxpose.xlu0.b32.cont [11/16] 0.0, 128
  %1497 = vxpose.xlu0.b32.cont [12/16] 0.0, 128
  %1498 = vxpose.xlu0.b32.cont [13/16] 0.0, 128
  %1499 = vxpose.xlu0.b32.cont [14/16] 0.0, 128
  %1500 = vxpose.xlu0.b32.cont [15/16] 0.0, 128
  %1501 = vxpose.xlu0.b32.end [16/16] 0.0, 128
  %v1502 = vpop.trf.xlu0
  %v1503 = vpop.trf.xlu0
  %v1504 = vpop.trf.xlu0
  %v1505 = vpop.trf.xlu0
  %v1506 = vpop.trf.xlu0
  %v1507 = vpop.trf.xlu0
  %v1508 = vpop.trf.xlu0
  %v1509 = vpop.trf.xlu0
  %v1510 = vpop.trf.xlu0
  %v1511 = vpop.trf.xlu0
  %v1512 = vpop.trf.xlu0
  %v1513 = vpop.trf.xlu0
  %v1514 = vpop.trf.xlu0
  %v1515 = vpop.trf.xlu0
  %v1516 = vpop.trf.xlu0
  %v1517 = vpop.trf.xlu0
  %1518 = vxpose.xlu0.b32.start [1/16] %v158, 128
  %1519 = vxpose.xlu0.b32.cont [2/16] %v159, 128
  %1520 = vxpose.xlu0.b32.cont [3/16] %v160, 128
  %1521 = vxpose.xlu0.b32.cont [4/16] %v161, 128
  %1522 = vxpose.xlu0.b32.cont [5/16] %v162, 128
  %1523 = vxpose.xlu0.b32.cont [6/16] 0.0, 128
  %1524 = vxpose.xlu0.b32.cont [7/16] 0.0, 128
  %1525 = vxpose.xlu0.b32.cont [8/16] 0.0, 128
  %1526 = vxpose.xlu0.b32.cont [9/16] 0.0, 128
  %1527 = vxpose.xlu0.b32.cont [10/16] 0.0, 128
  %1528 = vxpose.xlu0.b32.cont [11/16] 0.0, 128
  %1529 = vxpose.xlu0.b32.cont [12/16] 0.0, 128
  %1530 = vxpose.xlu0.b32.cont [13/16] 0.0, 128
  %1531 = vxpose.xlu0.b32.cont [14/16] 0.0, 128
  %1532 = vxpose.xlu0.b32.cont [15/16] 0.0, 128
  %1533 = vxpose.xlu0.b32.end [16/16] 0.0, 128
  %v1534 = vpop.trf.xlu0
  %v1535 = vpop.trf.xlu0
  %v1536 = vpop.trf.xlu0
  %v1537 = vpop.trf.xlu0
  %v1538 = vpop.trf.xlu0
  %v1539 = vpop.trf.xlu0
  %v1540 = vpop.trf.xlu0
  %v1541 = vpop.trf.xlu0
  %v1542 = vpop.trf.xlu0
  %v1543 = vpop.trf.xlu0
  %v1544 = vpop.trf.xlu0
  %v1545 = vpop.trf.xlu0
  %v1546 = vpop.trf.xlu0
  %v1547 = vpop.trf.xlu0
  %v1548 = vpop.trf.xlu0
  %v1549 = vpop.trf.xlu0
  %1550 = vxpose.xlu0.b32.start [1/16] %v163, 128
  %1551 = vxpose.xlu0.b32.cont [2/16] %v164, 128
  %1552 = vxpose.xlu0.b32.cont [3/16] %v165, 128
  %1553 = vxpose.xlu0.b32.cont [4/16] %v166, 128
  %1554 = vxpose.xlu0.b32.cont [5/16] %v167, 128
  %1555 = vxpose.xlu0.b32.cont [6/16] 0.0, 128
  %1556 = vxpose.xlu0.b32.cont [7/16] 0.0, 128
  %1557 = vxpose.xlu0.b32.cont [8/16] 0.0, 128
  %1558 = vxpose.xlu0.b32.cont [9/16] 0.0, 128
  %1559 = vxpose.xlu0.b32.cont [10/16] 0.0, 128
  %1560 = vxpose.xlu0.b32.cont [11/16] 0.0, 128
  %1561 = vxpose.xlu0.b32.cont [12/16] 0.0, 128
  %1562 = vxpose.xlu0.b32.cont [13/16] 0.0, 128
  %1563 = vxpose.xlu0.b32.cont [14/16] 0.0, 128
  %1564 = vxpose.xlu0.b32.cont [15/16] 0.0, 128
  %1565 = vxpose.xlu0.b32.end [16/16] 0.0, 128
  %v1566 = vpop.trf.xlu0
  %v1567 = vpop.trf.xlu0
  %v1568 = vpop.trf.xlu0
  %v1569 = vpop.trf.xlu0
  %v1570 = vpop.trf.xlu0
  %v1571 = vpop.trf.xlu0
  %v1572 = vpop.trf.xlu0
  %v1573 = vpop.trf.xlu0
  %v1574 = vpop.trf.xlu0
  %v1575 = vpop.trf.xlu0
  %v1576 = vpop.trf.xlu0
  %v1577 = vpop.trf.xlu0
  %v1578 = vpop.trf.xlu0
  %v1579 = vpop.trf.xlu0
  %v1580 = vpop.trf.xlu0
  %v1581 = vpop.trf.xlu0
  %1582 = vxpose.xlu0.b32.start [1/16] %v168, 128
  %1583 = vxpose.xlu0.b32.cont [2/16] %v169, 128
  %1584 = vxpose.xlu0.b32.cont [3/16] %v170, 128
  %1585 = vxpose.xlu0.b32.cont [4/16] %v171, 128
  %1586 = vxpose.xlu0.b32.cont [5/16] %v172, 128
  %1587 = vxpose.xlu0.b32.cont [6/16] 0.0, 128
  %1588 = vxpose.xlu0.b32.cont [7/16] 0.0, 128
  %1589 = vxpose.xlu0.b32.cont [8/16] 0.0, 128
  %1590 = vxpose.xlu0.b32.cont [9/16] 0.0, 128
  %1591 = vxpose.xlu0.b32.cont [10/16] 0.0, 128
  %1592 = vxpose.xlu0.b32.cont [11/16] 0.0, 128
  %1593 = vxpose.xlu0.b32.cont [12/16] 0.0, 128
  %1594 = vxpose.xlu0.b32.cont [13/16] 0.0, 128
  %1595 = vxpose.xlu0.b32.cont [14/16] 0.0, 128
  %1596 = vxpose.xlu0.b32.cont [15/16] 0.0, 128
  %1597 = vxpose.xlu0.b32.end [16/16] 0.0, 128
  %v1598 = vpop.trf.xlu0
  %v1599 = vpop.trf.xlu0
  %v1600 = vpop.trf.xlu0
  %v1601 = vpop.trf.xlu0
  %v1602 = vpop.trf.xlu0
  %v1603 = vpop.trf.xlu0
  %v1604 = vpop.trf.xlu0
  %v1605 = vpop.trf.xlu0
  %v1606 = vpop.trf.xlu0
  %v1607 = vpop.trf.xlu0
  %v1608 = vpop.trf.xlu0
  %v1609 = vpop.trf.xlu0
  %v1610 = vpop.trf.xlu0
  %v1611 = vpop.trf.xlu0
  %v1612 = vpop.trf.xlu0
  %v1613 = vpop.trf.xlu0
  %1614 = vxpose.xlu0.b32.start [1/16] %v173, 128
  %1615 = vxpose.xlu0.b32.cont [2/16] %v174, 128
  %1616 = vxpose.xlu0.b32.cont [3/16] %v175, 128
  %1617 = vxpose.xlu0.b32.cont [4/16] %v176, 128
  %1618 = vxpose.xlu0.b32.cont [5/16] %v177, 128
  %1619 = vxpose.xlu0.b32.cont [6/16] 0.0, 128
  %1620 = vxpose.xlu0.b32.cont [7/16] 0.0, 128
  %1621 = vxpose.xlu0.b32.cont [8/16] 0.0, 128
  %1622 = vxpose.xlu0.b32.cont [9/16] 0.0, 128
  %1623 = vxpose.xlu0.b32.cont [10/16] 0.0, 128
  %1624 = vxpose.xlu0.b32.cont [11/16] 0.0, 128
  %1625 = vxpose.xlu0.b32.cont [12/16] 0.0, 128
  %1626 = vxpose.xlu0.b32.cont [13/16] 0.0, 128
  %1627 = vxpose.xlu0.b32.cont [14/16] 0.0, 128
  %1628 = vxpose.xlu0.b32.cont [15/16] 0.0, 128
  %1629 = vxpose.xlu0.b32.end [16/16] 0.0, 128
  %v1630 = vpop.trf.xlu0
  %v1631 = vpop.trf.xlu0
  %v1632 = vpop.trf.xlu0
  %v1633 = vpop.trf.xlu0
  %v1634 = vpop.trf.xlu0
  %v1635 = vpop.trf.xlu0
  %v1636 = vpop.trf.xlu0
  %v1637 = vpop.trf.xlu0
  %v1638 = vpop.trf.xlu0
  %v1639 = vpop.trf.xlu0
  %v1640 = vpop.trf.xlu0
  %v1641 = vpop.trf.xlu0
  %v1642 = vpop.trf.xlu0
  %v1643 = vpop.trf.xlu0
  %v1644 = vpop.trf.xlu0
  %v1645 = vpop.trf.xlu0
  %1646 = vxpose.xlu0.b32.start [1/16] %v178, 128
  %1647 = vxpose.xlu0.b32.cont [2/16] %v179, 128
  %1648 = vxpose.xlu0.b32.cont [3/16] %v180, 128
  %1649 = vxpose.xlu0.b32.cont [4/16] %v181, 128
  %1650 = vxpose.xlu0.b32.cont [5/16] %v182, 128
  %1651 = vxpose.xlu0.b32.cont [6/16] 0.0, 128
  %1652 = vxpose.xlu0.b32.cont [7/16] 0.0, 128
  %1653 = vxpose.xlu0.b32.cont [8/16] 0.0, 128
  %1654 = vxpose.xlu0.b32.cont [9/16] 0.0, 128
  %1655 = vxpose.xlu0.b32.cont [10/16] 0.0, 128
  %1656 = vxpose.xlu0.b32.cont [11/16] 0.0, 128
  %1657 = vxpose.xlu0.b32.cont [12/16] 0.0, 128
  %1658 = vxpose.xlu0.b32.cont [13/16] 0.0, 128
  %1659 = vxpose.xlu0.b32.cont [14/16] 0.0, 128
  %1660 = vxpose.xlu0.b32.cont [15/16] 0.0, 128
  %1661 = vxpose.xlu0.b32.end [16/16] 0.0, 128
  %v1662 = vpop.trf.xlu0
  %v1663 = vpop.trf.xlu0
  %v1664 = vpop.trf.xlu0
  %v1665 = vpop.trf.xlu0
  %v1666 = vpop.trf.xlu0
  %v1667 = vpop.trf.xlu0
  %v1668 = vpop.trf.xlu0
  %v1669 = vpop.trf.xlu0
  %v1670 = vpop.trf.xlu0
  %v1671 = vpop.trf.xlu0
  %v1672 = vpop.trf.xlu0
  %v1673 = vpop.trf.xlu0
  %v1674 = vpop.trf.xlu0
  %v1675 = vpop.trf.xlu0
  %v1676 = vpop.trf.xlu0
  %v1677 = vpop.trf.xlu0
  %1678 = vxpose.xlu0.b32.start [1/16] %v183, 128
  %1679 = vxpose.xlu0.b32.cont [2/16] %v184, 128
  %1680 = vxpose.xlu0.b32.cont [3/16] %v185, 128
  %1681 = vxpose.xlu0.b32.cont [4/16] %v186, 128
  %1682 = vxpose.xlu0.b32.cont [5/16] %v187, 128
  %1683 = vxpose.xlu0.b32.cont [6/16] 0.0, 128
  %1684 = vxpose.xlu0.b32.cont [7/16] 0.0, 128
  %1685 = vxpose.xlu0.b32.cont [8/16] 0.0, 128
  %1686 = vxpose.xlu0.b32.cont [9/16] 0.0, 128
  %1687 = vxpose.xlu0.b32.cont [10/16] 0.0, 128
  %1688 = vxpose.xlu0.b32.cont [11/16] 0.0, 128
  %1689 = vxpose.xlu0.b32.cont [12/16] 0.0, 128
  %1690 = vxpose.xlu0.b32.cont [13/16] 0.0, 128
  %1691 = vxpose.xlu0.b32.cont [14/16] 0.0, 128
  %1692 = vxpose.xlu0.b32.cont [15/16] 0.0, 128
  %1693 = vxpose.xlu0.b32.end [16/16] 0.0, 128
  %v1694 = vpop.trf.xlu0
  %v1695 = vpop.trf.xlu0
  %v1696 = vpop.trf.xlu0
  %v1697 = vpop.trf.xlu0
  %v1698 = vpop.trf.xlu0
  %v1699 = vpop.trf.xlu0
  %v1700 = vpop.trf.xlu0
  %v1701 = vpop.trf.xlu0
  %v1702 = vpop.trf.xlu0
  %v1703 = vpop.trf.xlu0
  %v1704 = vpop.trf.xlu0
  %v1705 = vpop.trf.xlu0
  %v1706 = vpop.trf.xlu0
  %v1707 = vpop.trf.xlu0
  %v1708 = vpop.trf.xlu0
  %v1709 = vpop.trf.xlu0
  %1710 = vxpose.xlu0.b32.start [1/16] %v188, 128
  %1711 = vxpose.xlu0.b32.cont [2/16] %v189, 128
  %1712 = vxpose.xlu0.b32.cont [3/16] %v190, 128
  %1713 = vxpose.xlu0.b32.cont [4/16] %v191, 128
  %1714 = vxpose.xlu0.b32.cont [5/16] %v192, 128
  %1715 = vxpose.xlu0.b32.cont [6/16] 0.0, 128
  %1716 = vxpose.xlu0.b32.cont [7/16] 0.0, 128
  %1717 = vxpose.xlu0.b32.cont [8/16] 0.0, 128
  %1718 = vxpose.xlu0.b32.cont [9/16] 0.0, 128
  %1719 = vxpose.xlu0.b32.cont [10/16] 0.0, 128
  %1720 = vxpose.xlu0.b32.cont [11/16] 0.0, 128
  %1721 = vxpose.xlu0.b32.cont [12/16] 0.0, 128
  %1722 = vxpose.xlu0.b32.cont [13/16] 0.0, 128
  %1723 = vxpose.xlu0.b32.cont [14/16] 0.0, 128
  %1724 = vxpose.xlu0.b32.cont [15/16] 0.0, 128
  %1725 = vxpose.xlu0.b32.end [16/16] 0.0, 128
  %v1726 = vpop.trf.xlu0
  %v1727 = vpop.trf.xlu0
  %v1728 = vpop.trf.xlu0
  %v1729 = vpop.trf.xlu0
  %v1730 = vpop.trf.xlu0
  %v1731 = vpop.trf.xlu0
  %v1732 = vpop.trf.xlu0
  %v1733 = vpop.trf.xlu0
  %v1734 = vpop.trf.xlu0
  %v1735 = vpop.trf.xlu0
  %v1736 = vpop.trf.xlu0
  %v1737 = vpop.trf.xlu0
  %v1738 = vpop.trf.xlu0
  %v1739 = vpop.trf.xlu0
  %v1740 = vpop.trf.xlu0
  %v1741 = vpop.trf.xlu0
  %1742 = vxpose.xlu0.b32.start [1/16] %v193, 128
  %1743 = vxpose.xlu0.b32.cont [2/16] %v194, 128
  %1744 = vxpose.xlu0.b32.cont [3/16] %v195, 128
  %1745 = vxpose.xlu0.b32.cont [4/16] %v196, 128
  %1746 = vxpose.xlu0.b32.cont [5/16] %v197, 128
  %1747 = vxpose.xlu0.b32.cont [6/16] 0.0, 128
  %1748 = vxpose.xlu0.b32.cont [7/16] 0.0, 128
  %1749 = vxpose.xlu0.b32.cont [8/16] 0.0, 128
  %1750 = vxpose.xlu0.b32.cont [9/16] 0.0, 128
  %1751 = vxpose.xlu0.b32.cont [10/16] 0.0, 128
  %1752 = vxpose.xlu0.b32.cont [11/16] 0.0, 128
  %1753 = vxpose.xlu0.b32.cont [12/16] 0.0, 128
  %1754 = vxpose.xlu0.b32.cont [13/16] 0.0, 128
  %1755 = vxpose.xlu0.b32.cont [14/16] 0.0, 128
  %1756 = vxpose.xlu0.b32.cont [15/16] 0.0, 128
  %1757 = vxpose.xlu0.b32.end [16/16] 0.0, 128
  %v1758 = vpop.trf.xlu0
  %v1759 = vpop.trf.xlu0
  %v1760 = vpop.trf.xlu0
  %v1761 = vpop.trf.xlu0
  %v1762 = vpop.trf.xlu0
  %v1763 = vpop.trf.xlu0
  %v1764 = vpop.trf.xlu0
  %v1765 = vpop.trf.xlu0
  %v1766 = vpop.trf.xlu0
  %v1767 = vpop.trf.xlu0
  %v1768 = vpop.trf.xlu0
  %v1769 = vpop.trf.xlu0
  %v1770 = vpop.trf.xlu0
  %v1771 = vpop.trf.xlu0
  %v1772 = vpop.trf.xlu0
  %v1773 = vpop.trf.xlu0
  %1774 = vxpose.xlu0.b32.start [1/16] %v198, 128
  %1775 = vxpose.xlu0.b32.cont [2/16] %v199, 128
  %1776 = vxpose.xlu0.b32.cont [3/16] %v200, 128
  %1777 = vxpose.xlu0.b32.cont [4/16] %v201, 128
  %1778 = vxpose.xlu0.b32.cont [5/16] %v202, 128
  %1779 = vxpose.xlu0.b32.cont [6/16] 0.0, 128
  %1780 = vxpose.xlu0.b32.cont [7/16] 0.0, 128
  %1781 = vxpose.xlu0.b32.cont [8/16] 0.0, 128
  %1782 = vxpose.xlu0.b32.cont [9/16] 0.0, 128
  %1783 = vxpose.xlu0.b32.cont [10/16] 0.0, 128
  %1784 = vxpose.xlu0.b32.cont [11/16] 0.0, 128
  %1785 = vxpose.xlu0.b32.cont [12/16] 0.0, 128
  %1786 = vxpose.xlu0.b32.cont [13/16] 0.0, 128
  %1787 = vxpose.xlu0.b32.cont [14/16] 0.0, 128
  %1788 = vxpose.xlu0.b32.cont [15/16] 0.0, 128
  %1789 = vxpose.xlu0.b32.end [16/16] 0.0, 128
  %v1790 = vpop.trf.xlu0
  %v1791 = vpop.trf.xlu0
  %v1792 = vpop.trf.xlu0
  %v1793 = vpop.trf.xlu0
  %v1794 = vpop.trf.xlu0
  %v1795 = vpop.trf.xlu0
  %v1796 = vpop.trf.xlu0
  %v1797 = vpop.trf.xlu0
  %v1798 = vpop.trf.xlu0
  %v1799 = vpop.trf.xlu0
  %v1800 = vpop.trf.xlu0
  %v1801 = vpop.trf.xlu0
  %v1802 = vpop.trf.xlu0
  %v1803 = vpop.trf.xlu0
  %v1804 = vpop.trf.xlu0
  %v1805 = vpop.trf.xlu0
  %1806 = vxpose.xlu0.b32.start [1/16] %v203, 128
  %1807 = vxpose.xlu0.b32.cont [2/16] %v204, 128
  %1808 = vxpose.xlu0.b32.cont [3/16] %v205, 128
  %1809 = vxpose.xlu0.b32.cont [4/16] %v206, 128
  %1810 = vxpose.xlu0.b32.cont [5/16] %v207, 128
  %1811 = vxpose.xlu0.b32.cont [6/16] 0.0, 128
  %1812 = vxpose.xlu0.b32.cont [7/16] 0.0, 128
  %1813 = vxpose.xlu0.b32.cont [8/16] 0.0, 128
  %1814 = vxpose.xlu0.b32.cont [9/16] 0.0, 128
  %1815 = vxpose.xlu0.b32.cont [10/16] 0.0, 128
  %1816 = vxpose.xlu0.b32.cont [11/16] 0.0, 128
  %1817 = vxpose.xlu0.b32.cont [12/16] 0.0, 128
  %1818 = vxpose.xlu0.b32.cont [13/16] 0.0, 128
  %1819 = vxpose.xlu0.b32.cont [14/16] 0.0, 128
  %1820 = vxpose.xlu0.b32.cont [15/16] 0.0, 128
  %1821 = vxpose.xlu0.b32.end [16/16] 0.0, 128
  %v1822 = vpop.trf.xlu0
  %v1823 = vpop.trf.xlu0
  %v1824 = vpop.trf.xlu0
  %v1825 = vpop.trf.xlu0
  %v1826 = vpop.trf.xlu0
  %v1827 = vpop.trf.xlu0
  %v1828 = vpop.trf.xlu0
  %v1829 = vpop.trf.xlu0
  %v1830 = vpop.trf.xlu0
  %v1831 = vpop.trf.xlu0
  %v1832 = vpop.trf.xlu0
  %v1833 = vpop.trf.xlu0
  %v1834 = vpop.trf.xlu0
  %v1835 = vpop.trf.xlu0
  %v1836 = vpop.trf.xlu0
  %v1837 = vpop.trf.xlu0
  %1838 = vxpose.xlu0.b32.start [1/16] %v208, 128
  %1839 = vxpose.xlu0.b32.cont [2/16] %v209, 128
  %1840 = vxpose.xlu0.b32.cont [3/16] %v210, 128
  %1841 = vxpose.xlu0.b32.cont [4/16] %v211, 128
  %1842 = vxpose.xlu0.b32.cont [5/16] %v212, 128
  %1843 = vxpose.xlu0.b32.cont [6/16] 0.0, 128
  %1844 = vxpose.xlu0.b32.cont [7/16] 0.0, 128
  %1845 = vxpose.xlu0.b32.cont [8/16] 0.0, 128
  %1846 = vxpose.xlu0.b32.cont [9/16] 0.0, 128
  %1847 = vxpose.xlu0.b32.cont [10/16] 0.0, 128
  %1848 = vxpose.xlu0.b32.cont [11/16] 0.0, 128
  %1849 = vxpose.xlu0.b32.cont [12/16] 0.0, 128
  %1850 = vxpose.xlu0.b32.cont [13/16] 0.0, 128
  %1851 = vxpose.xlu0.b32.cont [14/16] 0.0, 128
  %1852 = vxpose.xlu0.b32.cont [15/16] 0.0, 128
  %1853 = vxpose.xlu0.b32.end [16/16] 0.0, 128
  %v1854 = vpop.trf.xlu0
  %v1855 = vpop.trf.xlu0
  %v1856 = vpop.trf.xlu0
  %v1857 = vpop.trf.xlu0
  %v1858 = vpop.trf.xlu0
  %v1859 = vpop.trf.xlu0
  %v1860 = vpop.trf.xlu0
  %v1861 = vpop.trf.xlu0
  %v1862 = vpop.trf.xlu0
  %v1863 = vpop.trf.xlu0
  %v1864 = vpop.trf.xlu0
  %v1865 = vpop.trf.xlu0
  %v1866 = vpop.trf.xlu0
  %v1867 = vpop.trf.xlu0
  %v1868 = vpop.trf.xlu0
  %v1869 = vpop.trf.xlu0
  %1870 = vxpose.xlu0.b32.start [1/16] %v213, 128
  %1871 = vxpose.xlu0.b32.cont [2/16] %v214, 128
  %1872 = vxpose.xlu0.b32.cont [3/16] %v215, 128
  %1873 = vxpose.xlu0.b32.cont [4/16] %v216, 128
  %1874 = vxpose.xlu0.b32.cont [5/16] %v217, 128
  %1875 = vxpose.xlu0.b32.cont [6/16] 0.0, 128
  %1876 = vxpose.xlu0.b32.cont [7/16] 0.0, 128
  %1877 = vxpose.xlu0.b32.cont [8/16] 0.0, 128
  %1878 = vxpose.xlu0.b32.cont [9/16] 0.0, 128
  %1879 = vxpose.xlu0.b32.cont [10/16] 0.0, 128
  %1880 = vxpose.xlu0.b32.cont [11/16] 0.0, 128
  %1881 = vxpose.xlu0.b32.cont [12/16] 0.0, 128
  %1882 = vxpose.xlu0.b32.cont [13/16] 0.0, 128
  %1883 = vxpose.xlu0.b32.cont [14/16] 0.0, 128
  %1884 = vxpose.xlu0.b32.cont [15/16] 0.0, 128
  %1885 = vxpose.xlu0.b32.end [16/16] 0.0, 128
  %v1886 = vpop.trf.xlu0
  %v1887 = vpop.trf.xlu0
  %v1888 = vpop.trf.xlu0
  %v1889 = vpop.trf.xlu0
  %v1890 = vpop.trf.xlu0
  %v1891 = vpop.trf.xlu0
  %v1892 = vpop.trf.xlu0
  %v1893 = vpop.trf.xlu0
  %v1894 = vpop.trf.xlu0
  %v1895 = vpop.trf.xlu0
  %v1896 = vpop.trf.xlu0
  %v1897 = vpop.trf.xlu0
  %v1898 = vpop.trf.xlu0
  %v1899 = vpop.trf.xlu0
  %v1900 = vpop.trf.xlu0
  %v1901 = vpop.trf.xlu0
  %1902 = vxpose.xlu0.b32.start [1/16] %v218, 128
  %1903 = vxpose.xlu0.b32.cont [2/16] %v219, 128
  %1904 = vxpose.xlu0.b32.cont [3/16] %v220, 128
  %1905 = vxpose.xlu0.b32.cont [4/16] %v221, 128
  %1906 = vxpose.xlu0.b32.cont [5/16] %v222, 128
  %1907 = vxpose.xlu0.b32.cont [6/16] 0.0, 128
  %1908 = vxpose.xlu0.b32.cont [7/16] 0.0, 128
  %1909 = vxpose.xlu0.b32.cont [8/16] 0.0, 128
  %1910 = vxpose.xlu0.b32.cont [9/16] 0.0, 128
  %1911 = vxpose.xlu0.b32.cont [10/16] 0.0, 128
  %1912 = vxpose.xlu0.b32.cont [11/16] 0.0, 128
  %1913 = vxpose.xlu0.b32.cont [12/16] 0.0, 128
  %1914 = vxpose.xlu0.b32.cont [13/16] 0.0, 128
  %1915 = vxpose.xlu0.b32.cont [14/16] 0.0, 128
  %1916 = vxpose.xlu0.b32.cont [15/16] 0.0, 128
  %1917 = vxpose.xlu0.b32.end [16/16] 0.0, 128
  %v1918 = vpop.trf.xlu0
  %v1919 = vpop.trf.xlu0
  %v1920 = vpop.trf.xlu0
  %v1921 = vpop.trf.xlu0
  %v1922 = vpop.trf.xlu0
  %v1923 = vpop.trf.xlu0
  %v1924 = vpop.trf.xlu0
  %v1925 = vpop.trf.xlu0
  %v1926 = vpop.trf.xlu0
  %v1927 = vpop.trf.xlu0
  %v1928 = vpop.trf.xlu0
  %v1929 = vpop.trf.xlu0
  %v1930 = vpop.trf.xlu0
  %v1931 = vpop.trf.xlu0
  %v1932 = vpop.trf.xlu0
  %v1933 = vpop.trf.xlu0
  %1934 = vxpose.xlu0.b32.start [1/16] %v223, 128
  %1935 = vxpose.xlu0.b32.cont [2/16] %v224, 128
  %1936 = vxpose.xlu0.b32.cont [3/16] %v225, 128
  %1937 = vxpose.xlu0.b32.cont [4/16] %v226, 128
  %1938 = vxpose.xlu0.b32.cont [5/16] %v227, 128
  %1939 = vxpose.xlu0.b32.cont [6/16] 0.0, 128
  %1940 = vxpose.xlu0.b32.cont [7/16] 0.0, 128
  %1941 = vxpose.xlu0.b32.cont [8/16] 0.0, 128
  %1942 = vxpose.xlu0.b32.cont [9/16] 0.0, 128
  %1943 = vxpose.xlu0.b32.cont [10/16] 0.0, 128
  %1944 = vxpose.xlu0.b32.cont [11/16] 0.0, 128
  %1945 = vxpose.xlu0.b32.cont [12/16] 0.0, 128
  %1946 = vxpose.xlu0.b32.cont [13/16] 0.0, 128
  %1947 = vxpose.xlu0.b32.cont [14/16] 0.0, 128
  %1948 = vxpose.xlu0.b32.cont [15/16] 0.0, 128
  %1949 = vxpose.xlu0.b32.end [16/16] 0.0, 128
  %v1950 = vpop.trf.xlu0
  %v1951 = vpop.trf.xlu0
  %v1952 = vpop.trf.xlu0
  %v1953 = vpop.trf.xlu0
  %v1954 = vpop.trf.xlu0
  %v1955 = vpop.trf.xlu0
  %v1956 = vpop.trf.xlu0
  %v1957 = vpop.trf.xlu0
  %v1958 = vpop.trf.xlu0
  %v1959 = vpop.trf.xlu0
  %v1960 = vpop.trf.xlu0
  %v1961 = vpop.trf.xlu0
  %v1962 = vpop.trf.xlu0
  %v1963 = vpop.trf.xlu0
  %v1964 = vpop.trf.xlu0
  %v1965 = vpop.trf.xlu0
  %1966 = vxpose.xlu0.b32.start [1/16] %v228, 128
  %1967 = vxpose.xlu0.b32.cont [2/16] %v229, 128
  %1968 = vxpose.xlu0.b32.cont [3/16] %v230, 128
  %1969 = vxpose.xlu0.b32.cont [4/16] %v231, 128
  %1970 = vxpose.xlu0.b32.cont [5/16] %v232, 128
  %1971 = vxpose.xlu0.b32.cont [6/16] 0.0, 128
  %1972 = vxpose.xlu0.b32.cont [7/16] 0.0, 128
  %1973 = vxpose.xlu0.b32.cont [8/16] 0.0, 128
  %1974 = vxpose.xlu0.b32.cont [9/16] 0.0, 128
  %1975 = vxpose.xlu0.b32.cont [10/16] 0.0, 128
  %1976 = vxpose.xlu0.b32.cont [11/16] 0.0, 128
  %1977 = vxpose.xlu0.b32.cont [12/16] 0.0, 128
  %1978 = vxpose.xlu0.b32.cont [13/16] 0.0, 128
  %1979 = vxpose.xlu0.b32.cont [14/16] 0.0, 128
  %1980 = vxpose.xlu0.b32.cont [15/16] 0.0, 128
  %1981 = vxpose.xlu0.b32.end [16/16] 0.0, 128
  %v1982 = vpop.trf.xlu0
  %v1983 = vpop.trf.xlu0
  %v1984 = vpop.trf.xlu0
  %v1985 = vpop.trf.xlu0
  %v1986 = vpop.trf.xlu0
  %v1987 = vpop.trf.xlu0
  %v1988 = vpop.trf.xlu0
  %v1989 = vpop.trf.xlu0
  %v1990 = vpop.trf.xlu0
  %v1991 = vpop.trf.xlu0
  %v1992 = vpop.trf.xlu0
  %v1993 = vpop.trf.xlu0
  %v1994 = vpop.trf.xlu0
  %v1995 = vpop.trf.xlu0
  %v1996 = vpop.trf.xlu0
  %v1997 = vpop.trf.xlu0
  %1998 = vxpose.xlu0.b32.start [1/16] %v233, 128
  %1999 = vxpose.xlu0.b32.cont [2/16] %v234, 128
  %2000 = vxpose.xlu0.b32.cont [3/16] %v235, 128
  %2001 = vxpose.xlu0.b32.cont [4/16] %v236, 128
  %2002 = vxpose.xlu0.b32.cont [5/16] %v237, 128
  %2003 = vxpose.xlu0.b32.cont [6/16] 0.0, 128
  %2004 = vxpose.xlu0.b32.cont [7/16] 0.0, 128
  %2005 = vxpose.xlu0.b32.cont [8/16] 0.0, 128
  %2006 = vxpose.xlu0.b32.cont [9/16] 0.0, 128
  %2007 = vxpose.xlu0.b32.cont [10/16] 0.0, 128
  %2008 = vxpose.xlu0.b32.cont [11/16] 0.0, 128
  %2009 = vxpose.xlu0.b32.cont [12/16] 0.0, 128
  %2010 = vxpose.xlu0.b32.cont [13/16] 0.0, 128
  %2011 = vxpose.xlu0.b32.cont [14/16] 0.0, 128
  %2012 = vxpose.xlu0.b32.cont [15/16] 0.0, 128
  %2013 = vxpose.xlu0.b32.end [16/16] 0.0, 128
  %v2014 = vpop.trf.xlu0
  %v2015 = vpop.trf.xlu0
  %v2016 = vpop.trf.xlu0
  %v2017 = vpop.trf.xlu0
  %v2018 = vpop.trf.xlu0
  %v2019 = vpop.trf.xlu0
  %v2020 = vpop.trf.xlu0
  %v2021 = vpop.trf.xlu0
  %v2022 = vpop.trf.xlu0
  %v2023 = vpop.trf.xlu0
  %v2024 = vpop.trf.xlu0
  %v2025 = vpop.trf.xlu0
  %v2026 = vpop.trf.xlu0
  %v2027 = vpop.trf.xlu0
  %v2028 = vpop.trf.xlu0
  %v2029 = vpop.trf.xlu0
  %2030 = vxpose.xlu0.b32.start [1/16] %v238, 128
  %2031 = vxpose.xlu0.b32.cont [2/16] %v239, 128
  %2032 = vxpose.xlu0.b32.cont [3/16] %v240, 128
  %2033 = vxpose.xlu0.b32.cont [4/16] %v241, 128
  %2034 = vxpose.xlu0.b32.cont [5/16] %v242, 128
  %2035 = vxpose.xlu0.b32.cont [6/16] 0.0, 128
  %2036 = vxpose.xlu0.b32.cont [7/16] 0.0, 128
  %2037 = vxpose.xlu0.b32.cont [8/16] 0.0, 128
  %2038 = vxpose.xlu0.b32.cont [9/16] 0.0, 128
  %2039 = vxpose.xlu0.b32.cont [10/16] 0.0, 128
  %2040 = vxpose.xlu0.b32.cont [11/16] 0.0, 128
  %2041 = vxpose.xlu0.b32.cont [12/16] 0.0, 128
  %2042 = vxpose.xlu0.b32.cont [13/16] 0.0, 128
  %2043 = vxpose.xlu0.b32.cont [14/16] 0.0, 128
  %2044 = vxpose.xlu0.b32.cont [15/16] 0.0, 128
  %2045 = vxpose.xlu0.b32.end [16/16] 0.0, 128
  %v2046 = vpop.trf.xlu0
  %v2047 = vpop.trf.xlu0
  %v2048 = vpop.trf.xlu0
  %v2049 = vpop.trf.xlu0
  %v2050 = vpop.trf.xlu0
  %v2051 = vpop.trf.xlu0
  %v2052 = vpop.trf.xlu0
  %v2053 = vpop.trf.xlu0
  %v2054 = vpop.trf.xlu0
  %v2055 = vpop.trf.xlu0
  %v2056 = vpop.trf.xlu0
  %v2057 = vpop.trf.xlu0
  %v2058 = vpop.trf.xlu0
  %v2059 = vpop.trf.xlu0
  %v2060 = vpop.trf.xlu0
  %v2061 = vpop.trf.xlu0
  %2062 = vxpose.xlu0.b32.start [1/16] %v243, 128
  %2063 = vxpose.xlu0.b32.cont [2/16] %v244, 128
  %2064 = vxpose.xlu0.b32.cont [3/16] %v245, 128
  %2065 = vxpose.xlu0.b32.cont [4/16] %v246, 128
  %2066 = vxpose.xlu0.b32.cont [5/16] %v247, 128
  %2067 = vxpose.xlu0.b32.cont [6/16] 0.0, 128
  %2068 = vxpose.xlu0.b32.cont [7/16] 0.0, 128
  %2069 = vxpose.xlu0.b32.cont [8/16] 0.0, 128
  %2070 = vxpose.xlu0.b32.cont [9/16] 0.0, 128
  %2071 = vxpose.xlu0.b32.cont [10/16] 0.0, 128
  %2072 = vxpose.xlu0.b32.cont [11/16] 0.0, 128
  %2073 = vxpose.xlu0.b32.cont [12/16] 0.0, 128
  %2074 = vxpose.xlu0.b32.cont [13/16] 0.0, 128
  %2075 = vxpose.xlu0.b32.cont [14/16] 0.0, 128
  %2076 = vxpose.xlu0.b32.cont [15/16] 0.0, 128
  %2077 = vxpose.xlu0.b32.end [16/16] 0.0, 128
  %v2078 = vpop.trf.xlu0
  %v2079 = vpop.trf.xlu0
  %v2080 = vpop.trf.xlu0
  %v2081 = vpop.trf.xlu0
  %v2082 = vpop.trf.xlu0
  %v2083 = vpop.trf.xlu0
  %v2084 = vpop.trf.xlu0
  %v2085 = vpop.trf.xlu0
  %v2086 = vpop.trf.xlu0
  %v2087 = vpop.trf.xlu0
  %v2088 = vpop.trf.xlu0
  %v2089 = vpop.trf.xlu0
  %v2090 = vpop.trf.xlu0
  %v2091 = vpop.trf.xlu0
  %v2092 = vpop.trf.xlu0
  %v2093 = vpop.trf.xlu0
  %2094 = vxpose.xlu0.b32.start [1/16] %v248, 128
  %2095 = vxpose.xlu0.b32.cont [2/16] %v249, 128
  %2096 = vxpose.xlu0.b32.cont [3/16] %v250, 128
  %2097 = vxpose.xlu0.b32.cont [4/16] %v251, 128
  %2098 = vxpose.xlu0.b32.cont [5/16] %v252, 128
  %2099 = vxpose.xlu0.b32.cont [6/16] 0.0, 128
  %2100 = vxpose.xlu0.b32.cont [7/16] 0.0, 128
  %2101 = vxpose.xlu0.b32.cont [8/16] 0.0, 128
  %2102 = vxpose.xlu0.b32.cont [9/16] 0.0, 128
  %2103 = vxpose.xlu0.b32.cont [10/16] 0.0, 128
  %2104 = vxpose.xlu0.b32.cont [11/16] 0.0, 128
  %2105 = vxpose.xlu0.b32.cont [12/16] 0.0, 128
  %2106 = vxpose.xlu0.b32.cont [13/16] 0.0, 128
  %2107 = vxpose.xlu0.b32.cont [14/16] 0.0, 128
  %2108 = vxpose.xlu0.b32.cont [15/16] 0.0, 128
  %2109 = vxpose.xlu0.b32.end [16/16] 0.0, 128
  %v2110 = vpop.trf.xlu0
  %v2111 = vpop.trf.xlu0
  %v2112 = vpop.trf.xlu0
  %v2113 = vpop.trf.xlu0
  %v2114 = vpop.trf.xlu0
  %v2115 = vpop.trf.xlu0
  %v2116 = vpop.trf.xlu0
  %v2117 = vpop.trf.xlu0
  %v2118 = vpop.trf.xlu0
  %v2119 = vpop.trf.xlu0
  %v2120 = vpop.trf.xlu0
  %v2121 = vpop.trf.xlu0
  %v2122 = vpop.trf.xlu0
  %v2123 = vpop.trf.xlu0
  %v2124 = vpop.trf.xlu0
  %v2125 = vpop.trf.xlu0
  %2126 = vxpose.xlu0.b32.start [1/16] %v253, 128
  %2127 = vxpose.xlu0.b32.cont [2/16] %v254, 128
  %2128 = vxpose.xlu0.b32.cont [3/16] %v255, 128
  %2129 = vxpose.xlu0.b32.cont [4/16] %v256, 128
  %2130 = vxpose.xlu0.b32.cont [5/16] %v257, 128
  %2131 = vxpose.xlu0.b32.cont [6/16] 0.0, 128
  %2132 = vxpose.xlu0.b32.cont [7/16] 0.0, 128
  %2133 = vxpose.xlu0.b32.cont [8/16] 0.0, 128
  %2134 = vxpose.xlu0.b32.cont [9/16] 0.0, 128
  %2135 = vxpose.xlu0.b32.cont [10/16] 0.0, 128
  %2136 = vxpose.xlu0.b32.cont [11/16] 0.0, 128
  %2137 = vxpose.xlu0.b32.cont [12/16] 0.0, 128
  %2138 = vxpose.xlu0.b32.cont [13/16] 0.0, 128
  %2139 = vxpose.xlu0.b32.cont [14/16] 0.0, 128
  %2140 = vxpose.xlu0.b32.cont [15/16] 0.0, 128
  %2141 = vxpose.xlu0.b32.end [16/16] 0.0, 128
  %v2142 = vpop.trf.xlu0
  %v2143 = vpop.trf.xlu0
  %v2144 = vpop.trf.xlu0
  %v2145 = vpop.trf.xlu0
  %v2146 = vpop.trf.xlu0
  %v2147 = vpop.trf.xlu0
  %v2148 = vpop.trf.xlu0
  %v2149 = vpop.trf.xlu0
  %v2150 = vpop.trf.xlu0
  %v2151 = vpop.trf.xlu0
  %v2152 = vpop.trf.xlu0
  %v2153 = vpop.trf.xlu0
  %v2154 = vpop.trf.xlu0
  %v2155 = vpop.trf.xlu0
  %v2156 = vpop.trf.xlu0
  %v2157 = vpop.trf.xlu0
  %2158 = vxpose.xlu0.b32.start [1/16] %v258, 128
  %2159 = vxpose.xlu0.b32.cont [2/16] %v259, 128
  %2160 = vxpose.xlu0.b32.cont [3/16] %v260, 128
  %2161 = vxpose.xlu0.b32.cont [4/16] %v261, 128
  %2162 = vxpose.xlu0.b32.cont [5/16] %v262, 128
  %2163 = vxpose.xlu0.b32.cont [6/16] 0.0, 128
  %2164 = vxpose.xlu0.b32.cont [7/16] 0.0, 128
  %2165 = vxpose.xlu0.b32.cont [8/16] 0.0, 128
  %2166 = vxpose.xlu0.b32.cont [9/16] 0.0, 128
  %2167 = vxpose.xlu0.b32.cont [10/16] 0.0, 128
  %2168 = vxpose.xlu0.b32.cont [11/16] 0.0, 128
  %2169 = vxpose.xlu0.b32.cont [12/16] 0.0, 128
  %2170 = vxpose.xlu0.b32.cont [13/16] 0.0, 128
  %2171 = vxpose.xlu0.b32.cont [14/16] 0.0, 128
  %2172 = vxpose.xlu0.b32.cont [15/16] 0.0, 128
  %2173 = vxpose.xlu0.b32.end [16/16] 0.0, 128
  %v2174 = vpop.trf.xlu0
  %v2175 = vpop.trf.xlu0
  %v2176 = vpop.trf.xlu0
  %v2177 = vpop.trf.xlu0
  %v2178 = vpop.trf.xlu0
  %v2179 = vpop.trf.xlu0
  %v2180 = vpop.trf.xlu0
  %v2181 = vpop.trf.xlu0
  %v2182 = vpop.trf.xlu0
  %v2183 = vpop.trf.xlu0
  %v2184 = vpop.trf.xlu0
  %v2185 = vpop.trf.xlu0
  %v2186 = vpop.trf.xlu0
  %v2187 = vpop.trf.xlu0
  %v2188 = vpop.trf.xlu0
  %v2189 = vpop.trf.xlu0
  %2190 = vxpose.xlu0.b32.start [1/16] %v263, 128
  %2191 = vxpose.xlu0.b32.cont [2/16] %v264, 128
  %2192 = vxpose.xlu0.b32.cont [3/16] %v265, 128
  %2193 = vxpose.xlu0.b32.cont [4/16] %v266, 128
  %2194 = vxpose.xlu0.b32.cont [5/16] %v267, 128
  %2195 = vxpose.xlu0.b32.cont [6/16] 0.0, 128
  %2196 = vxpose.xlu0.b32.cont [7/16] 0.0, 128
  %2197 = vxpose.xlu0.b32.cont [8/16] 0.0, 128
  %2198 = vxpose.xlu0.b32.cont [9/16] 0.0, 128
  %2199 = vxpose.xlu0.b32.cont [10/16] 0.0, 128
  %2200 = vxpose.xlu0.b32.cont [11/16] 0.0, 128
  %2201 = vxpose.xlu0.b32.cont [12/16] 0.0, 128
  %2202 = vxpose.xlu0.b32.cont [13/16] 0.0, 128
  %2203 = vxpose.xlu0.b32.cont [14/16] 0.0, 128
  %2204 = vxpose.xlu0.b32.cont [15/16] 0.0, 128
  %2205 = vxpose.xlu0.b32.end [16/16] 0.0, 128
  %v2206 = vpop.trf.xlu0
  %v2207 = vpop.trf.xlu0
  %v2208 = vpop.trf.xlu0
  %v2209 = vpop.trf.xlu0
  %v2210 = vpop.trf.xlu0
  %v2211 = vpop.trf.xlu0
  %v2212 = vpop.trf.xlu0
  %v2213 = vpop.trf.xlu0
  %v2214 = vpop.trf.xlu0
  %v2215 = vpop.trf.xlu0
  %v2216 = vpop.trf.xlu0
  %v2217 = vpop.trf.xlu0
  %v2218 = vpop.trf.xlu0
  %v2219 = vpop.trf.xlu0
  %v2220 = vpop.trf.xlu0
  %v2221 = vpop.trf.xlu0
  %2222 = vxpose.xlu0.b32.start [1/16] %v268, 128
  %2223 = vxpose.xlu0.b32.cont [2/16] %v269, 128
  %2224 = vxpose.xlu0.b32.cont [3/16] %v270, 128
  %2225 = vxpose.xlu0.b32.cont [4/16] %v271, 128
  %2226 = vxpose.xlu0.b32.cont [5/16] %v272, 128
  %2227 = vxpose.xlu0.b32.cont [6/16] 0.0, 128
  %2228 = vxpose.xlu0.b32.cont [7/16] 0.0, 128
  %2229 = vxpose.xlu0.b32.cont [8/16] 0.0, 128
  %2230 = vxpose.xlu0.b32.cont [9/16] 0.0, 128
  %2231 = vxpose.xlu0.b32.cont [10/16] 0.0, 128
  %2232 = vxpose.xlu0.b32.cont [11/16] 0.0, 128
  %2233 = vxpose.xlu0.b32.cont [12/16] 0.0, 128
  %2234 = vxpose.xlu0.b32.cont [13/16] 0.0, 128
  %2235 = vxpose.xlu0.b32.cont [14/16] 0.0, 128
  %2236 = vxpose.xlu0.b32.cont [15/16] 0.0, 128
  %2237 = vxpose.xlu0.b32.end [16/16] 0.0, 128
  %v2238 = vpop.trf.xlu0
  %v2239 = vpop.trf.xlu0
  %v2240 = vpop.trf.xlu0
  %v2241 = vpop.trf.xlu0
  %v2242 = vpop.trf.xlu0
  %v2243 = vpop.trf.xlu0
  %v2244 = vpop.trf.xlu0
  %v2245 = vpop.trf.xlu0
  %v2246 = vpop.trf.xlu0
  %v2247 = vpop.trf.xlu0
  %v2248 = vpop.trf.xlu0
  %v2249 = vpop.trf.xlu0
  %v2250 = vpop.trf.xlu0
  %v2251 = vpop.trf.xlu0
  %v2252 = vpop.trf.xlu0
  %v2253 = vpop.trf.xlu0
  %2254 = vxpose.xlu0.b32.start [1/16] %v273, 128
  %2255 = vxpose.xlu0.b32.cont [2/16] %v274, 128
  %2256 = vxpose.xlu0.b32.cont [3/16] %v275, 128
  %2257 = vxpose.xlu0.b32.cont [4/16] %v276, 128
  %2258 = vxpose.xlu0.b32.cont [5/16] %v277, 128
  %2259 = vxpose.xlu0.b32.cont [6/16] 0.0, 128
  %2260 = vxpose.xlu0.b32.cont [7/16] 0.0, 128
  %2261 = vxpose.xlu0.b32.cont [8/16] 0.0, 128
  %2262 = vxpose.xlu0.b32.cont [9/16] 0.0, 128
  %2263 = vxpose.xlu0.b32.cont [10/16] 0.0, 128
  %2264 = vxpose.xlu0.b32.cont [11/16] 0.0, 128
  %2265 = vxpose.xlu0.b32.cont [12/16] 0.0, 128
  %2266 = vxpose.xlu0.b32.cont [13/16] 0.0, 128
  %2267 = vxpose.xlu0.b32.cont [14/16] 0.0, 128
  %2268 = vxpose.xlu0.b32.cont [15/16] 0.0, 128
  %2269 = vxpose.xlu0.b32.end [16/16] 0.0, 128
  %v2270 = vpop.trf.xlu0
  %v2271 = vpop.trf.xlu0
  %v2272 = vpop.trf.xlu0
  %v2273 = vpop.trf.xlu0
  %v2274 = vpop.trf.xlu0
  %v2275 = vpop.trf.xlu0
  %v2276 = vpop.trf.xlu0
  %v2277 = vpop.trf.xlu0
  %v2278 = vpop.trf.xlu0
  %v2279 = vpop.trf.xlu0
  %v2280 = vpop.trf.xlu0
  %v2281 = vpop.trf.xlu0
  %v2282 = vpop.trf.xlu0
  %v2283 = vpop.trf.xlu0
  %v2284 = vpop.trf.xlu0
  %v2285 = vpop.trf.xlu0
  %2286 = vxpose.xlu0.b32.start [1/16] %v278, 128
  %2287 = vxpose.xlu0.b32.cont [2/16] %v279, 128
  %2288 = vxpose.xlu0.b32.cont [3/16] %v280, 128
  %2289 = vxpose.xlu0.b32.cont [4/16] %v281, 128
  %2290 = vxpose.xlu0.b32.cont [5/16] %v282, 128
  %2291 = vxpose.xlu0.b32.cont [6/16] 0.0, 128
  %2292 = vxpose.xlu0.b32.cont [7/16] 0.0, 128
  %2293 = vxpose.xlu0.b32.cont [8/16] 0.0, 128
  %2294 = vxpose.xlu0.b32.cont [9/16] 0.0, 128
  %2295 = vxpose.xlu0.b32.cont [10/16] 0.0, 128
  %2296 = vxpose.xlu0.b32.cont [11/16] 0.0, 128
  %2297 = vxpose.xlu0.b32.cont [12/16] 0.0, 128
  %2298 = vxpose.xlu0.b32.cont [13/16] 0.0, 128
  %2299 = vxpose.xlu0.b32.cont [14/16] 0.0, 128
  %2300 = vxpose.xlu0.b32.cont [15/16] 0.0, 128
  %2301 = vxpose.xlu0.b32.end [16/16] 0.0, 128
  %v2302 = vpop.trf.xlu0
  %v2303 = vpop.trf.xlu0
  %v2304 = vpop.trf.xlu0
  %v2305 = vpop.trf.xlu0
  %v2306 = vpop.trf.xlu0
  %v2307 = vpop.trf.xlu0
  %v2308 = vpop.trf.xlu0
  %v2309 = vpop.trf.xlu0
  %v2310 = vpop.trf.xlu0
  %v2311 = vpop.trf.xlu0
  %v2312 = vpop.trf.xlu0
  %v2313 = vpop.trf.xlu0
  %v2314 = vpop.trf.xlu0
  %v2315 = vpop.trf.xlu0
  %v2316 = vpop.trf.xlu0
  %v2317 = vpop.trf.xlu0
  %2318 = vxpose.xlu0.b32.start [1/16] %v283, 128
  %2319 = vxpose.xlu0.b32.cont [2/16] %v284, 128
  %2320 = vxpose.xlu0.b32.cont [3/16] %v285, 128
  %2321 = vxpose.xlu0.b32.cont [4/16] %v286, 128
  %2322 = vxpose.xlu0.b32.cont [5/16] %v287, 128
  %2323 = vxpose.xlu0.b32.cont [6/16] 0.0, 128
  %2324 = vxpose.xlu0.b32.cont [7/16] 0.0, 128
  %2325 = vxpose.xlu0.b32.cont [8/16] 0.0, 128
  %2326 = vxpose.xlu0.b32.cont [9/16] 0.0, 128
  %2327 = vxpose.xlu0.b32.cont [10/16] 0.0, 128
  %2328 = vxpose.xlu0.b32.cont [11/16] 0.0, 128
  %2329 = vxpose.xlu0.b32.cont [12/16] 0.0, 128
  %2330 = vxpose.xlu0.b32.cont [13/16] 0.0, 128
  %2331 = vxpose.xlu0.b32.cont [14/16] 0.0, 128
  %2332 = vxpose.xlu0.b32.cont [15/16] 0.0, 128
  %2333 = vxpose.xlu0.b32.end [16/16] 0.0, 128
  %v2334 = vpop.trf.xlu0
  %v2335 = vpop.trf.xlu0
  %v2336 = vpop.trf.xlu0
  %v2337 = vpop.trf.xlu0
  %v2338 = vpop.trf.xlu0
  %v2339 = vpop.trf.xlu0
  %v2340 = vpop.trf.xlu0
  %v2341 = vpop.trf.xlu0
  %v2342 = vpop.trf.xlu0
  %v2343 = vpop.trf.xlu0
  %v2344 = vpop.trf.xlu0
  %v2345 = vpop.trf.xlu0
  %v2346 = vpop.trf.xlu0
  %v2347 = vpop.trf.xlu0
  %v2348 = vpop.trf.xlu0
  %v2349 = vpop.trf.xlu0
  %2350 = vxpose.xlu0.b32.start [1/16] %v288, 128
  %2351 = vxpose.xlu0.b32.cont [2/16] %v289, 128
  %2352 = vxpose.xlu0.b32.cont [3/16] %v290, 128
  %2353 = vxpose.xlu0.b32.cont [4/16] %v291, 128
  %2354 = vxpose.xlu0.b32.cont [5/16] %v292, 128
  %2355 = vxpose.xlu0.b32.cont [6/16] 0.0, 128
  %2356 = vxpose.xlu0.b32.cont [7/16] 0.0, 128
  %2357 = vxpose.xlu0.b32.cont [8/16] 0.0, 128
  %2358 = vxpose.xlu0.b32.cont [9/16] 0.0, 128
  %2359 = vxpose.xlu0.b32.cont [10/16] 0.0, 128
  %2360 = vxpose.xlu0.b32.cont [11/16] 0.0, 128
  %2361 = vxpose.xlu0.b32.cont [12/16] 0.0, 128
  %2362 = vxpose.xlu0.b32.cont [13/16] 0.0, 128
  %2363 = vxpose.xlu0.b32.cont [14/16] 0.0, 128
  %2364 = vxpose.xlu0.b32.cont [15/16] 0.0, 128
  %2365 = vxpose.xlu0.b32.end [16/16] 0.0, 128
  %v2366 = vpop.trf.xlu0
  %v2367 = vpop.trf.xlu0
  %v2368 = vpop.trf.xlu0
  %v2369 = vpop.trf.xlu0
  %v2370 = vpop.trf.xlu0
  %v2371 = vpop.trf.xlu0
  %v2372 = vpop.trf.xlu0
  %v2373 = vpop.trf.xlu0
  %v2374 = vpop.trf.xlu0
  %v2375 = vpop.trf.xlu0
  %v2376 = vpop.trf.xlu0
  %v2377 = vpop.trf.xlu0
  %v2378 = vpop.trf.xlu0
  %v2379 = vpop.trf.xlu0
  %v2380 = vpop.trf.xlu0
  %v2381 = vpop.trf.xlu0
  %2382 = vxpose.xlu0.b32.start [1/16] %v293, 128
  %2383 = vxpose.xlu0.b32.cont [2/16] %v294, 128
  %2384 = vxpose.xlu0.b32.cont [3/16] %v295, 128
  %2385 = vxpose.xlu0.b32.cont [4/16] %v296, 128
  %2386 = vxpose.xlu0.b32.cont [5/16] %v297, 128
  %2387 = vxpose.xlu0.b32.cont [6/16] 0.0, 128
  %2388 = vxpose.xlu0.b32.cont [7/16] 0.0, 128
  %2389 = vxpose.xlu0.b32.cont [8/16] 0.0, 128
  %2390 = vxpose.xlu0.b32.cont [9/16] 0.0, 128
  %2391 = vxpose.xlu0.b32.cont [10/16] 0.0, 128
  %2392 = vxpose.xlu0.b32.cont [11/16] 0.0, 128
  %2393 = vxpose.xlu0.b32.cont [12/16] 0.0, 128
  %2394 = vxpose.xlu0.b32.cont [13/16] 0.0, 128
  %2395 = vxpose.xlu0.b32.cont [14/16] 0.0, 128
  %2396 = vxpose.xlu0.b32.cont [15/16] 0.0, 128
  %2397 = vxpose.xlu0.b32.end [16/16] 0.0, 128
  %v2398 = vpop.trf.xlu0
  %v2399 = vpop.trf.xlu0
  %v2400 = vpop.trf.xlu0
  %v2401 = vpop.trf.xlu0
  %v2402 = vpop.trf.xlu0
  %v2403 = vpop.trf.xlu0
  %v2404 = vpop.trf.xlu0
  %v2405 = vpop.trf.xlu0
  %v2406 = vpop.trf.xlu0
  %v2407 = vpop.trf.xlu0
  %v2408 = vpop.trf.xlu0
  %v2409 = vpop.trf.xlu0
  %v2410 = vpop.trf.xlu0
  %v2411 = vpop.trf.xlu0
  %v2412 = vpop.trf.xlu0
  %v2413 = vpop.trf.xlu0
  %2414 = vxpose.xlu0.b32.start [1/16] %v298, 128
  %2415 = vxpose.xlu0.b32.cont [2/16] %v299, 128
  %2416 = vxpose.xlu0.b32.cont [3/16] %v300, 128
  %2417 = vxpose.xlu0.b32.cont [4/16] %v301, 128
  %2418 = vxpose.xlu0.b32.cont [5/16] %v302, 128
  %2419 = vxpose.xlu0.b32.cont [6/16] 0.0, 128
  %2420 = vxpose.xlu0.b32.cont [7/16] 0.0, 128
  %2421 = vxpose.xlu0.b32.cont [8/16] 0.0, 128
  %2422 = vxpose.xlu0.b32.cont [9/16] 0.0, 128
  %2423 = vxpose.xlu0.b32.cont [10/16] 0.0, 128
  %2424 = vxpose.xlu0.b32.cont [11/16] 0.0, 128
  %2425 = vxpose.xlu0.b32.cont [12/16] 0.0, 128
  %2426 = vxpose.xlu0.b32.cont [13/16] 0.0, 128
  %2427 = vxpose.xlu0.b32.cont [14/16] 0.0, 128
  %2428 = vxpose.xlu0.b32.cont [15/16] 0.0, 128
  %2429 = vxpose.xlu0.b32.end [16/16] 0.0, 128
  %v2430 = vpop.trf.xlu0
  %v2431 = vpop.trf.xlu0
  %v2432 = vpop.trf.xlu0
  %v2433 = vpop.trf.xlu0
  %v2434 = vpop.trf.xlu0
  %v2435 = vpop.trf.xlu0
  %v2436 = vpop.trf.xlu0
  %v2437 = vpop.trf.xlu0
  %v2438 = vpop.trf.xlu0
  %v2439 = vpop.trf.xlu0
  %v2440 = vpop.trf.xlu0
  %v2441 = vpop.trf.xlu0
  %v2442 = vpop.trf.xlu0
  %v2443 = vpop.trf.xlu0
  %v2444 = vpop.trf.xlu0
  %v2445 = vpop.trf.xlu0
  %2446 = vxpose.xlu0.b32.start [1/16] %v303, 128
  %2447 = vxpose.xlu0.b32.cont [2/16] %v304, 128
  %2448 = vxpose.xlu0.b32.cont [3/16] %v305, 128
  %2449 = vxpose.xlu0.b32.cont [4/16] %v306, 128
  %2450 = vxpose.xlu0.b32.cont [5/16] %v307, 128
  %2451 = vxpose.xlu0.b32.cont [6/16] 0.0, 128
  %2452 = vxpose.xlu0.b32.cont [7/16] 0.0, 128
  %2453 = vxpose.xlu0.b32.cont [8/16] 0.0, 128
  %2454 = vxpose.xlu0.b32.cont [9/16] 0.0, 128
  %2455 = vxpose.xlu0.b32.cont [10/16] 0.0, 128
  %2456 = vxpose.xlu0.b32.cont [11/16] 0.0, 128
  %2457 = vxpose.xlu0.b32.cont [12/16] 0.0, 128
  %2458 = vxpose.xlu0.b32.cont [13/16] 0.0, 128
  %2459 = vxpose.xlu0.b32.cont [14/16] 0.0, 128
  %2460 = vxpose.xlu0.b32.cont [15/16] 0.0, 128
  %2461 = vxpose.xlu0.b32.end [16/16] 0.0, 128
  %v2462 = vpop.trf.xlu0
  %v2463 = vpop.trf.xlu0
  %v2464 = vpop.trf.xlu0
  %v2465 = vpop.trf.xlu0
  %v2466 = vpop.trf.xlu0
  %v2467 = vpop.trf.xlu0
  %v2468 = vpop.trf.xlu0
  %v2469 = vpop.trf.xlu0
  %v2470 = vpop.trf.xlu0
  %v2471 = vpop.trf.xlu0
  %v2472 = vpop.trf.xlu0
  %v2473 = vpop.trf.xlu0
  %v2474 = vpop.trf.xlu0
  %v2475 = vpop.trf.xlu0
  %v2476 = vpop.trf.xlu0
  %v2477 = vpop.trf.xlu0
  %2478 = vxpose.xlu0.b32.start [1/16] %v308, 128
  %2479 = vxpose.xlu0.b32.cont [2/16] %v309, 128
  %2480 = vxpose.xlu0.b32.cont [3/16] %v310, 128
  %2481 = vxpose.xlu0.b32.cont [4/16] %v311, 128
  %2482 = vxpose.xlu0.b32.cont [5/16] %v312, 128
  %2483 = vxpose.xlu0.b32.cont [6/16] 0.0, 128
  %2484 = vxpose.xlu0.b32.cont [7/16] 0.0, 128
  %2485 = vxpose.xlu0.b32.cont [8/16] 0.0, 128
  %2486 = vxpose.xlu0.b32.cont [9/16] 0.0, 128
  %2487 = vxpose.xlu0.b32.cont [10/16] 0.0, 128
  %2488 = vxpose.xlu0.b32.cont [11/16] 0.0, 128
  %2489 = vxpose.xlu0.b32.cont [12/16] 0.0, 128
  %2490 = vxpose.xlu0.b32.cont [13/16] 0.0, 128
  %2491 = vxpose.xlu0.b32.cont [14/16] 0.0, 128
  %2492 = vxpose.xlu0.b32.cont [15/16] 0.0, 128
  %2493 = vxpose.xlu0.b32.end [16/16] 0.0, 128
  %v2494 = vpop.trf.xlu0
  %v2495 = vpop.trf.xlu0
  %v2496 = vpop.trf.xlu0
  %v2497 = vpop.trf.xlu0
  %v2498 = vpop.trf.xlu0
  %v2499 = vpop.trf.xlu0
  %v2500 = vpop.trf.xlu0
  %v2501 = vpop.trf.xlu0
  %v2502 = vpop.trf.xlu0
  %v2503 = vpop.trf.xlu0
  %v2504 = vpop.trf.xlu0
  %v2505 = vpop.trf.xlu0
  %v2506 = vpop.trf.xlu0
  %v2507 = vpop.trf.xlu0
  %v2508 = vpop.trf.xlu0
  %v2509 = vpop.trf.xlu0
  %2510 = vxpose.xlu0.b32.start [1/16] %v313, 128
  %2511 = vxpose.xlu0.b32.cont [2/16] %v314, 128
  %2512 = vxpose.xlu0.b32.cont [3/16] %v315, 128
  %2513 = vxpose.xlu0.b32.cont [4/16] %v316, 128
  %2514 = vxpose.xlu0.b32.cont [5/16] %v317, 128
  %2515 = vxpose.xlu0.b32.cont [6/16] 0.0, 128
  %2516 = vxpose.xlu0.b32.cont [7/16] 0.0, 128
  %2517 = vxpose.xlu0.b32.cont [8/16] 0.0, 128
  %2518 = vxpose.xlu0.b32.cont [9/16] 0.0, 128
  %2519 = vxpose.xlu0.b32.cont [10/16] 0.0, 128
  %2520 = vxpose.xlu0.b32.cont [11/16] 0.0, 128
  %2521 = vxpose.xlu0.b32.cont [12/16] 0.0, 128
  %2522 = vxpose.xlu0.b32.cont [13/16] 0.0, 128
  %2523 = vxpose.xlu0.b32.cont [14/16] 0.0, 128
  %2524 = vxpose.xlu0.b32.cont [15/16] 0.0, 128
  %2525 = vxpose.xlu0.b32.end [16/16] 0.0, 128
  %v2526 = vpop.trf.xlu0
  %v2527 = vpop.trf.xlu0
  %v2528 = vpop.trf.xlu0
  %v2529 = vpop.trf.xlu0
  %v2530 = vpop.trf.xlu0
  %v2531 = vpop.trf.xlu0
  %v2532 = vpop.trf.xlu0
  %v2533 = vpop.trf.xlu0
  %v2534 = vpop.trf.xlu0
  %v2535 = vpop.trf.xlu0
  %v2536 = vpop.trf.xlu0
  %v2537 = vpop.trf.xlu0
  %v2538 = vpop.trf.xlu0
  %v2539 = vpop.trf.xlu0
  %v2540 = vpop.trf.xlu0
  %v2541 = vpop.trf.xlu0
  %2542 = vxpose.xlu0.b32.start [1/16] %v318, 128
  %2543 = vxpose.xlu0.b32.cont [2/16] %v319, 128
  %2544 = vxpose.xlu0.b32.cont [3/16] %v320, 128
  %2545 = vxpose.xlu0.b32.cont [4/16] %v321, 128
  %2546 = vxpose.xlu0.b32.cont [5/16] %v322, 128
  %2547 = vxpose.xlu0.b32.cont [6/16] 0.0, 128
  %2548 = vxpose.xlu0.b32.cont [7/16] 0.0, 128
  %2549 = vxpose.xlu0.b32.cont [8/16] 0.0, 128
  %2550 = vxpose.xlu0.b32.cont [9/16] 0.0, 128
  %2551 = vxpose.xlu0.b32.cont [10/16] 0.0, 128
  %2552 = vxpose.xlu0.b32.cont [11/16] 0.0, 128
  %2553 = vxpose.xlu0.b32.cont [12/16] 0.0, 128
  %2554 = vxpose.xlu0.b32.cont [13/16] 0.0, 128
  %2555 = vxpose.xlu0.b32.cont [14/16] 0.0, 128
  %2556 = vxpose.xlu0.b32.cont [15/16] 0.0, 128
  %2557 = vxpose.xlu0.b32.end [16/16] 0.0, 128
  %v2558 = vpop.trf.xlu0
  %v2559 = vpop.trf.xlu0
  %v2560 = vpop.trf.xlu0
  %v2561 = vpop.trf.xlu0
  %v2562 = vpop.trf.xlu0
  %v2563 = vpop.trf.xlu0
  %v2564 = vpop.trf.xlu0
  %v2565 = vpop.trf.xlu0
  %v2566 = vpop.trf.xlu0
  %v2567 = vpop.trf.xlu0
  %v2568 = vpop.trf.xlu0
  %v2569 = vpop.trf.xlu0
  %v2570 = vpop.trf.xlu0
  %v2571 = vpop.trf.xlu0
  %v2572 = vpop.trf.xlu0
  %v2573 = vpop.trf.xlu0
  %2574 = vxpose.xlu0.b32.start [1/16] %v323, 128
  %2575 = vxpose.xlu0.b32.cont [2/16] %v324, 128
  %2576 = vxpose.xlu0.b32.cont [3/16] %v325, 128
  %2577 = vxpose.xlu0.b32.cont [4/16] %v326, 128
  %2578 = vxpose.xlu0.b32.cont [5/16] %v327, 128
  %2579 = vxpose.xlu0.b32.cont [6/16] 0.0, 128
  %2580 = vxpose.xlu0.b32.cont [7/16] 0.0, 128
  %2581 = vxpose.xlu0.b32.cont [8/16] 0.0, 128
  %2582 = vxpose.xlu0.b32.cont [9/16] 0.0, 128
  %2583 = vxpose.xlu0.b32.cont [10/16] 0.0, 128
  %2584 = vxpose.xlu0.b32.cont [11/16] 0.0, 128
  %2585 = vxpose.xlu0.b32.cont [12/16] 0.0, 128
  %2586 = vxpose.xlu0.b32.cont [13/16] 0.0, 128
  %2587 = vxpose.xlu0.b32.cont [14/16] 0.0, 128
  %2588 = vxpose.xlu0.b32.cont [15/16] 0.0, 128
  %2589 = vxpose.xlu0.b32.end [16/16] 0.0, 128
  %v2590 = vpop.trf.xlu0
  %v2591 = vpop.trf.xlu0
  %v2592 = vpop.trf.xlu0
  %v2593 = vpop.trf.xlu0
  %v2594 = vpop.trf.xlu0
  %v2595 = vpop.trf.xlu0
  %v2596 = vpop.trf.xlu0
  %v2597 = vpop.trf.xlu0
  %v2598 = vpop.trf.xlu0
  %v2599 = vpop.trf.xlu0
  %v2600 = vpop.trf.xlu0
  %v2601 = vpop.trf.xlu0
  %v2602 = vpop.trf.xlu0
  %v2603 = vpop.trf.xlu0
  %v2604 = vpop.trf.xlu0
  %v2605 = vpop.trf.xlu0
  %2606 = vxpose.xlu0.b32.start [1/16] %v328, 128
  %2607 = vxpose.xlu0.b32.cont [2/16] %v329, 128
  %2608 = vxpose.xlu0.b32.cont [3/16] %v330, 128
  %2609 = vxpose.xlu0.b32.cont [4/16] %v331, 128
  %2610 = vxpose.xlu0.b32.cont [5/16] %v332, 128
  %2611 = vxpose.xlu0.b32.cont [6/16] 0.0, 128
  %2612 = vxpose.xlu0.b32.cont [7/16] 0.0, 128
  %2613 = vxpose.xlu0.b32.cont [8/16] 0.0, 128
  %2614 = vxpose.xlu0.b32.cont [9/16] 0.0, 128
  %2615 = vxpose.xlu0.b32.cont [10/16] 0.0, 128
  %2616 = vxpose.xlu0.b32.cont [11/16] 0.0, 128
  %2617 = vxpose.xlu0.b32.cont [12/16] 0.0, 128
  %2618 = vxpose.xlu0.b32.cont [13/16] 0.0, 128
  %2619 = vxpose.xlu0.b32.cont [14/16] 0.0, 128
  %2620 = vxpose.xlu0.b32.cont [15/16] 0.0, 128
  %2621 = vxpose.xlu0.b32.end [16/16] 0.0, 128
  %v2622 = vpop.trf.xlu0
  %v2623 = vpop.trf.xlu0
  %v2624 = vpop.trf.xlu0
  %v2625 = vpop.trf.xlu0
  %v2626 = vpop.trf.xlu0
  %v2627 = vpop.trf.xlu0
  %v2628 = vpop.trf.xlu0
  %v2629 = vpop.trf.xlu0
  %v2630 = vpop.trf.xlu0
  %v2631 = vpop.trf.xlu0
  %v2632 = vpop.trf.xlu0
  %v2633 = vpop.trf.xlu0
  %v2634 = vpop.trf.xlu0
  %v2635 = vpop.trf.xlu0
  %v2636 = vpop.trf.xlu0
  %v2637 = vpop.trf.xlu0
  %2638 = vxpose.xlu0.b32.start [1/16] %v333, 128
  %2639 = vxpose.xlu0.b32.cont [2/16] %v334, 128
  %2640 = vxpose.xlu0.b32.cont [3/16] %v335, 128
  %2641 = vxpose.xlu0.b32.cont [4/16] %v336, 128
  %2642 = vxpose.xlu0.b32.cont [5/16] %v337, 128
  %2643 = vxpose.xlu0.b32.cont [6/16] 0.0, 128
  %2644 = vxpose.xlu0.b32.cont [7/16] 0.0, 128
  %2645 = vxpose.xlu0.b32.cont [8/16] 0.0, 128
  %2646 = vxpose.xlu0.b32.cont [9/16] 0.0, 128
  %2647 = vxpose.xlu0.b32.cont [10/16] 0.0, 128
  %2648 = vxpose.xlu0.b32.cont [11/16] 0.0, 128
  %2649 = vxpose.xlu0.b32.cont [12/16] 0.0, 128
  %2650 = vxpose.xlu0.b32.cont [13/16] 0.0, 128
  %2651 = vxpose.xlu0.b32.cont [14/16] 0.0, 128
  %2652 = vxpose.xlu0.b32.cont [15/16] 0.0, 128
  %2653 = vxpose.xlu0.b32.end [16/16] 0.0, 128
  %v2654 = vpop.trf.xlu0
  %v2655 = vpop.trf.xlu0
  %v2656 = vpop.trf.xlu0
  %v2657 = vpop.trf.xlu0
  %v2658 = vpop.trf.xlu0
  %v2659 = vpop.trf.xlu0
  %v2660 = vpop.trf.xlu0
  %v2661 = vpop.trf.xlu0
  %v2662 = vpop.trf.xlu0
  %v2663 = vpop.trf.xlu0
  %v2664 = vpop.trf.xlu0
  %v2665 = vpop.trf.xlu0
  %v2666 = vpop.trf.xlu0
  %v2667 = vpop.trf.xlu0
  %v2668 = vpop.trf.xlu0
  %v2669 = vpop.trf.xlu0
  %2670 = vxpose.xlu0.b32.start [1/16] %v338, 128
  %2671 = vxpose.xlu0.b32.cont [2/16] %v339, 128
  %2672 = vxpose.xlu0.b32.cont [3/16] %v340, 128
  %2673 = vxpose.xlu0.b32.cont [4/16] %v341, 128
  %2674 = vxpose.xlu0.b32.cont [5/16] %v342, 128
  %2675 = vxpose.xlu0.b32.cont [6/16] 0.0, 128
  %2676 = vxpose.xlu0.b32.cont [7/16] 0.0, 128
  %2677 = vxpose.xlu0.b32.cont [8/16] 0.0, 128
  %2678 = vxpose.xlu0.b32.cont [9/16] 0.0, 128
  %2679 = vxpose.xlu0.b32.cont [10/16] 0.0, 128
  %2680 = vxpose.xlu0.b32.cont [11/16] 0.0, 128
  %2681 = vxpose.xlu0.b32.cont [12/16] 0.0, 128
  %2682 = vxpose.xlu0.b32.cont [13/16] 0.0, 128
  %2683 = vxpose.xlu0.b32.cont [14/16] 0.0, 128
  %2684 = vxpose.xlu0.b32.cont [15/16] 0.0, 128
  %2685 = vxpose.xlu0.b32.end [16/16] 0.0, 128
  %v2686 = vpop.trf.xlu0
  %v2687 = vpop.trf.xlu0
  %v2688 = vpop.trf.xlu0
  %v2689 = vpop.trf.xlu0
  %v2690 = vpop.trf.xlu0
  %v2691 = vpop.trf.xlu0
  %v2692 = vpop.trf.xlu0
  %v2693 = vpop.trf.xlu0
  %v2694 = vpop.trf.xlu0
  %v2695 = vpop.trf.xlu0
  %v2696 = vpop.trf.xlu0
  %v2697 = vpop.trf.xlu0
  %v2698 = vpop.trf.xlu0
  %v2699 = vpop.trf.xlu0
  %v2700 = vpop.trf.xlu0
  %v2701 = vpop.trf.xlu0
  %2702 = vxpose.xlu0.b32.start [1/16] %v343, 128
  %2703 = vxpose.xlu0.b32.cont [2/16] %v344, 128
  %2704 = vxpose.xlu0.b32.cont [3/16] %v345, 128
  %2705 = vxpose.xlu0.b32.cont [4/16] %v346, 128
  %2706 = vxpose.xlu0.b32.cont [5/16] %v347, 128
  %2707 = vxpose.xlu0.b32.cont [6/16] 0.0, 128
  %2708 = vxpose.xlu0.b32.cont [7/16] 0.0, 128
  %2709 = vxpose.xlu0.b32.cont [8/16] 0.0, 128
  %2710 = vxpose.xlu0.b32.cont [9/16] 0.0, 128
  %2711 = vxpose.xlu0.b32.cont [10/16] 0.0, 128
  %2712 = vxpose.xlu0.b32.cont [11/16] 0.0, 128
  %2713 = vxpose.xlu0.b32.cont [12/16] 0.0, 128
  %2714 = vxpose.xlu0.b32.cont [13/16] 0.0, 128
  %2715 = vxpose.xlu0.b32.cont [14/16] 0.0, 128
  %2716 = vxpose.xlu0.b32.cont [15/16] 0.0, 128
  %2717 = vxpose.xlu0.b32.end [16/16] 0.0, 128
  %v2718 = vpop.trf.xlu0
  %v2719 = vpop.trf.xlu0
  %v2720 = vpop.trf.xlu0
  %v2721 = vpop.trf.xlu0
  %v2722 = vpop.trf.xlu0
  %v2723 = vpop.trf.xlu0
  %v2724 = vpop.trf.xlu0
  %v2725 = vpop.trf.xlu0
  %v2726 = vpop.trf.xlu0
  %v2727 = vpop.trf.xlu0
  %v2728 = vpop.trf.xlu0
  %v2729 = vpop.trf.xlu0
  %v2730 = vpop.trf.xlu0
  %v2731 = vpop.trf.xlu0
  %v2732 = vpop.trf.xlu0
  %v2733 = vpop.trf.xlu0
  %2734 = vxpose.xlu0.b32.start [1/16] %v348, 128
  %2735 = vxpose.xlu0.b32.cont [2/16] %v349, 128
  %2736 = vxpose.xlu0.b32.cont [3/16] %v350, 128
  %2737 = vxpose.xlu0.b32.cont [4/16] %v351, 128
  %2738 = vxpose.xlu0.b32.cont [5/16] %v352, 128
  %2739 = vxpose.xlu0.b32.cont [6/16] 0.0, 128
  %2740 = vxpose.xlu0.b32.cont [7/16] 0.0, 128
  %2741 = vxpose.xlu0.b32.cont [8/16] 0.0, 128
  %2742 = vxpose.xlu0.b32.cont [9/16] 0.0, 128
  %2743 = vxpose.xlu0.b32.cont [10/16] 0.0, 128
  %2744 = vxpose.xlu0.b32.cont [11/16] 0.0, 128
  %2745 = vxpose.xlu0.b32.cont [12/16] 0.0, 128
  %2746 = vxpose.xlu0.b32.cont [13/16] 0.0, 128
  %2747 = vxpose.xlu0.b32.cont [14/16] 0.0, 128
  %2748 = vxpose.xlu0.b32.cont [15/16] 0.0, 128
  %2749 = vxpose.xlu0.b32.end [16/16] 0.0, 128
  %v2750 = vpop.trf.xlu0
  %v2751 = vpop.trf.xlu0
  %v2752 = vpop.trf.xlu0
  %v2753 = vpop.trf.xlu0
  %v2754 = vpop.trf.xlu0
  %v2755 = vpop.trf.xlu0
  %v2756 = vpop.trf.xlu0
  %v2757 = vpop.trf.xlu0
  %v2758 = vpop.trf.xlu0
  %v2759 = vpop.trf.xlu0
  %v2760 = vpop.trf.xlu0
  %v2761 = vpop.trf.xlu0
  %v2762 = vpop.trf.xlu0
  %v2763 = vpop.trf.xlu0
  %v2764 = vpop.trf.xlu0
  %v2765 = vpop.trf.xlu0
  %2766 = vxpose.xlu0.b32.start [1/16] %v353, 128
  %2767 = vxpose.xlu0.b32.cont [2/16] %v354, 128
  %2768 = vxpose.xlu0.b32.cont [3/16] %v355, 128
  %2769 = vxpose.xlu0.b32.cont [4/16] %v356, 128
  %2770 = vxpose.xlu0.b32.cont [5/16] %v357, 128
  %2771 = vxpose.xlu0.b32.cont [6/16] 0.0, 128
  %2772 = vxpose.xlu0.b32.cont [7/16] 0.0, 128
  %2773 = vxpose.xlu0.b32.cont [8/16] 0.0, 128
  %2774 = vxpose.xlu0.b32.cont [9/16] 0.0, 128
  %2775 = vxpose.xlu0.b32.cont [10/16] 0.0, 128
  %2776 = vxpose.xlu0.b32.cont [11/16] 0.0, 128
  %2777 = vxpose.xlu0.b32.cont [12/16] 0.0, 128
  %2778 = vxpose.xlu0.b32.cont [13/16] 0.0, 128
  %2779 = vxpose.xlu0.b32.cont [14/16] 0.0, 128
  %2780 = vxpose.xlu0.b32.cont [15/16] 0.0, 128
  %2781 = vxpose.xlu0.b32.end [16/16] 0.0, 128
  %v2782 = vpop.trf.xlu0
  %v2783 = vpop.trf.xlu0
  %v2784 = vpop.trf.xlu0
  %v2785 = vpop.trf.xlu0
  %v2786 = vpop.trf.xlu0
  %v2787 = vpop.trf.xlu0
  %v2788 = vpop.trf.xlu0
  %v2789 = vpop.trf.xlu0
  %v2790 = vpop.trf.xlu0
  %v2791 = vpop.trf.xlu0
  %v2792 = vpop.trf.xlu0
  %v2793 = vpop.trf.xlu0
  %v2794 = vpop.trf.xlu0
  %v2795 = vpop.trf.xlu0
  %v2796 = vpop.trf.xlu0
  %v2797 = vpop.trf.xlu0
  %2798 = vxpose.xlu0.b32.start [1/16] %v358, 128
  %2799 = vxpose.xlu0.b32.cont [2/16] %v359, 128
  %2800 = vxpose.xlu0.b32.cont [3/16] %v360, 128
  %2801 = vxpose.xlu0.b32.cont [4/16] %v361, 128
  %2802 = vxpose.xlu0.b32.cont [5/16] %v362, 128
  %2803 = vxpose.xlu0.b32.cont [6/16] 0.0, 128
  %2804 = vxpose.xlu0.b32.cont [7/16] 0.0, 128
  %2805 = vxpose.xlu0.b32.cont [8/16] 0.0, 128
  %2806 = vxpose.xlu0.b32.cont [9/16] 0.0, 128
  %2807 = vxpose.xlu0.b32.cont [10/16] 0.0, 128
  %2808 = vxpose.xlu0.b32.cont [11/16] 0.0, 128
  %2809 = vxpose.xlu0.b32.cont [12/16] 0.0, 128
  %2810 = vxpose.xlu0.b32.cont [13/16] 0.0, 128
  %2811 = vxpose.xlu0.b32.cont [14/16] 0.0, 128
  %2812 = vxpose.xlu0.b32.cont [15/16] 0.0, 128
  %2813 = vxpose.xlu0.b32.end [16/16] 0.0, 128
  %v2814 = vpop.trf.xlu0
  %v2815 = vpop.trf.xlu0
  %v2816 = vpop.trf.xlu0
  %v2817 = vpop.trf.xlu0
  %v2818 = vpop.trf.xlu0
  %v2819 = vpop.trf.xlu0
  %v2820 = vpop.trf.xlu0
  %v2821 = vpop.trf.xlu0
  %v2822 = vpop.trf.xlu0
  %v2823 = vpop.trf.xlu0
  %v2824 = vpop.trf.xlu0
  %v2825 = vpop.trf.xlu0
  %v2826 = vpop.trf.xlu0
  %v2827 = vpop.trf.xlu0
  %v2828 = vpop.trf.xlu0
  %v2829 = vpop.trf.xlu0
  %2830 = vxpose.xlu0.b32.start [1/16] %v363, 128
  %2831 = vxpose.xlu0.b32.cont [2/16] %v364, 128
  %2832 = vxpose.xlu0.b32.cont [3/16] %v365, 128
  %2833 = vxpose.xlu0.b32.cont [4/16] %v366, 128
  %2834 = vxpose.xlu0.b32.cont [5/16] %v367, 128
  %2835 = vxpose.xlu0.b32.cont [6/16] 0.0, 128
  %2836 = vxpose.xlu0.b32.cont [7/16] 0.0, 128
  %2837 = vxpose.xlu0.b32.cont [8/16] 0.0, 128
  %2838 = vxpose.xlu0.b32.cont [9/16] 0.0, 128
  %2839 = vxpose.xlu0.b32.cont [10/16] 0.0, 128
  %2840 = vxpose.xlu0.b32.cont [11/16] 0.0, 128
  %2841 = vxpose.xlu0.b32.cont [12/16] 0.0, 128
  %2842 = vxpose.xlu0.b32.cont [13/16] 0.0, 128
  %2843 = vxpose.xlu0.b32.cont [14/16] 0.0, 128
  %2844 = vxpose.xlu0.b32.cont [15/16] 0.0, 128
  %2845 = vxpose.xlu0.b32.end [16/16] 0.0, 128
  %v2846 = vpop.trf.xlu0
  %v2847 = vpop.trf.xlu0
  %v2848 = vpop.trf.xlu0
  %v2849 = vpop.trf.xlu0
  %v2850 = vpop.trf.xlu0
  %v2851 = vpop.trf.xlu0
  %v2852 = vpop.trf.xlu0
  %v2853 = vpop.trf.xlu0
  %v2854 = vpop.trf.xlu0
  %v2855 = vpop.trf.xlu0
  %v2856 = vpop.trf.xlu0
  %v2857 = vpop.trf.xlu0
  %v2858 = vpop.trf.xlu0
  %v2859 = vpop.trf.xlu0
  %v2860 = vpop.trf.xlu0
  %v2861 = vpop.trf.xlu0
  %2862 = vxpose.xlu0.b32.start [1/16] %v368, 128
  %2863 = vxpose.xlu0.b32.cont [2/16] %v369, 128
  %2864 = vxpose.xlu0.b32.cont [3/16] %v370, 128
  %2865 = vxpose.xlu0.b32.cont [4/16] %v371, 128
  %2866 = vxpose.xlu0.b32.cont [5/16] %v372, 128
  %2867 = vxpose.xlu0.b32.cont [6/16] 0.0, 128
  %2868 = vxpose.xlu0.b32.cont [7/16] 0.0, 128
  %2869 = vxpose.xlu0.b32.cont [8/16] 0.0, 128
  %2870 = vxpose.xlu0.b32.cont [9/16] 0.0, 128
  %2871 = vxpose.xlu0.b32.cont [10/16] 0.0, 128
  %2872 = vxpose.xlu0.b32.cont [11/16] 0.0, 128
  %2873 = vxpose.xlu0.b32.cont [12/16] 0.0, 128
  %2874 = vxpose.xlu0.b32.cont [13/16] 0.0, 128
  %2875 = vxpose.xlu0.b32.cont [14/16] 0.0, 128
  %2876 = vxpose.xlu0.b32.cont [15/16] 0.0, 128
  %2877 = vxpose.xlu0.b32.end [16/16] 0.0, 128
  %v2878 = vpop.trf.xlu0
  %v2879 = vpop.trf.xlu0
  %v2880 = vpop.trf.xlu0
  %v2881 = vpop.trf.xlu0
  %v2882 = vpop.trf.xlu0
  %v2883 = vpop.trf.xlu0
  %v2884 = vpop.trf.xlu0
  %v2885 = vpop.trf.xlu0
  %v2886 = vpop.trf.xlu0
  %v2887 = vpop.trf.xlu0
  %v2888 = vpop.trf.xlu0
  %v2889 = vpop.trf.xlu0
  %v2890 = vpop.trf.xlu0
  %v2891 = vpop.trf.xlu0
  %v2892 = vpop.trf.xlu0
  %v2893 = vpop.trf.xlu0
  %2894 = vxpose.xlu0.b32.start [1/16] %v373, 128
  %2895 = vxpose.xlu0.b32.cont [2/16] %v374, 128
  %2896 = vxpose.xlu0.b32.cont [3/16] %v375, 128
  %2897 = vxpose.xlu0.b32.cont [4/16] %v376, 128
  %2898 = vxpose.xlu0.b32.cont [5/16] %v377, 128
  %2899 = vxpose.xlu0.b32.cont [6/16] 0.0, 128
  %2900 = vxpose.xlu0.b32.cont [7/16] 0.0, 128
  %2901 = vxpose.xlu0.b32.cont [8/16] 0.0, 128
  %2902 = vxpose.xlu0.b32.cont [9/16] 0.0, 128
  %2903 = vxpose.xlu0.b32.cont [10/16] 0.0, 128
  %2904 = vxpose.xlu0.b32.cont [11/16] 0.0, 128
  %2905 = vxpose.xlu0.b32.cont [12/16] 0.0, 128
  %2906 = vxpose.xlu0.b32.cont [13/16] 0.0, 128
  %2907 = vxpose.xlu0.b32.cont [14/16] 0.0, 128
  %2908 = vxpose.xlu0.b32.cont [15/16] 0.0, 128
  %2909 = vxpose.xlu0.b32.end [16/16] 0.0, 128
  %v2910 = vpop.trf.xlu0
  %v2911 = vpop.trf.xlu0
  %v2912 = vpop.trf.xlu0
  %v2913 = vpop.trf.xlu0
  %v2914 = vpop.trf.xlu0
  %v2915 = vpop.trf.xlu0
  %v2916 = vpop.trf.xlu0
  %v2917 = vpop.trf.xlu0
  %v2918 = vpop.trf.xlu0
  %v2919 = vpop.trf.xlu0
  %v2920 = vpop.trf.xlu0
  %v2921 = vpop.trf.xlu0
  %v2922 = vpop.trf.xlu0
  %v2923 = vpop.trf.xlu0
  %v2924 = vpop.trf.xlu0
  %v2925 = vpop.trf.xlu0
  %2926 = vxpose.xlu0.b32.start [1/16] %v378, 128
  %2927 = vxpose.xlu0.b32.cont [2/16] %v379, 128
  %2928 = vxpose.xlu0.b32.cont [3/16] %v380, 128
  %2929 = vxpose.xlu0.b32.cont [4/16] %v381, 128
  %2930 = vxpose.xlu0.b32.cont [5/16] %v382, 128
  %2931 = vxpose.xlu0.b32.cont [6/16] 0.0, 128
  %2932 = vxpose.xlu0.b32.cont [7/16] 0.0, 128
  %2933 = vxpose.xlu0.b32.cont [8/16] 0.0, 128
  %2934 = vxpose.xlu0.b32.cont [9/16] 0.0, 128
  %2935 = vxpose.xlu0.b32.cont [10/16] 0.0, 128
  %2936 = vxpose.xlu0.b32.cont [11/16] 0.0, 128
  %2937 = vxpose.xlu0.b32.cont [12/16] 0.0, 128
  %2938 = vxpose.xlu0.b32.cont [13/16] 0.0, 128
  %2939 = vxpose.xlu0.b32.cont [14/16] 0.0, 128
  %2940 = vxpose.xlu0.b32.cont [15/16] 0.0, 128
  %2941 = vxpose.xlu0.b32.end [16/16] 0.0, 128
  %v2942 = vpop.trf.xlu0
  %v2943 = vpop.trf.xlu0
  %v2944 = vpop.trf.xlu0
  %v2945 = vpop.trf.xlu0
  %v2946 = vpop.trf.xlu0
  %v2947 = vpop.trf.xlu0
  %v2948 = vpop.trf.xlu0
  %v2949 = vpop.trf.xlu0
  %v2950 = vpop.trf.xlu0
  %v2951 = vpop.trf.xlu0
  %v2952 = vpop.trf.xlu0
  %v2953 = vpop.trf.xlu0
  %v2954 = vpop.trf.xlu0
  %v2955 = vpop.trf.xlu0
  %v2956 = vpop.trf.xlu0
  %v2957 = vpop.trf.xlu0
  %2958 = vxpose.xlu0.b32.start [1/16] %v383, 128
  %2959 = vxpose.xlu0.b32.cont [2/16] %v384, 128
  %2960 = vxpose.xlu0.b32.cont [3/16] %v385, 128
  %2961 = vxpose.xlu0.b32.cont [4/16] %v386, 128
  %2962 = vxpose.xlu0.b32.cont [5/16] %v387, 128
  %2963 = vxpose.xlu0.b32.cont [6/16] 0.0, 128
  %2964 = vxpose.xlu0.b32.cont [7/16] 0.0, 128
  %2965 = vxpose.xlu0.b32.cont [8/16] 0.0, 128
  %2966 = vxpose.xlu0.b32.cont [9/16] 0.0, 128
  %2967 = vxpose.xlu0.b32.cont [10/16] 0.0, 128
  %2968 = vxpose.xlu0.b32.cont [11/16] 0.0, 128
  %2969 = vxpose.xlu0.b32.cont [12/16] 0.0, 128
  %2970 = vxpose.xlu0.b32.cont [13/16] 0.0, 128
  %2971 = vxpose.xlu0.b32.cont [14/16] 0.0, 128
  %2972 = vxpose.xlu0.b32.cont [15/16] 0.0, 128
  %2973 = vxpose.xlu0.b32.end [16/16] 0.0, 128
  %v2974 = vpop.trf.xlu0
  %v2975 = vpop.trf.xlu0
  %v2976 = vpop.trf.xlu0
  %v2977 = vpop.trf.xlu0
  %v2978 = vpop.trf.xlu0
  %v2979 = vpop.trf.xlu0
  %v2980 = vpop.trf.xlu0
  %v2981 = vpop.trf.xlu0
  %v2982 = vpop.trf.xlu0
  %v2983 = vpop.trf.xlu0
  %v2984 = vpop.trf.xlu0
  %v2985 = vpop.trf.xlu0
  %v2986 = vpop.trf.xlu0
  %v2987 = vpop.trf.xlu0
  %v2988 = vpop.trf.xlu0
  %v2989 = vpop.trf.xlu0
  %2990 = vxpose.xlu0.b32.start [1/16] %v388, 128
  %2991 = vxpose.xlu0.b32.cont [2/16] %v389, 128
  %2992 = vxpose.xlu0.b32.cont [3/16] %v390, 128
  %2993 = vxpose.xlu0.b32.cont [4/16] %v391, 128
  %2994 = vxpose.xlu0.b32.cont [5/16] %v392, 128
  %2995 = vxpose.xlu0.b32.cont [6/16] 0.0, 128
  %2996 = vxpose.xlu0.b32.cont [7/16] 0.0, 128
  %2997 = vxpose.xlu0.b32.cont [8/16] 0.0, 128
  %2998 = vxpose.xlu0.b32.cont [9/16] 0.0, 128
  %2999 = vxpose.xlu0.b32.cont [10/16] 0.0, 128
  %3000 = vxpose.xlu0.b32.cont [11/16] 0.0, 128
  %3001 = vxpose.xlu0.b32.cont [12/16] 0.0, 128
  %3002 = vxpose.xlu0.b32.cont [13/16] 0.0, 128
  %3003 = vxpose.xlu0.b32.cont [14/16] 0.0, 128
  %3004 = vxpose.xlu0.b32.cont [15/16] 0.0, 128
  %3005 = vxpose.xlu0.b32.end [16/16] 0.0, 128
  %v3006 = vpop.trf.xlu0
  %v3007 = vpop.trf.xlu0
  %v3008 = vpop.trf.xlu0
  %v3009 = vpop.trf.xlu0
  %v3010 = vpop.trf.xlu0
  %v3011 = vpop.trf.xlu0
  %v3012 = vpop.trf.xlu0
  %v3013 = vpop.trf.xlu0
  %v3014 = vpop.trf.xlu0
  %v3015 = vpop.trf.xlu0
  %v3016 = vpop.trf.xlu0
  %v3017 = vpop.trf.xlu0
  %v3018 = vpop.trf.xlu0
  %v3019 = vpop.trf.xlu0
  %v3020 = vpop.trf.xlu0
  %v3021 = vpop.trf.xlu0
  %3022 = vxpose.xlu0.b32.start [1/16] %v393, 128
  %3023 = vxpose.xlu0.b32.cont [2/16] %v394, 128
  %3024 = vxpose.xlu0.b32.cont [3/16] %v395, 128
  %3025 = vxpose.xlu0.b32.cont [4/16] %v396, 128
  %3026 = vxpose.xlu0.b32.cont [5/16] %v397, 128
  %3027 = vxpose.xlu0.b32.cont [6/16] 0.0, 128
  %3028 = vxpose.xlu0.b32.cont [7/16] 0.0, 128
  %3029 = vxpose.xlu0.b32.cont [8/16] 0.0, 128
  %3030 = vxpose.xlu0.b32.cont [9/16] 0.0, 128
  %3031 = vxpose.xlu0.b32.cont [10/16] 0.0, 128
  %3032 = vxpose.xlu0.b32.cont [11/16] 0.0, 128
  %3033 = vxpose.xlu0.b32.cont [12/16] 0.0, 128
  %3034 = vxpose.xlu0.b32.cont [13/16] 0.0, 128
  %3035 = vxpose.xlu0.b32.cont [14/16] 0.0, 128
  %3036 = vxpose.xlu0.b32.cont [15/16] 0.0, 128
  %3037 = vxpose.xlu0.b32.end [16/16] 0.0, 128
  %v3038 = vpop.trf.xlu0
  %v3039 = vpop.trf.xlu0
  %v3040 = vpop.trf.xlu0
  %v3041 = vpop.trf.xlu0
  %v3042 = vpop.trf.xlu0
  %v3043 = vpop.trf.xlu0
  %v3044 = vpop.trf.xlu0
  %v3045 = vpop.trf.xlu0
  %v3046 = vpop.trf.xlu0
  %v3047 = vpop.trf.xlu0
  %v3048 = vpop.trf.xlu0
  %v3049 = vpop.trf.xlu0
  %v3050 = vpop.trf.xlu0
  %v3051 = vpop.trf.xlu0
  %v3052 = vpop.trf.xlu0
  %v3053 = vpop.trf.xlu0
  %3054 = vxpose.xlu0.b32.start [1/16] %v398, 128
  %3055 = vxpose.xlu0.b32.cont [2/16] %v399, 128
  %3056 = vxpose.xlu0.b32.cont [3/16] %v400, 128
  %3057 = vxpose.xlu0.b32.cont [4/16] %v401, 128
  %3058 = vxpose.xlu0.b32.cont [5/16] %v402, 128
  %3059 = vxpose.xlu0.b32.cont [6/16] 0.0, 128
  %3060 = vxpose.xlu0.b32.cont [7/16] 0.0, 128
  %3061 = vxpose.xlu0.b32.cont [8/16] 0.0, 128
  %3062 = vxpose.xlu0.b32.cont [9/16] 0.0, 128
  %3063 = vxpose.xlu0.b32.cont [10/16] 0.0, 128
  %3064 = vxpose.xlu0.b32.cont [11/16] 0.0, 128
  %3065 = vxpose.xlu0.b32.cont [12/16] 0.0, 128
  %3066 = vxpose.xlu0.b32.cont [13/16] 0.0, 128
  %3067 = vxpose.xlu0.b32.cont [14/16] 0.0, 128
  %3068 = vxpose.xlu0.b32.cont [15/16] 0.0, 128
  %3069 = vxpose.xlu0.b32.end [16/16] 0.0, 128
  %v3070 = vpop.trf.xlu0
  %v3071 = vpop.trf.xlu0
  %v3072 = vpop.trf.xlu0
  %v3073 = vpop.trf.xlu0
  %v3074 = vpop.trf.xlu0
  %v3075 = vpop.trf.xlu0
  %v3076 = vpop.trf.xlu0
  %v3077 = vpop.trf.xlu0
  %v3078 = vpop.trf.xlu0
  %v3079 = vpop.trf.xlu0
  %v3080 = vpop.trf.xlu0
  %v3081 = vpop.trf.xlu0
  %v3082 = vpop.trf.xlu0
  %v3083 = vpop.trf.xlu0
  %v3084 = vpop.trf.xlu0
  %v3085 = vpop.trf.xlu0
  %3086 = vxpose.xlu0.b32.start [1/16] %v403, 128
  %3087 = vxpose.xlu0.b32.cont [2/16] %v404, 128
  %3088 = vxpose.xlu0.b32.cont [3/16] %v405, 128
  %3089 = vxpose.xlu0.b32.cont [4/16] %v406, 128
  %3090 = vxpose.xlu0.b32.cont [5/16] %v407, 128
  %3091 = vxpose.xlu0.b32.cont [6/16] 0.0, 128
  %3092 = vxpose.xlu0.b32.cont [7/16] 0.0, 128
  %3093 = vxpose.xlu0.b32.cont [8/16] 0.0, 128
  %3094 = vxpose.xlu0.b32.cont [9/16] 0.0, 128
  %3095 = vxpose.xlu0.b32.cont [10/16] 0.0, 128
  %3096 = vxpose.xlu0.b32.cont [11/16] 0.0, 128
  %3097 = vxpose.xlu0.b32.cont [12/16] 0.0, 128
  %3098 = vxpose.xlu0.b32.cont [13/16] 0.0, 128
  %3099 = vxpose.xlu0.b32.cont [14/16] 0.0, 128
  %3100 = vxpose.xlu0.b32.cont [15/16] 0.0, 128
  %3101 = vxpose.xlu0.b32.end [16/16] 0.0, 128
  %v3102 = vpop.trf.xlu0
  %v3103 = vpop.trf.xlu0
  %v3104 = vpop.trf.xlu0
  %v3105 = vpop.trf.xlu0
  %v3106 = vpop.trf.xlu0
  %v3107 = vpop.trf.xlu0
  %v3108 = vpop.trf.xlu0
  %v3109 = vpop.trf.xlu0
  %v3110 = vpop.trf.xlu0
  %v3111 = vpop.trf.xlu0
  %v3112 = vpop.trf.xlu0
  %v3113 = vpop.trf.xlu0
  %v3114 = vpop.trf.xlu0
  %v3115 = vpop.trf.xlu0
  %v3116 = vpop.trf.xlu0
  %v3117 = vpop.trf.xlu0
  %3118 = vxpose.xlu0.b32.start [1/16] %v408, 128
  %3119 = vxpose.xlu0.b32.cont [2/16] %v409, 128
  %3120 = vxpose.xlu0.b32.cont [3/16] %v410, 128
  %3121 = vxpose.xlu0.b32.cont [4/16] %v411, 128
  %3122 = vxpose.xlu0.b32.cont [5/16] %v412, 128
  %3123 = vxpose.xlu0.b32.cont [6/16] 0.0, 128
  %3124 = vxpose.xlu0.b32.cont [7/16] 0.0, 128
  %3125 = vxpose.xlu0.b32.cont [8/16] 0.0, 128
  %3126 = vxpose.xlu0.b32.cont [9/16] 0.0, 128
  %3127 = vxpose.xlu0.b32.cont [10/16] 0.0, 128
  %3128 = vxpose.xlu0.b32.cont [11/16] 0.0, 128
  %3129 = vxpose.xlu0.b32.cont [12/16] 0.0, 128
  %3130 = vxpose.xlu0.b32.cont [13/16] 0.0, 128
  %3131 = vxpose.xlu0.b32.cont [14/16] 0.0, 128
  %3132 = vxpose.xlu0.b32.cont [15/16] 0.0, 128
  %3133 = vxpose.xlu0.b32.end [16/16] 0.0, 128
  %v3134 = vpop.trf.xlu0
  %v3135 = vpop.trf.xlu0
  %v3136 = vpop.trf.xlu0
  %v3137 = vpop.trf.xlu0
  %v3138 = vpop.trf.xlu0
  %v3139 = vpop.trf.xlu0
  %v3140 = vpop.trf.xlu0
  %v3141 = vpop.trf.xlu0
  %v3142 = vpop.trf.xlu0
  %v3143 = vpop.trf.xlu0
  %v3144 = vpop.trf.xlu0
  %v3145 = vpop.trf.xlu0
  %v3146 = vpop.trf.xlu0
  %v3147 = vpop.trf.xlu0
  %v3148 = vpop.trf.xlu0
  %v3149 = vpop.trf.xlu0
  %3150 = vxpose.xlu0.b32.start [1/16] %v413, 128
  %3151 = vxpose.xlu0.b32.cont [2/16] %v414, 128
  %3152 = vxpose.xlu0.b32.cont [3/16] %v415, 128
  %3153 = vxpose.xlu0.b32.cont [4/16] %v416, 128
  %3154 = vxpose.xlu0.b32.cont [5/16] %v417, 128
  %3155 = vxpose.xlu0.b32.cont [6/16] 0.0, 128
  %3156 = vxpose.xlu0.b32.cont [7/16] 0.0, 128
  %3157 = vxpose.xlu0.b32.cont [8/16] 0.0, 128
  %3158 = vxpose.xlu0.b32.cont [9/16] 0.0, 128
  %3159 = vxpose.xlu0.b32.cont [10/16] 0.0, 128
  %3160 = vxpose.xlu0.b32.cont [11/16] 0.0, 128
  %3161 = vxpose.xlu0.b32.cont [12/16] 0.0, 128
  %3162 = vxpose.xlu0.b32.cont [13/16] 0.0, 128
  %3163 = vxpose.xlu0.b32.cont [14/16] 0.0, 128
  %3164 = vxpose.xlu0.b32.cont [15/16] 0.0, 128
  %3165 = vxpose.xlu0.b32.end [16/16] 0.0, 128
  %v3166 = vpop.trf.xlu0
  %v3167 = vpop.trf.xlu0
  %v3168 = vpop.trf.xlu0
  %v3169 = vpop.trf.xlu0
  %v3170 = vpop.trf.xlu0
  %v3171 = vpop.trf.xlu0
  %v3172 = vpop.trf.xlu0
  %v3173 = vpop.trf.xlu0
  %v3174 = vpop.trf.xlu0
  %v3175 = vpop.trf.xlu0
  %v3176 = vpop.trf.xlu0
  %v3177 = vpop.trf.xlu0
  %v3178 = vpop.trf.xlu0
  %v3179 = vpop.trf.xlu0
  %v3180 = vpop.trf.xlu0
  %v3181 = vpop.trf.xlu0
  %3182 = vxpose.xlu0.b32.start [1/16] %v418, 128
  %3183 = vxpose.xlu0.b32.cont [2/16] %v419, 128
  %3184 = vxpose.xlu0.b32.cont [3/16] %v420, 128
  %3185 = vxpose.xlu0.b32.cont [4/16] %v421, 128
  %3186 = vxpose.xlu0.b32.cont [5/16] %v422, 128
  %3187 = vxpose.xlu0.b32.cont [6/16] 0.0, 128
  %3188 = vxpose.xlu0.b32.cont [7/16] 0.0, 128
  %3189 = vxpose.xlu0.b32.cont [8/16] 0.0, 128
  %3190 = vxpose.xlu0.b32.cont [9/16] 0.0, 128
  %3191 = vxpose.xlu0.b32.cont [10/16] 0.0, 128
  %3192 = vxpose.xlu0.b32.cont [11/16] 0.0, 128
  %3193 = vxpose.xlu0.b32.cont [12/16] 0.0, 128
  %3194 = vxpose.xlu0.b32.cont [13/16] 0.0, 128
  %3195 = vxpose.xlu0.b32.cont [14/16] 0.0, 128
  %3196 = vxpose.xlu0.b32.cont [15/16] 0.0, 128
  %3197 = vxpose.xlu0.b32.end [16/16] 0.0, 128
  %v3198 = vpop.trf.xlu0
  %v3199 = vpop.trf.xlu0
  %v3200 = vpop.trf.xlu0
  %v3201 = vpop.trf.xlu0
  %v3202 = vpop.trf.xlu0
  %v3203 = vpop.trf.xlu0
  %v3204 = vpop.trf.xlu0
  %v3205 = vpop.trf.xlu0
  %v3206 = vpop.trf.xlu0
  %v3207 = vpop.trf.xlu0
  %v3208 = vpop.trf.xlu0
  %v3209 = vpop.trf.xlu0
  %v3210 = vpop.trf.xlu0
  %v3211 = vpop.trf.xlu0
  %v3212 = vpop.trf.xlu0
  %v3213 = vpop.trf.xlu0
  %3214 = vxpose.xlu0.b32.start [1/16] %v423, 128
  %3215 = vxpose.xlu0.b32.cont [2/16] %v424, 128
  %3216 = vxpose.xlu0.b32.cont [3/16] %v425, 128
  %3217 = vxpose.xlu0.b32.cont [4/16] %v426, 128
  %3218 = vxpose.xlu0.b32.cont [5/16] %v427, 128
  %3219 = vxpose.xlu0.b32.cont [6/16] 0.0, 128
  %3220 = vxpose.xlu0.b32.cont [7/16] 0.0, 128
  %3221 = vxpose.xlu0.b32.cont [8/16] 0.0, 128
  %3222 = vxpose.xlu0.b32.cont [9/16] 0.0, 128
  %3223 = vxpose.xlu0.b32.cont [10/16] 0.0, 128
  %3224 = vxpose.xlu0.b32.cont [11/16] 0.0, 128
  %3225 = vxpose.xlu0.b32.cont [12/16] 0.0, 128
  %3226 = vxpose.xlu0.b32.cont [13/16] 0.0, 128
  %3227 = vxpose.xlu0.b32.cont [14/16] 0.0, 128
  %3228 = vxpose.xlu0.b32.cont [15/16] 0.0, 128
  %3229 = vxpose.xlu0.b32.end [16/16] 0.0, 128
  %v3230 = vpop.trf.xlu0
  %v3231 = vpop.trf.xlu0
  %v3232 = vpop.trf.xlu0
  %v3233 = vpop.trf.xlu0
  %v3234 = vpop.trf.xlu0
  %v3235 = vpop.trf.xlu0
  %v3236 = vpop.trf.xlu0
  %v3237 = vpop.trf.xlu0
  %v3238 = vpop.trf.xlu0
  %v3239 = vpop.trf.xlu0
  %v3240 = vpop.trf.xlu0
  %v3241 = vpop.trf.xlu0
  %v3242 = vpop.trf.xlu0
  %v3243 = vpop.trf.xlu0
  %v3244 = vpop.trf.xlu0
  %v3245 = vpop.trf.xlu0
  %3246 = vxpose.xlu0.b32.start [1/16] %v428, 128
  %3247 = vxpose.xlu0.b32.cont [2/16] %v429, 128
  %3248 = vxpose.xlu0.b32.cont [3/16] %v430, 128
  %3249 = vxpose.xlu0.b32.cont [4/16] %v431, 128
  %3250 = vxpose.xlu0.b32.cont [5/16] %v432, 128
  %3251 = vxpose.xlu0.b32.cont [6/16] 0.0, 128
  %3252 = vxpose.xlu0.b32.cont [7/16] 0.0, 128
  %3253 = vxpose.xlu0.b32.cont [8/16] 0.0, 128
  %3254 = vxpose.xlu0.b32.cont [9/16] 0.0, 128
  %3255 = vxpose.xlu0.b32.cont [10/16] 0.0, 128
  %3256 = vxpose.xlu0.b32.cont [11/16] 0.0, 128
  %3257 = vxpose.xlu0.b32.cont [12/16] 0.0, 128
  %3258 = vxpose.xlu0.b32.cont [13/16] 0.0, 128
  %3259 = vxpose.xlu0.b32.cont [14/16] 0.0, 128
  %3260 = vxpose.xlu0.b32.cont [15/16] 0.0, 128
  %3261 = vxpose.xlu0.b32.end [16/16] 0.0, 128
  %v3262 = vpop.trf.xlu0
  %v3263 = vpop.trf.xlu0
  %v3264 = vpop.trf.xlu0
  %v3265 = vpop.trf.xlu0
  %v3266 = vpop.trf.xlu0
  %v3267 = vpop.trf.xlu0
  %v3268 = vpop.trf.xlu0
  %v3269 = vpop.trf.xlu0
  %v3270 = vpop.trf.xlu0
  %v3271 = vpop.trf.xlu0
  %v3272 = vpop.trf.xlu0
  %v3273 = vpop.trf.xlu0
  %v3274 = vpop.trf.xlu0
  %v3275 = vpop.trf.xlu0
  %v3276 = vpop.trf.xlu0
  %v3277 = vpop.trf.xlu0
  %3278 = vxpose.xlu0.b32.start [1/16] %v433, 128
  %3279 = vxpose.xlu0.b32.cont [2/16] %v434, 128
  %3280 = vxpose.xlu0.b32.cont [3/16] %v435, 128
  %3281 = vxpose.xlu0.b32.cont [4/16] %v436, 128
  %3282 = vxpose.xlu0.b32.cont [5/16] %v437, 128
  %3283 = vxpose.xlu0.b32.cont [6/16] 0.0, 128
  %3284 = vxpose.xlu0.b32.cont [7/16] 0.0, 128
  %3285 = vxpose.xlu0.b32.cont [8/16] 0.0, 128
  %3286 = vxpose.xlu0.b32.cont [9/16] 0.0, 128
  %3287 = vxpose.xlu0.b32.cont [10/16] 0.0, 128
  %3288 = vxpose.xlu0.b32.cont [11/16] 0.0, 128
  %3289 = vxpose.xlu0.b32.cont [12/16] 0.0, 128
  %3290 = vxpose.xlu0.b32.cont [13/16] 0.0, 128
  %3291 = vxpose.xlu0.b32.cont [14/16] 0.0, 128
  %3292 = vxpose.xlu0.b32.cont [15/16] 0.0, 128
  %3293 = vxpose.xlu0.b32.end [16/16] 0.0, 128
  %v3294 = vpop.trf.xlu0
  %v3295 = vpop.trf.xlu0
  %v3296 = vpop.trf.xlu0
  %v3297 = vpop.trf.xlu0
  %v3298 = vpop.trf.xlu0
  %v3299 = vpop.trf.xlu0
  %v3300 = vpop.trf.xlu0
  %v3301 = vpop.trf.xlu0
  %v3302 = vpop.trf.xlu0
  %v3303 = vpop.trf.xlu0
  %v3304 = vpop.trf.xlu0
  %v3305 = vpop.trf.xlu0
  %v3306 = vpop.trf.xlu0
  %v3307 = vpop.trf.xlu0
  %v3308 = vpop.trf.xlu0
  %v3309 = vpop.trf.xlu0
  %3310 = vxpose.xlu0.b32.start [1/16] %v438, 128
  %3311 = vxpose.xlu0.b32.cont [2/16] %v439, 128
  %3312 = vxpose.xlu0.b32.cont [3/16] %v440, 128
  %3313 = vxpose.xlu0.b32.cont [4/16] %v441, 128
  %3314 = vxpose.xlu0.b32.cont [5/16] %v442, 128
  %3315 = vxpose.xlu0.b32.cont [6/16] 0.0, 128
  %3316 = vxpose.xlu0.b32.cont [7/16] 0.0, 128
  %3317 = vxpose.xlu0.b32.cont [8/16] 0.0, 128
  %3318 = vxpose.xlu0.b32.cont [9/16] 0.0, 128
  %3319 = vxpose.xlu0.b32.cont [10/16] 0.0, 128
  %3320 = vxpose.xlu0.b32.cont [11/16] 0.0, 128
  %3321 = vxpose.xlu0.b32.cont [12/16] 0.0, 128
  %3322 = vxpose.xlu0.b32.cont [13/16] 0.0, 128
  %3323 = vxpose.xlu0.b32.cont [14/16] 0.0, 128
  %3324 = vxpose.xlu0.b32.cont [15/16] 0.0, 128
  %3325 = vxpose.xlu0.b32.end [16/16] 0.0, 128
  %v3326 = vpop.trf.xlu0
  %v3327 = vpop.trf.xlu0
  %v3328 = vpop.trf.xlu0
  %v3329 = vpop.trf.xlu0
  %v3330 = vpop.trf.xlu0
  %v3331 = vpop.trf.xlu0
  %v3332 = vpop.trf.xlu0
  %v3333 = vpop.trf.xlu0
  %v3334 = vpop.trf.xlu0
  %v3335 = vpop.trf.xlu0
  %v3336 = vpop.trf.xlu0
  %v3337 = vpop.trf.xlu0
  %v3338 = vpop.trf.xlu0
  %v3339 = vpop.trf.xlu0
  %v3340 = vpop.trf.xlu0
  %v3341 = vpop.trf.xlu0
  %3342 = vxpose.xlu0.b32.start [1/16] %v443, 128
  %3343 = vxpose.xlu0.b32.cont [2/16] %v444, 128
  %3344 = vxpose.xlu0.b32.cont [3/16] %v445, 128
  %3345 = vxpose.xlu0.b32.cont [4/16] %v446, 128
  %3346 = vxpose.xlu0.b32.cont [5/16] %v447, 128
  %3347 = vxpose.xlu0.b32.cont [6/16] 0.0, 128
  %3348 = vxpose.xlu0.b32.cont [7/16] 0.0, 128
  %3349 = vxpose.xlu0.b32.cont [8/16] 0.0, 128
  %3350 = vxpose.xlu0.b32.cont [9/16] 0.0, 128
  %3351 = vxpose.xlu0.b32.cont [10/16] 0.0, 128
  %3352 = vxpose.xlu0.b32.cont [11/16] 0.0, 128
  %3353 = vxpose.xlu0.b32.cont [12/16] 0.0, 128
  %3354 = vxpose.xlu0.b32.cont [13/16] 0.0, 128
  %3355 = vxpose.xlu0.b32.cont [14/16] 0.0, 128
  %3356 = vxpose.xlu0.b32.cont [15/16] 0.0, 128
  %3357 = vxpose.xlu0.b32.end [16/16] 0.0, 128
  %v3358 = vpop.trf.xlu0
  %v3359 = vpop.trf.xlu0
  %v3360 = vpop.trf.xlu0
  %v3361 = vpop.trf.xlu0
  %v3362 = vpop.trf.xlu0
  %v3363 = vpop.trf.xlu0
  %v3364 = vpop.trf.xlu0
  %v3365 = vpop.trf.xlu0
  %v3366 = vpop.trf.xlu0
  %v3367 = vpop.trf.xlu0
  %v3368 = vpop.trf.xlu0
  %v3369 = vpop.trf.xlu0
  %v3370 = vpop.trf.xlu0
  %v3371 = vpop.trf.xlu0
  %v3372 = vpop.trf.xlu0
  %v3373 = vpop.trf.xlu0
  %3374 = vxpose.xlu0.b32.start [1/16] %v448, 128
  %3375 = vxpose.xlu0.b32.cont [2/16] %v449, 128
  %3376 = vxpose.xlu0.b32.cont [3/16] %v450, 128
  %3377 = vxpose.xlu0.b32.cont [4/16] %v451, 128
  %3378 = vxpose.xlu0.b32.cont [5/16] %v452, 128
  %3379 = vxpose.xlu0.b32.cont [6/16] 0.0, 128
  %3380 = vxpose.xlu0.b32.cont [7/16] 0.0, 128
  %3381 = vxpose.xlu0.b32.cont [8/16] 0.0, 128
  %3382 = vxpose.xlu0.b32.cont [9/16] 0.0, 128
  %3383 = vxpose.xlu0.b32.cont [10/16] 0.0, 128
  %3384 = vxpose.xlu0.b32.cont [11/16] 0.0, 128
  %3385 = vxpose.xlu0.b32.cont [12/16] 0.0, 128
  %3386 = vxpose.xlu0.b32.cont [13/16] 0.0, 128
  %3387 = vxpose.xlu0.b32.cont [14/16] 0.0, 128
  %3388 = vxpose.xlu0.b32.cont [15/16] 0.0, 128
  %3389 = vxpose.xlu0.b32.end [16/16] 0.0, 128
  %v3390 = vpop.trf.xlu0
  %v3391 = vpop.trf.xlu0
  %v3392 = vpop.trf.xlu0
  %v3393 = vpop.trf.xlu0
  %v3394 = vpop.trf.xlu0
  %v3395 = vpop.trf.xlu0
  %v3396 = vpop.trf.xlu0
  %v3397 = vpop.trf.xlu0
  %v3398 = vpop.trf.xlu0
  %v3399 = vpop.trf.xlu0
  %v3400 = vpop.trf.xlu0
  %v3401 = vpop.trf.xlu0
  %v3402 = vpop.trf.xlu0
  %v3403 = vpop.trf.xlu0
  %v3404 = vpop.trf.xlu0
  %v3405 = vpop.trf.xlu0
  %3406 = vxpose.xlu0.b32.start [1/16] %v453, 128
  %3407 = vxpose.xlu0.b32.cont [2/16] %v454, 128
  %3408 = vxpose.xlu0.b32.cont [3/16] %v455, 128
  %3409 = vxpose.xlu0.b32.cont [4/16] %v456, 128
  %3410 = vxpose.xlu0.b32.cont [5/16] %v457, 128
  %3411 = vxpose.xlu0.b32.cont [6/16] 0.0, 128
  %3412 = vxpose.xlu0.b32.cont [7/16] 0.0, 128
  %3413 = vxpose.xlu0.b32.cont [8/16] 0.0, 128
  %3414 = vxpose.xlu0.b32.cont [9/16] 0.0, 128
  %3415 = vxpose.xlu0.b32.cont [10/16] 0.0, 128
  %3416 = vxpose.xlu0.b32.cont [11/16] 0.0, 128
  %3417 = vxpose.xlu0.b32.cont [12/16] 0.0, 128
  %3418 = vxpose.xlu0.b32.cont [13/16] 0.0, 128
  %3419 = vxpose.xlu0.b32.cont [14/16] 0.0, 128
  %3420 = vxpose.xlu0.b32.cont [15/16] 0.0, 128
  %3421 = vxpose.xlu0.b32.end [16/16] 0.0, 128
  %v3422 = vpop.trf.xlu0
  %v3423 = vpop.trf.xlu0
  %v3424 = vpop.trf.xlu0
  %v3425 = vpop.trf.xlu0
  %v3426 = vpop.trf.xlu0
  %v3427 = vpop.trf.xlu0
  %v3428 = vpop.trf.xlu0
  %v3429 = vpop.trf.xlu0
  %v3430 = vpop.trf.xlu0
  %v3431 = vpop.trf.xlu0
  %v3432 = vpop.trf.xlu0
  %v3433 = vpop.trf.xlu0
  %v3434 = vpop.trf.xlu0
  %v3435 = vpop.trf.xlu0
  %v3436 = vpop.trf.xlu0
  %v3437 = vpop.trf.xlu0
  %3438 = vxpose.xlu0.b32.start [1/16] %v458, 128
  %3439 = vxpose.xlu0.b32.cont [2/16] %v459, 128
  %3440 = vxpose.xlu0.b32.cont [3/16] %v460, 128
  %3441 = vxpose.xlu0.b32.cont [4/16] %v461, 128
  %3442 = vxpose.xlu0.b32.cont [5/16] %v462, 128
  %3443 = vxpose.xlu0.b32.cont [6/16] 0.0, 128
  %3444 = vxpose.xlu0.b32.cont [7/16] 0.0, 128
  %3445 = vxpose.xlu0.b32.cont [8/16] 0.0, 128
  %3446 = vxpose.xlu0.b32.cont [9/16] 0.0, 128
  %3447 = vxpose.xlu0.b32.cont [10/16] 0.0, 128
  %3448 = vxpose.xlu0.b32.cont [11/16] 0.0, 128
  %3449 = vxpose.xlu0.b32.cont [12/16] 0.0, 128
  %3450 = vxpose.xlu0.b32.cont [13/16] 0.0, 128
  %3451 = vxpose.xlu0.b32.cont [14/16] 0.0, 128
  %3452 = vxpose.xlu0.b32.cont [15/16] 0.0, 128
  %3453 = vxpose.xlu0.b32.end [16/16] 0.0, 128
  %v3454 = vpop.trf.xlu0
  %v3455 = vpop.trf.xlu0
  %v3456 = vpop.trf.xlu0
  %v3457 = vpop.trf.xlu0
  %v3458 = vpop.trf.xlu0
  %v3459 = vpop.trf.xlu0
  %v3460 = vpop.trf.xlu0
  %v3461 = vpop.trf.xlu0
  %v3462 = vpop.trf.xlu0
  %v3463 = vpop.trf.xlu0
  %v3464 = vpop.trf.xlu0
  %v3465 = vpop.trf.xlu0
  %v3466 = vpop.trf.xlu0
  %v3467 = vpop.trf.xlu0
  %v3468 = vpop.trf.xlu0
  %v3469 = vpop.trf.xlu0
  %3470 = vxpose.xlu0.b32.start [1/16] %v463, 128
  %3471 = vxpose.xlu0.b32.cont [2/16] %v464, 128
  %3472 = vxpose.xlu0.b32.cont [3/16] %v465, 128
  %3473 = vxpose.xlu0.b32.cont [4/16] %v466, 128
  %3474 = vxpose.xlu0.b32.cont [5/16] %v467, 128
  %3475 = vxpose.xlu0.b32.cont [6/16] 0.0, 128
  %3476 = vxpose.xlu0.b32.cont [7/16] 0.0, 128
  %3477 = vxpose.xlu0.b32.cont [8/16] 0.0, 128
  %3478 = vxpose.xlu0.b32.cont [9/16] 0.0, 128
  %3479 = vxpose.xlu0.b32.cont [10/16] 0.0, 128
  %3480 = vxpose.xlu0.b32.cont [11/16] 0.0, 128
  %3481 = vxpose.xlu0.b32.cont [12/16] 0.0, 128
  %3482 = vxpose.xlu0.b32.cont [13/16] 0.0, 128
  %3483 = vxpose.xlu0.b32.cont [14/16] 0.0, 128
  %3484 = vxpose.xlu0.b32.cont [15/16] 0.0, 128
  %3485 = vxpose.xlu0.b32.end [16/16] 0.0, 128
  %v3486 = vpop.trf.xlu0
  %v3487 = vpop.trf.xlu0
  %v3488 = vpop.trf.xlu0
  %v3489 = vpop.trf.xlu0
  %v3490 = vpop.trf.xlu0
  %v3491 = vpop.trf.xlu0
  %v3492 = vpop.trf.xlu0
  %v3493 = vpop.trf.xlu0
  %v3494 = vpop.trf.xlu0
  %v3495 = vpop.trf.xlu0
  %v3496 = vpop.trf.xlu0
  %v3497 = vpop.trf.xlu0
  %v3498 = vpop.trf.xlu0
  %v3499 = vpop.trf.xlu0
  %v3500 = vpop.trf.xlu0
  %v3501 = vpop.trf.xlu0
  %3502 = vxpose.xlu0.b32.start [1/16] %v468, 128
  %3503 = vxpose.xlu0.b32.cont [2/16] %v469, 128
  %3504 = vxpose.xlu0.b32.cont [3/16] %v470, 128
  %3505 = vxpose.xlu0.b32.cont [4/16] %v471, 128
  %3506 = vxpose.xlu0.b32.cont [5/16] %v472, 128
  %3507 = vxpose.xlu0.b32.cont [6/16] 0.0, 128
  %3508 = vxpose.xlu0.b32.cont [7/16] 0.0, 128
  %3509 = vxpose.xlu0.b32.cont [8/16] 0.0, 128
  %3510 = vxpose.xlu0.b32.cont [9/16] 0.0, 128
  %3511 = vxpose.xlu0.b32.cont [10/16] 0.0, 128
  %3512 = vxpose.xlu0.b32.cont [11/16] 0.0, 128
  %3513 = vxpose.xlu0.b32.cont [12/16] 0.0, 128
  %3514 = vxpose.xlu0.b32.cont [13/16] 0.0, 128
  %3515 = vxpose.xlu0.b32.cont [14/16] 0.0, 128
  %3516 = vxpose.xlu0.b32.cont [15/16] 0.0, 128
  %3517 = vxpose.xlu0.b32.end [16/16] 0.0, 128
  %v3518 = vpop.trf.xlu0
  %v3519 = vpop.trf.xlu0
  %v3520 = vpop.trf.xlu0
  %v3521 = vpop.trf.xlu0
  %v3522 = vpop.trf.xlu0
  %v3523 = vpop.trf.xlu0
  %v3524 = vpop.trf.xlu0
  %v3525 = vpop.trf.xlu0
  %v3526 = vpop.trf.xlu0
  %v3527 = vpop.trf.xlu0
  %v3528 = vpop.trf.xlu0
  %v3529 = vpop.trf.xlu0
  %v3530 = vpop.trf.xlu0
  %v3531 = vpop.trf.xlu0
  %v3532 = vpop.trf.xlu0
  %v3533 = vpop.trf.xlu0
  %3534 = vxpose.xlu0.b32.start [1/16] %v473, 128
  %3535 = vxpose.xlu0.b32.cont [2/16] %v474, 128
  %3536 = vxpose.xlu0.b32.cont [3/16] %v475, 128
  %3537 = vxpose.xlu0.b32.cont [4/16] %v476, 128
  %3538 = vxpose.xlu0.b32.cont [5/16] %v477, 128
  %3539 = vxpose.xlu0.b32.cont [6/16] 0.0, 128
  %3540 = vxpose.xlu0.b32.cont [7/16] 0.0, 128
  %3541 = vxpose.xlu0.b32.cont [8/16] 0.0, 128
  %3542 = vxpose.xlu0.b32.cont [9/16] 0.0, 128
  %3543 = vxpose.xlu0.b32.cont [10/16] 0.0, 128
  %3544 = vxpose.xlu0.b32.cont [11/16] 0.0, 128
  %3545 = vxpose.xlu0.b32.cont [12/16] 0.0, 128
  %3546 = vxpose.xlu0.b32.cont [13/16] 0.0, 128
  %3547 = vxpose.xlu0.b32.cont [14/16] 0.0, 128
  %3548 = vxpose.xlu0.b32.cont [15/16] 0.0, 128
  %3549 = vxpose.xlu0.b32.end [16/16] 0.0, 128
  %v3550 = vpop.trf.xlu0
  %v3551 = vpop.trf.xlu0
  %v3552 = vpop.trf.xlu0
  %v3553 = vpop.trf.xlu0
  %v3554 = vpop.trf.xlu0
  %v3555 = vpop.trf.xlu0
  %v3556 = vpop.trf.xlu0
  %v3557 = vpop.trf.xlu0
  %v3558 = vpop.trf.xlu0
  %v3559 = vpop.trf.xlu0
  %v3560 = vpop.trf.xlu0
  %v3561 = vpop.trf.xlu0
  %v3562 = vpop.trf.xlu0
  %v3563 = vpop.trf.xlu0
  %v3564 = vpop.trf.xlu0
  %v3565 = vpop.trf.xlu0
  %3566 = vxpose.xlu0.b32.start [1/16] %v478, 128
  %3567 = vxpose.xlu0.b32.cont [2/16] %v479, 128
  %3568 = vxpose.xlu0.b32.cont [3/16] %v480, 128
  %3569 = vxpose.xlu0.b32.cont [4/16] %v481, 128
  %3570 = vxpose.xlu0.b32.cont [5/16] %v482, 128
  %3571 = vxpose.xlu0.b32.cont [6/16] 0.0, 128
  %3572 = vxpose.xlu0.b32.cont [7/16] 0.0, 128
  %3573 = vxpose.xlu0.b32.cont [8/16] 0.0, 128
  %3574 = vxpose.xlu0.b32.cont [9/16] 0.0, 128
  %3575 = vxpose.xlu0.b32.cont [10/16] 0.0, 128
  %3576 = vxpose.xlu0.b32.cont [11/16] 0.0, 128
  %3577 = vxpose.xlu0.b32.cont [12/16] 0.0, 128
  %3578 = vxpose.xlu0.b32.cont [13/16] 0.0, 128
  %3579 = vxpose.xlu0.b32.cont [14/16] 0.0, 128
  %3580 = vxpose.xlu0.b32.cont [15/16] 0.0, 128
  %3581 = vxpose.xlu0.b32.end [16/16] 0.0, 128
  %v3582 = vpop.trf.xlu0
  %v3583 = vpop.trf.xlu0
  %v3584 = vpop.trf.xlu0
  %v3585 = vpop.trf.xlu0
  %v3586 = vpop.trf.xlu0
  %v3587 = vpop.trf.xlu0
  %v3588 = vpop.trf.xlu0
  %v3589 = vpop.trf.xlu0
  %v3590 = vpop.trf.xlu0
  %v3591 = vpop.trf.xlu0
  %v3592 = vpop.trf.xlu0
  %v3593 = vpop.trf.xlu0
  %v3594 = vpop.trf.xlu0
  %v3595 = vpop.trf.xlu0
  %v3596 = vpop.trf.xlu0
  %v3597 = vpop.trf.xlu0
  %3598 = vxpose.xlu0.b32.start [1/16] %v483, 128
  %3599 = vxpose.xlu0.b32.cont [2/16] %v484, 128
  %3600 = vxpose.xlu0.b32.cont [3/16] %v485, 128
  %3601 = vxpose.xlu0.b32.cont [4/16] %v486, 128
  %3602 = vxpose.xlu0.b32.cont [5/16] %v487, 128
  %3603 = vxpose.xlu0.b32.cont [6/16] 0.0, 128
  %3604 = vxpose.xlu0.b32.cont [7/16] 0.0, 128
  %3605 = vxpose.xlu0.b32.cont [8/16] 0.0, 128
  %3606 = vxpose.xlu0.b32.cont [9/16] 0.0, 128
  %3607 = vxpose.xlu0.b32.cont [10/16] 0.0, 128
  %3608 = vxpose.xlu0.b32.cont [11/16] 0.0, 128
  %3609 = vxpose.xlu0.b32.cont [12/16] 0.0, 128
  %3610 = vxpose.xlu0.b32.cont [13/16] 0.0, 128
  %3611 = vxpose.xlu0.b32.cont [14/16] 0.0, 128
  %3612 = vxpose.xlu0.b32.cont [15/16] 0.0, 128
  %3613 = vxpose.xlu0.b32.end [16/16] 0.0, 128
  %v3614 = vpop.trf.xlu0
  %v3615 = vpop.trf.xlu0
  %v3616 = vpop.trf.xlu0
  %v3617 = vpop.trf.xlu0
  %v3618 = vpop.trf.xlu0
  %v3619 = vpop.trf.xlu0
  %v3620 = vpop.trf.xlu0
  %v3621 = vpop.trf.xlu0
  %v3622 = vpop.trf.xlu0
  %v3623 = vpop.trf.xlu0
  %v3624 = vpop.trf.xlu0
  %v3625 = vpop.trf.xlu0
  %v3626 = vpop.trf.xlu0
  %v3627 = vpop.trf.xlu0
  %v3628 = vpop.trf.xlu0
  %v3629 = vpop.trf.xlu0
  %3630 = vxpose.xlu0.b32.start [1/16] %v488, 128
  %3631 = vxpose.xlu0.b32.cont [2/16] %v489, 128
  %3632 = vxpose.xlu0.b32.cont [3/16] %v490, 128
  %3633 = vxpose.xlu0.b32.cont [4/16] %v491, 128
  %3634 = vxpose.xlu0.b32.cont [5/16] %v492, 128
  %3635 = vxpose.xlu0.b32.cont [6/16] 0.0, 128
  %3636 = vxpose.xlu0.b32.cont [7/16] 0.0, 128
  %3637 = vxpose.xlu0.b32.cont [8/16] 0.0, 128
  %3638 = vxpose.xlu0.b32.cont [9/16] 0.0, 128
  %3639 = vxpose.xlu0.b32.cont [10/16] 0.0, 128
  %3640 = vxpose.xlu0.b32.cont [11/16] 0.0, 128
  %3641 = vxpose.xlu0.b32.cont [12/16] 0.0, 128
  %3642 = vxpose.xlu0.b32.cont [13/16] 0.0, 128
  %3643 = vxpose.xlu0.b32.cont [14/16] 0.0, 128
  %3644 = vxpose.xlu0.b32.cont [15/16] 0.0, 128
  %3645 = vxpose.xlu0.b32.end [16/16] 0.0, 128
  %v3646 = vpop.trf.xlu0
  %v3647 = vpop.trf.xlu0
  %v3648 = vpop.trf.xlu0
  %v3649 = vpop.trf.xlu0
  %v3650 = vpop.trf.xlu0
  %v3651 = vpop.trf.xlu0
  %v3652 = vpop.trf.xlu0
  %v3653 = vpop.trf.xlu0
  %v3654 = vpop.trf.xlu0
  %v3655 = vpop.trf.xlu0
  %v3656 = vpop.trf.xlu0
  %v3657 = vpop.trf.xlu0
  %v3658 = vpop.trf.xlu0
  %v3659 = vpop.trf.xlu0
  %v3660 = vpop.trf.xlu0
  %v3661 = vpop.trf.xlu0
  %3662 = vxpose.xlu0.b32.start [1/16] %v493, 128
  %3663 = vxpose.xlu0.b32.cont [2/16] %v494, 128
  %3664 = vxpose.xlu0.b32.cont [3/16] %v495, 128
  %3665 = vxpose.xlu0.b32.cont [4/16] %v496, 128
  %3666 = vxpose.xlu0.b32.cont [5/16] %v497, 128
  %3667 = vxpose.xlu0.b32.cont [6/16] 0.0, 128
  %3668 = vxpose.xlu0.b32.cont [7/16] 0.0, 128
  %3669 = vxpose.xlu0.b32.cont [8/16] 0.0, 128
  %3670 = vxpose.xlu0.b32.cont [9/16] 0.0, 128
  %3671 = vxpose.xlu0.b32.cont [10/16] 0.0, 128
  %3672 = vxpose.xlu0.b32.cont [11/16] 0.0, 128
  %3673 = vxpose.xlu0.b32.cont [12/16] 0.0, 128
  %3674 = vxpose.xlu0.b32.cont [13/16] 0.0, 128
  %3675 = vxpose.xlu0.b32.cont [14/16] 0.0, 128
  %3676 = vxpose.xlu0.b32.cont [15/16] 0.0, 128
  %3677 = vxpose.xlu0.b32.end [16/16] 0.0, 128
  %v3678 = vpop.trf.xlu0
  %v3679 = vpop.trf.xlu0
  %v3680 = vpop.trf.xlu0
  %v3681 = vpop.trf.xlu0
  %v3682 = vpop.trf.xlu0
  %v3683 = vpop.trf.xlu0
  %v3684 = vpop.trf.xlu0
  %v3685 = vpop.trf.xlu0
  %v3686 = vpop.trf.xlu0
  %v3687 = vpop.trf.xlu0
  %v3688 = vpop.trf.xlu0
  %v3689 = vpop.trf.xlu0
  %v3690 = vpop.trf.xlu0
  %v3691 = vpop.trf.xlu0
  %v3692 = vpop.trf.xlu0
  %v3693 = vpop.trf.xlu0
  %3694 = vxpose.xlu0.b32.start [1/16] %v498, 128
  %3695 = vxpose.xlu0.b32.cont [2/16] %v499, 128
  %3696 = vxpose.xlu0.b32.cont [3/16] %v500, 128
  %3697 = vxpose.xlu0.b32.cont [4/16] %v501, 128
  %3698 = vxpose.xlu0.b32.cont [5/16] %v502, 128
  %3699 = vxpose.xlu0.b32.cont [6/16] 0.0, 128
  %3700 = vxpose.xlu0.b32.cont [7/16] 0.0, 128
  %3701 = vxpose.xlu0.b32.cont [8/16] 0.0, 128
  %3702 = vxpose.xlu0.b32.cont [9/16] 0.0, 128
  %3703 = vxpose.xlu0.b32.cont [10/16] 0.0, 128
  %3704 = vxpose.xlu0.b32.cont [11/16] 0.0, 128
  %3705 = vxpose.xlu0.b32.cont [12/16] 0.0, 128
  %3706 = vxpose.xlu0.b32.cont [13/16] 0.0, 128
  %3707 = vxpose.xlu0.b32.cont [14/16] 0.0, 128
  %3708 = vxpose.xlu0.b32.cont [15/16] 0.0, 128
  %3709 = vxpose.xlu0.b32.end [16/16] 0.0, 128
  %v3710 = vpop.trf.xlu0
  %v3711 = vpop.trf.xlu0
  %v3712 = vpop.trf.xlu0
  %v3713 = vpop.trf.xlu0
  %v3714 = vpop.trf.xlu0
  %v3715 = vpop.trf.xlu0
  %v3716 = vpop.trf.xlu0
  %v3717 = vpop.trf.xlu0
  %v3718 = vpop.trf.xlu0
  %v3719 = vpop.trf.xlu0
  %v3720 = vpop.trf.xlu0
  %v3721 = vpop.trf.xlu0
  %v3722 = vpop.trf.xlu0
  %v3723 = vpop.trf.xlu0
  %v3724 = vpop.trf.xlu0
  %v3725 = vpop.trf.xlu0
  %3726 = vxpose.xlu0.b32.start [1/16] %v503, 128
  %3727 = vxpose.xlu0.b32.cont [2/16] %v504, 128
  %3728 = vxpose.xlu0.b32.cont [3/16] %v505, 128
  %3729 = vxpose.xlu0.b32.cont [4/16] %v506, 128
  %3730 = vxpose.xlu0.b32.cont [5/16] %v507, 128
  %3731 = vxpose.xlu0.b32.cont [6/16] 0.0, 128
  %3732 = vxpose.xlu0.b32.cont [7/16] 0.0, 128
  %3733 = vxpose.xlu0.b32.cont [8/16] 0.0, 128
  %3734 = vxpose.xlu0.b32.cont [9/16] 0.0, 128
  %3735 = vxpose.xlu0.b32.cont [10/16] 0.0, 128
  %3736 = vxpose.xlu0.b32.cont [11/16] 0.0, 128
  %3737 = vxpose.xlu0.b32.cont [12/16] 0.0, 128
  %3738 = vxpose.xlu0.b32.cont [13/16] 0.0, 128
  %3739 = vxpose.xlu0.b32.cont [14/16] 0.0, 128
  %3740 = vxpose.xlu0.b32.cont [15/16] 0.0, 128
  %3741 = vxpose.xlu0.b32.end [16/16] 0.0, 128
  %v3742 = vpop.trf.xlu0
  %v3743 = vpop.trf.xlu0
  %v3744 = vpop.trf.xlu0
  %v3745 = vpop.trf.xlu0
  %v3746 = vpop.trf.xlu0
  %v3747 = vpop.trf.xlu0
  %v3748 = vpop.trf.xlu0
  %v3749 = vpop.trf.xlu0
  %v3750 = vpop.trf.xlu0
  %v3751 = vpop.trf.xlu0
  %v3752 = vpop.trf.xlu0
  %v3753 = vpop.trf.xlu0
  %v3754 = vpop.trf.xlu0
  %v3755 = vpop.trf.xlu0
  %v3756 = vpop.trf.xlu0
  %v3757 = vpop.trf.xlu0
  %3758 = vxpose.xlu0.b32.start [1/16] %v508, 128
  %3759 = vxpose.xlu0.b32.cont [2/16] %v509, 128
  %3760 = vxpose.xlu0.b32.cont [3/16] %v510, 128
  %3761 = vxpose.xlu0.b32.cont [4/16] %v511, 128
  %3762 = vxpose.xlu0.b32.cont [5/16] %v512, 128
  %3763 = vxpose.xlu0.b32.cont [6/16] 0.0, 128
  %3764 = vxpose.xlu0.b32.cont [7/16] 0.0, 128
  %3765 = vxpose.xlu0.b32.cont [8/16] 0.0, 128
  %3766 = vxpose.xlu0.b32.cont [9/16] 0.0, 128
  %3767 = vxpose.xlu0.b32.cont [10/16] 0.0, 128
  %3768 = vxpose.xlu0.b32.cont [11/16] 0.0, 128
  %3769 = vxpose.xlu0.b32.cont [12/16] 0.0, 128
  %3770 = vxpose.xlu0.b32.cont [13/16] 0.0, 128
  %3771 = vxpose.xlu0.b32.cont [14/16] 0.0, 128
  %3772 = vxpose.xlu0.b32.cont [15/16] 0.0, 128
  %3773 = vxpose.xlu0.b32.end [16/16] 0.0, 128
  %v3774 = vpop.trf.xlu0
  %v3775 = vpop.trf.xlu0
  %v3776 = vpop.trf.xlu0
  %v3777 = vpop.trf.xlu0
  %v3778 = vpop.trf.xlu0
  %v3779 = vpop.trf.xlu0
  %v3780 = vpop.trf.xlu0
  %v3781 = vpop.trf.xlu0
  %v3782 = vpop.trf.xlu0
  %v3783 = vpop.trf.xlu0
  %v3784 = vpop.trf.xlu0
  %v3785 = vpop.trf.xlu0
  %v3786 = vpop.trf.xlu0
  %v3787 = vpop.trf.xlu0
  %v3788 = vpop.trf.xlu0
  %v3789 = vpop.trf.xlu0
  %3790 = vxpose.xlu0.b32.start [1/16] %v513, 128
  %3791 = vxpose.xlu0.b32.cont [2/16] %v514, 128
  %3792 = vxpose.xlu0.b32.cont [3/16] %v515, 128
  %3793 = vxpose.xlu0.b32.cont [4/16] %v516, 128
  %3794 = vxpose.xlu0.b32.cont [5/16] %v517, 128
  %3795 = vxpose.xlu0.b32.cont [6/16] 0.0, 128
  %3796 = vxpose.xlu0.b32.cont [7/16] 0.0, 128
  %3797 = vxpose.xlu0.b32.cont [8/16] 0.0, 128
  %3798 = vxpose.xlu0.b32.cont [9/16] 0.0, 128
  %3799 = vxpose.xlu0.b32.cont [10/16] 0.0, 128
  %3800 = vxpose.xlu0.b32.cont [11/16] 0.0, 128
  %3801 = vxpose.xlu0.b32.cont [12/16] 0.0, 128
  %3802 = vxpose.xlu0.b32.cont [13/16] 0.0, 128
  %3803 = vxpose.xlu0.b32.cont [14/16] 0.0, 128
  %3804 = vxpose.xlu0.b32.cont [15/16] 0.0, 128
  %3805 = vxpose.xlu0.b32.end [16/16] 0.0, 128
  %v3806 = vpop.trf.xlu0
  %v3807 = vpop.trf.xlu0
  %v3808 = vpop.trf.xlu0
  %v3809 = vpop.trf.xlu0
  %v3810 = vpop.trf.xlu0
  %v3811 = vpop.trf.xlu0
  %v3812 = vpop.trf.xlu0
  %v3813 = vpop.trf.xlu0
  %v3814 = vpop.trf.xlu0
  %v3815 = vpop.trf.xlu0
  %v3816 = vpop.trf.xlu0
  %v3817 = vpop.trf.xlu0
  %v3818 = vpop.trf.xlu0
  %v3819 = vpop.trf.xlu0
  %v3820 = vpop.trf.xlu0
  %v3821 = vpop.trf.xlu0
  %3822 = vxpose.xlu0.b32.start [1/16] %v518, 128
  %3823 = vxpose.xlu0.b32.cont [2/16] %v519, 128
  %3824 = vxpose.xlu0.b32.cont [3/16] %v520, 128
  %3825 = vxpose.xlu0.b32.cont [4/16] %v521, 128
  %3826 = vxpose.xlu0.b32.cont [5/16] %v522, 128
  %3827 = vxpose.xlu0.b32.cont [6/16] 0.0, 128
  %3828 = vxpose.xlu0.b32.cont [7/16] 0.0, 128
  %3829 = vxpose.xlu0.b32.cont [8/16] 0.0, 128
  %3830 = vxpose.xlu0.b32.cont [9/16] 0.0, 128
  %3831 = vxpose.xlu0.b32.cont [10/16] 0.0, 128
  %3832 = vxpose.xlu0.b32.cont [11/16] 0.0, 128
  %3833 = vxpose.xlu0.b32.cont [12/16] 0.0, 128
  %3834 = vxpose.xlu0.b32.cont [13/16] 0.0, 128
  %3835 = vxpose.xlu0.b32.cont [14/16] 0.0, 128
  %3836 = vxpose.xlu0.b32.cont [15/16] 0.0, 128
  %3837 = vxpose.xlu0.b32.end [16/16] 0.0, 128
  %v3838 = vpop.trf.xlu0
  %v3839 = vpop.trf.xlu0
  %v3840 = vpop.trf.xlu0
  %v3841 = vpop.trf.xlu0
  %v3842 = vpop.trf.xlu0
  %v3843 = vpop.trf.xlu0
  %v3844 = vpop.trf.xlu0
  %v3845 = vpop.trf.xlu0
  %v3846 = vpop.trf.xlu0
  %v3847 = vpop.trf.xlu0
  %v3848 = vpop.trf.xlu0
  %v3849 = vpop.trf.xlu0
  %v3850 = vpop.trf.xlu0
  %v3851 = vpop.trf.xlu0
  %v3852 = vpop.trf.xlu0
  %v3853 = vpop.trf.xlu0
  %3854 = vxpose.xlu0.b32.start [1/16] %v523, 128
  %3855 = vxpose.xlu0.b32.cont [2/16] %v524, 128
  %3856 = vxpose.xlu0.b32.cont [3/16] %v525, 128
  %3857 = vxpose.xlu0.b32.cont [4/16] %v526, 128
  %3858 = vxpose.xlu0.b32.cont [5/16] %v527, 128
  %3859 = vxpose.xlu0.b32.cont [6/16] 0.0, 128
  %3860 = vxpose.xlu0.b32.cont [7/16] 0.0, 128
  %3861 = vxpose.xlu0.b32.cont [8/16] 0.0, 128
  %3862 = vxpose.xlu0.b32.cont [9/16] 0.0, 128
  %3863 = vxpose.xlu0.b32.cont [10/16] 0.0, 128
  %3864 = vxpose.xlu0.b32.cont [11/16] 0.0, 128
  %3865 = vxpose.xlu0.b32.cont [12/16] 0.0, 128
  %3866 = vxpose.xlu0.b32.cont [13/16] 0.0, 128
  %3867 = vxpose.xlu0.b32.cont [14/16] 0.0, 128
  %3868 = vxpose.xlu0.b32.cont [15/16] 0.0, 128
  %3869 = vxpose.xlu0.b32.end [16/16] 0.0, 128
  %v3870 = vpop.trf.xlu0
  %v3871 = vpop.trf.xlu0
  %v3872 = vpop.trf.xlu0
  %v3873 = vpop.trf.xlu0
  %v3874 = vpop.trf.xlu0
  %v3875 = vpop.trf.xlu0
  %v3876 = vpop.trf.xlu0
  %v3877 = vpop.trf.xlu0
  %v3878 = vpop.trf.xlu0
  %v3879 = vpop.trf.xlu0
  %v3880 = vpop.trf.xlu0
  %v3881 = vpop.trf.xlu0
  %v3882 = vpop.trf.xlu0
  %v3883 = vpop.trf.xlu0
  %v3884 = vpop.trf.xlu0
  %v3885 = vpop.trf.xlu0
  %3886 = vxpose.xlu0.b32.start [1/16] %v528, 128
  %3887 = vxpose.xlu0.b32.cont [2/16] %v529, 128
  %3888 = vxpose.xlu0.b32.cont [3/16] %v530, 128
  %3889 = vxpose.xlu0.b32.cont [4/16] %v531, 128
  %3890 = vxpose.xlu0.b32.cont [5/16] %v532, 128
  %3891 = vxpose.xlu0.b32.cont [6/16] 0.0, 128
  %3892 = vxpose.xlu0.b32.cont [7/16] 0.0, 128
  %3893 = vxpose.xlu0.b32.cont [8/16] 0.0, 128
  %3894 = vxpose.xlu0.b32.cont [9/16] 0.0, 128
  %3895 = vxpose.xlu0.b32.cont [10/16] 0.0, 128
  %3896 = vxpose.xlu0.b32.cont [11/16] 0.0, 128
  %3897 = vxpose.xlu0.b32.cont [12/16] 0.0, 128
  %3898 = vxpose.xlu0.b32.cont [13/16] 0.0, 128
  %3899 = vxpose.xlu0.b32.cont [14/16] 0.0, 128
  %3900 = vxpose.xlu0.b32.cont [15/16] 0.0, 128
  %3901 = vxpose.xlu0.b32.end [16/16] 0.0, 128
  %v3902 = vpop.trf.xlu0
  %v3903 = vpop.trf.xlu0
  %v3904 = vpop.trf.xlu0
  %v3905 = vpop.trf.xlu0
  %v3906 = vpop.trf.xlu0
  %v3907 = vpop.trf.xlu0
  %v3908 = vpop.trf.xlu0
  %v3909 = vpop.trf.xlu0
  %v3910 = vpop.trf.xlu0
  %v3911 = vpop.trf.xlu0
  %v3912 = vpop.trf.xlu0
  %v3913 = vpop.trf.xlu0
  %v3914 = vpop.trf.xlu0
  %v3915 = vpop.trf.xlu0
  %v3916 = vpop.trf.xlu0
  %v3917 = vpop.trf.xlu0
  %3918 = vxpose.xlu0.b32.start [1/16] %v533, 128
  %3919 = vxpose.xlu0.b32.cont [2/16] %v534, 128
  %3920 = vxpose.xlu0.b32.cont [3/16] %v535, 128
  %3921 = vxpose.xlu0.b32.cont [4/16] %v536, 128
  %3922 = vxpose.xlu0.b32.cont [5/16] %v537, 128
  %3923 = vxpose.xlu0.b32.cont [6/16] 0.0, 128
  %3924 = vxpose.xlu0.b32.cont [7/16] 0.0, 128
  %3925 = vxpose.xlu0.b32.cont [8/16] 0.0, 128
  %3926 = vxpose.xlu0.b32.cont [9/16] 0.0, 128
  %3927 = vxpose.xlu0.b32.cont [10/16] 0.0, 128
  %3928 = vxpose.xlu0.b32.cont [11/16] 0.0, 128
  %3929 = vxpose.xlu0.b32.cont [12/16] 0.0, 128
  %3930 = vxpose.xlu0.b32.cont [13/16] 0.0, 128
  %3931 = vxpose.xlu0.b32.cont [14/16] 0.0, 128
  %3932 = vxpose.xlu0.b32.cont [15/16] 0.0, 128
  %3933 = vxpose.xlu0.b32.end [16/16] 0.0, 128
  %v3934 = vpop.trf.xlu0
  %v3935 = vpop.trf.xlu0
  %v3936 = vpop.trf.xlu0
  %v3937 = vpop.trf.xlu0
  %v3938 = vpop.trf.xlu0
  %v3939 = vpop.trf.xlu0
  %v3940 = vpop.trf.xlu0
  %v3941 = vpop.trf.xlu0
  %v3942 = vpop.trf.xlu0
  %v3943 = vpop.trf.xlu0
  %v3944 = vpop.trf.xlu0
  %v3945 = vpop.trf.xlu0
  %v3946 = vpop.trf.xlu0
  %v3947 = vpop.trf.xlu0
  %v3948 = vpop.trf.xlu0
  %v3949 = vpop.trf.xlu0
  %3950 = vxpose.xlu0.b32.start [1/16] %v538, 128
  %3951 = vxpose.xlu0.b32.cont [2/16] %v539, 128
  %3952 = vxpose.xlu0.b32.cont [3/16] %v540, 128
  %3953 = vxpose.xlu0.b32.cont [4/16] %v541, 128
  %3954 = vxpose.xlu0.b32.cont [5/16] %v542, 128
  %3955 = vxpose.xlu0.b32.cont [6/16] 0.0, 128
  %3956 = vxpose.xlu0.b32.cont [7/16] 0.0, 128
  %3957 = vxpose.xlu0.b32.cont [8/16] 0.0, 128
  %3958 = vxpose.xlu0.b32.cont [9/16] 0.0, 128
  %3959 = vxpose.xlu0.b32.cont [10/16] 0.0, 128
  %3960 = vxpose.xlu0.b32.cont [11/16] 0.0, 128
  %3961 = vxpose.xlu0.b32.cont [12/16] 0.0, 128
  %3962 = vxpose.xlu0.b32.cont [13/16] 0.0, 128
  %3963 = vxpose.xlu0.b32.cont [14/16] 0.0, 128
  %3964 = vxpose.xlu0.b32.cont [15/16] 0.0, 128
  %3965 = vxpose.xlu0.b32.end [16/16] 0.0, 128
  %v3966 = vpop.trf.xlu0
  %v3967 = vpop.trf.xlu0
  %v3968 = vpop.trf.xlu0
  %v3969 = vpop.trf.xlu0
  %v3970 = vpop.trf.xlu0
  %v3971 = vpop.trf.xlu0
  %v3972 = vpop.trf.xlu0
  %v3973 = vpop.trf.xlu0
  %v3974 = vpop.trf.xlu0
  %v3975 = vpop.trf.xlu0
  %v3976 = vpop.trf.xlu0
  %v3977 = vpop.trf.xlu0
  %v3978 = vpop.trf.xlu0
  %v3979 = vpop.trf.xlu0
  %v3980 = vpop.trf.xlu0
  %v3981 = vpop.trf.xlu0
  %3982 = vxpose.xlu0.b32.start [1/16] %v543, 128
  %3983 = vxpose.xlu0.b32.cont [2/16] %v544, 128
  %3984 = vxpose.xlu0.b32.cont [3/16] %v545, 128
  %3985 = vxpose.xlu0.b32.cont [4/16] %v546, 128
  %3986 = vxpose.xlu0.b32.cont [5/16] %v547, 128
  %3987 = vxpose.xlu0.b32.cont [6/16] 0.0, 128
  %3988 = vxpose.xlu0.b32.cont [7/16] 0.0, 128
  %3989 = vxpose.xlu0.b32.cont [8/16] 0.0, 128
  %3990 = vxpose.xlu0.b32.cont [9/16] 0.0, 128
  %3991 = vxpose.xlu0.b32.cont [10/16] 0.0, 128
  %3992 = vxpose.xlu0.b32.cont [11/16] 0.0, 128
  %3993 = vxpose.xlu0.b32.cont [12/16] 0.0, 128
  %3994 = vxpose.xlu0.b32.cont [13/16] 0.0, 128
  %3995 = vxpose.xlu0.b32.cont [14/16] 0.0, 128
  %3996 = vxpose.xlu0.b32.cont [15/16] 0.0, 128
  %3997 = vxpose.xlu0.b32.end [16/16] 0.0, 128
  %v3998 = vpop.trf.xlu0
  %v3999 = vpop.trf.xlu0
  %v4000 = vpop.trf.xlu0
  %v4001 = vpop.trf.xlu0
  %v4002 = vpop.trf.xlu0
  %v4003 = vpop.trf.xlu0
  %v4004 = vpop.trf.xlu0
  %v4005 = vpop.trf.xlu0
  %v4006 = vpop.trf.xlu0
  %v4007 = vpop.trf.xlu0
  %v4008 = vpop.trf.xlu0
  %v4009 = vpop.trf.xlu0
  %v4010 = vpop.trf.xlu0
  %v4011 = vpop.trf.xlu0
  %v4012 = vpop.trf.xlu0
  %v4013 = vpop.trf.xlu0
  %4014 = vxpose.xlu0.b32.start [1/16] %v548, 128
  %4015 = vxpose.xlu0.b32.cont [2/16] %v549, 128
  %4016 = vxpose.xlu0.b32.cont [3/16] %v550, 128
  %4017 = vxpose.xlu0.b32.cont [4/16] %v551, 128
  %4018 = vxpose.xlu0.b32.cont [5/16] %v552, 128
  %4019 = vxpose.xlu0.b32.cont [6/16] 0.0, 128
  %4020 = vxpose.xlu0.b32.cont [7/16] 0.0, 128
  %4021 = vxpose.xlu0.b32.cont [8/16] 0.0, 128
  %4022 = vxpose.xlu0.b32.cont [9/16] 0.0, 128
  %4023 = vxpose.xlu0.b32.cont [10/16] 0.0, 128
  %4024 = vxpose.xlu0.b32.cont [11/16] 0.0, 128
  %4025 = vxpose.xlu0.b32.cont [12/16] 0.0, 128
  %4026 = vxpose.xlu0.b32.cont [13/16] 0.0, 128
  %4027 = vxpose.xlu0.b32.cont [14/16] 0.0, 128
  %4028 = vxpose.xlu0.b32.cont [15/16] 0.0, 128
  %4029 = vxpose.xlu0.b32.end [16/16] 0.0, 128
  %v4030 = vpop.trf.xlu0
  %v4031 = vpop.trf.xlu0
  %v4032 = vpop.trf.xlu0
  %v4033 = vpop.trf.xlu0
  %v4034 = vpop.trf.xlu0
  %v4035 = vpop.trf.xlu0
  %v4036 = vpop.trf.xlu0
  %v4037 = vpop.trf.xlu0
  %v4038 = vpop.trf.xlu0
  %v4039 = vpop.trf.xlu0
  %v4040 = vpop.trf.xlu0
  %v4041 = vpop.trf.xlu0
  %v4042 = vpop.trf.xlu0
  %v4043 = vpop.trf.xlu0
  %v4044 = vpop.trf.xlu0
  %v4045 = vpop.trf.xlu0
  %4046 = vxpose.xlu0.b32.start [1/16] %v553, 128
  %4047 = vxpose.xlu0.b32.cont [2/16] %v554, 128
  %4048 = vxpose.xlu0.b32.cont [3/16] %v555, 128
  %4049 = vxpose.xlu0.b32.cont [4/16] %v556, 128
  %4050 = vxpose.xlu0.b32.cont [5/16] %v557, 128
  %4051 = vxpose.xlu0.b32.cont [6/16] 0.0, 128
  %4052 = vxpose.xlu0.b32.cont [7/16] 0.0, 128
  %4053 = vxpose.xlu0.b32.cont [8/16] 0.0, 128
  %4054 = vxpose.xlu0.b32.cont [9/16] 0.0, 128
  %4055 = vxpose.xlu0.b32.cont [10/16] 0.0, 128
  %4056 = vxpose.xlu0.b32.cont [11/16] 0.0, 128
  %4057 = vxpose.xlu0.b32.cont [12/16] 0.0, 128
  %4058 = vxpose.xlu0.b32.cont [13/16] 0.0, 128
  %4059 = vxpose.xlu0.b32.cont [14/16] 0.0, 128
  %4060 = vxpose.xlu0.b32.cont [15/16] 0.0, 128
  %4061 = vxpose.xlu0.b32.end [16/16] 0.0, 128
  %v4062 = vpop.trf.xlu0
  %v4063 = vpop.trf.xlu0
  %v4064 = vpop.trf.xlu0
  %v4065 = vpop.trf.xlu0
  %v4066 = vpop.trf.xlu0
  %v4067 = vpop.trf.xlu0
  %v4068 = vpop.trf.xlu0
  %v4069 = vpop.trf.xlu0
  %v4070 = vpop.trf.xlu0
  %v4071 = vpop.trf.xlu0
  %v4072 = vpop.trf.xlu0
  %v4073 = vpop.trf.xlu0
  %v4074 = vpop.trf.xlu0
  %v4075 = vpop.trf.xlu0
  %v4076 = vpop.trf.xlu0
  %v4077 = vpop.trf.xlu0
  %v4188 = vrot.slane %v606, 7
  %vm4189 = vcmask 1041409
  %v4190 = vsel %vm4189, %v4188, %v574
  %v4191 = vrot.slane %v638, 6
  %vm4192 = vcmask 1042434
  %v4193 = vsel %vm4192, %v4191, %v4190
  %v4194 = vrot.slane %v670, 5
  %vm4195 = vcmask 1043459
  %v4196 = vsel %vm4195, %v4194, %v4193
  %v4197 = vrot.slane %v702, 4
  %vm4198 = vcmask 1044484
  %v4199 = vsel %vm4198, %v4197, %v4196
  %v4200 = vrot.slane %v734, 3
  %vm4201 = vcmask 1045509
  %v4202 = vsel %vm4201, %v4200, %v4199
  %v4203 = vrot.slane %v766, 2
  %vm4204 = vcmask 1046534
  %v4205 = vsel %vm4204, %v4203, %v4202
  %v4206 = vrot.slane %v798, 1
  %vm4207 = vcmask 1047559
  %v4208 = vsel %vm4207, %v4206, %v4205
  %v4209 = vrot.slane %v862, 7
  %v4210 = vsel %vm4189, %v4209, %v830
  %v4211 = vrot.slane %v894, 6
  %v4212 = vsel %vm4192, %v4211, %v4210
  %v4213 = vrot.slane %v926, 5
  %v4214 = vsel %vm4195, %v4213, %v4212
  %v4215 = vrot.slane %v958, 4
  %v4216 = vsel %vm4198, %v4215, %v4214
  %v4217 = vrot.slane %v990, 3
  %v4218 = vsel %vm4201, %v4217, %v4216
  %v4219 = vrot.slane %v1022, 2
  %v4220 = vsel %vm4204, %v4219, %v4218
  %v4221 = vrot.slane %v1054, 1
  %v4222 = vsel %vm4207, %v4221, %v4220
  %v4223 = vrot.slane %v1118, 7
  %v4224 = vsel %vm4189, %v4223, %v1086
  %v4225 = vrot.slane %v1150, 6
  %v4226 = vsel %vm4192, %v4225, %v4224
  %v4227 = vrot.slane %v1182, 5
  %v4228 = vsel %vm4195, %v4227, %v4226
  %v4229 = vrot.slane %v1214, 4
  %v4230 = vsel %vm4198, %v4229, %v4228
  %v4231 = vrot.slane %v1246, 3
  %v4232 = vsel %vm4201, %v4231, %v4230
  %v4233 = vrot.slane %v1278, 2
  %v4234 = vsel %vm4204, %v4233, %v4232
  %v4235 = vrot.slane %v1310, 1
  %v4236 = vsel %vm4207, %v4235, %v4234
  %v4237 = vrot.slane %v1374, 7
  %v4238 = vsel %vm4189, %v4237, %v1342
  %v4239 = vrot.slane %v1406, 6
  %v4240 = vsel %vm4192, %v4239, %v4238
  %v4241 = vrot.slane %v1438, 5
  %v4242 = vsel %vm4195, %v4241, %v4240
  %v4243 = vrot.slane %v1470, 4
  %v4244 = vsel %vm4198, %v4243, %v4242
  %v4245 = vrot.slane %v1502, 3
  %v4246 = vsel %vm4201, %v4245, %v4244
  %v4247 = vrot.slane %v1534, 2
  %v4248 = vsel %vm4204, %v4247, %v4246
  %v4249 = vrot.slane %v1566, 1
  %v4250 = vsel %vm4207, %v4249, %v4248
  %v4251 = vrot.slane %v1630, 7
  %v4252 = vsel %vm4189, %v4251, %v1598
  %v4253 = vrot.slane %v1662, 6
  %v4254 = vsel %vm4192, %v4253, %v4252
  %v4255 = vrot.slane %v1694, 5
  %v4256 = vsel %vm4195, %v4255, %v4254
  %v4257 = vrot.slane %v1726, 4
  %v4258 = vsel %vm4198, %v4257, %v4256
  %v4259 = vrot.slane %v1758, 3
  %v4260 = vsel %vm4201, %v4259, %v4258
  %v4261 = vrot.slane %v1790, 2
  %v4262 = vsel %vm4204, %v4261, %v4260
  %v4263 = vrot.slane %v1822, 1
  %v4264 = vsel %vm4207, %v4263, %v4262
  %v4265 = vrot.slane %v1886, 7
  %v4266 = vsel %vm4189, %v4265, %v1854
  %v4267 = vrot.slane %v1918, 6
  %v4268 = vsel %vm4192, %v4267, %v4266
  %v4269 = vrot.slane %v1950, 5
  %v4270 = vsel %vm4195, %v4269, %v4268
  %v4271 = vrot.slane %v1982, 4
  %v4272 = vsel %vm4198, %v4271, %v4270
  %v4273 = vrot.slane %v2014, 3
  %v4274 = vsel %vm4201, %v4273, %v4272
  %v4275 = vrot.slane %v2046, 2
  %v4276 = vsel %vm4204, %v4275, %v4274
  %v4277 = vrot.slane %v2078, 1
  %v4278 = vsel %vm4207, %v4277, %v4276
  %v4279 = vrot.slane %v2142, 7
  %v4280 = vsel %vm4189, %v4279, %v2110
  %v4281 = vrot.slane %v2174, 6
  %v4282 = vsel %vm4192, %v4281, %v4280
  %v4283 = vrot.slane %v2206, 5
  %v4284 = vsel %vm4195, %v4283, %v4282
  %v4285 = vrot.slane %v2238, 4
  %v4286 = vsel %vm4198, %v4285, %v4284
  %v4287 = vrot.slane %v2270, 3
  %v4288 = vsel %vm4201, %v4287, %v4286
  %v4289 = vrot.slane %v2302, 2
  %v4290 = vsel %vm4204, %v4289, %v4288
  %v4291 = vrot.slane %v2334, 1
  %v4292 = vsel %vm4207, %v4291, %v4290
  %v4293 = vrot.slane %v2398, 7
  %v4294 = vsel %vm4189, %v4293, %v2366
  %v4295 = vrot.slane %v2430, 6
  %v4296 = vsel %vm4192, %v4295, %v4294
  %v4297 = vrot.slane %v2462, 5
  %v4298 = vsel %vm4195, %v4297, %v4296
  %v4299 = vrot.slane %v2494, 4
  %v4300 = vsel %vm4198, %v4299, %v4298
  %v4301 = vrot.slane %v2526, 3
  %v4302 = vsel %vm4201, %v4301, %v4300
  %v4303 = vrot.slane %v2558, 2
  %v4304 = vsel %vm4204, %v4303, %v4302
  %v4305 = vrot.slane %v2590, 1
  %v4306 = vsel %vm4207, %v4305, %v4304
  %v4307 = vrot.slane %v2654, 7
  %v4308 = vsel %vm4189, %v4307, %v2622
  %v4309 = vrot.slane %v2686, 6
  %v4310 = vsel %vm4192, %v4309, %v4308
  %v4311 = vrot.slane %v2718, 5
  %v4312 = vsel %vm4195, %v4311, %v4310
  %v4313 = vrot.slane %v2750, 4
  %v4314 = vsel %vm4198, %v4313, %v4312
  %v4315 = vrot.slane %v2782, 3
  %v4316 = vsel %vm4201, %v4315, %v4314
  %v4317 = vrot.slane %v2814, 2
  %v4318 = vsel %vm4204, %v4317, %v4316
  %v4319 = vrot.slane %v2846, 1
  %v4320 = vsel %vm4207, %v4319, %v4318
  %v4321 = vrot.slane %v2910, 7
  %v4322 = vsel %vm4189, %v4321, %v2878
  %v4323 = vrot.slane %v2942, 6
  %v4324 = vsel %vm4192, %v4323, %v4322
  %v4325 = vrot.slane %v2974, 5
  %v4326 = vsel %vm4195, %v4325, %v4324
  %v4327 = vrot.slane %v3006, 4
  %v4328 = vsel %vm4198, %v4327, %v4326
  %v4329 = vrot.slane %v3038, 3
  %v4330 = vsel %vm4201, %v4329, %v4328
  %v4331 = vrot.slane %v3070, 2
  %v4332 = vsel %vm4204, %v4331, %v4330
  %v4333 = vrot.slane %v3102, 1
  %v4334 = vsel %vm4207, %v4333, %v4332
  %v4335 = vrot.slane %v3166, 7
  %v4336 = vsel %vm4189, %v4335, %v3134
  %v4337 = vrot.slane %v3198, 6
  %v4338 = vsel %vm4192, %v4337, %v4336
  %v4339 = vrot.slane %v3230, 5
  %v4340 = vsel %vm4195, %v4339, %v4338
  %v4341 = vrot.slane %v3262, 4
  %v4342 = vsel %vm4198, %v4341, %v4340
  %v4343 = vrot.slane %v3294, 3
  %v4344 = vsel %vm4201, %v4343, %v4342
  %v4345 = vrot.slane %v3326, 2
  %v4346 = vsel %vm4204, %v4345, %v4344
  %v4347 = vrot.slane %v3358, 1
  %v4348 = vsel %vm4207, %v4347, %v4346
  %v4349 = vrot.slane %v3422, 7
  %v4350 = vsel %vm4189, %v4349, %v3390
  %v4351 = vrot.slane %v3454, 6
  %v4352 = vsel %vm4192, %v4351, %v4350
  %v4353 = vrot.slane %v3486, 5
  %v4354 = vsel %vm4195, %v4353, %v4352
  %v4355 = vrot.slane %v3518, 4
  %v4356 = vsel %vm4198, %v4355, %v4354
  %v4357 = vrot.slane %v3550, 3
  %v4358 = vsel %vm4201, %v4357, %v4356
  %v4359 = vrot.slane %v3582, 2
  %v4360 = vsel %vm4204, %v4359, %v4358
  %v4361 = vrot.slane %v3614, 1
  %v4362 = vsel %vm4207, %v4361, %v4360
  %v4363 = vrot.slane %v3678, 7
  %v4364 = vsel %vm4189, %v4363, %v3646
  %v4365 = vrot.slane %v3710, 6
  %v4366 = vsel %vm4192, %v4365, %v4364
  %v4367 = vrot.slane %v3742, 5
  %v4368 = vsel %vm4195, %v4367, %v4366
  %v4369 = vrot.slane %v3774, 4
  %v4370 = vsel %vm4198, %v4369, %v4368
  %v4371 = vrot.slane %v3806, 3
  %v4372 = vsel %vm4201, %v4371, %v4370
  %v4373 = vrot.slane %v3838, 2
  %v4374 = vsel %vm4204, %v4373, %v4372
  %v4375 = vrot.slane %v3870, 1
  %v4376 = vsel %vm4207, %v4375, %v4374
  %v4377 = vrot.slane %v3934, 7
  %v4378 = vsel %vm4189, %v4377, %v3902
  %v4379 = vrot.slane %v3966, 6
  %v4380 = vsel %vm4192, %v4379, %v4378
  %v4381 = vrot.slane %v3998, 5
  %v4382 = vsel %vm4195, %v4381, %v4380
  %v4383 = vrot.slane %v4030, 4
  %v4384 = vsel %vm4198, %v4383, %v4382
  %v4385 = vrot.slane %v4062, 3
  %v4386 = vsel %vm4201, %v4385, %v4384
  %vm4401 = vcmask 285696
  %4402 = vst.msk [vmem:[%s1] sm:$0xff] %vm4401, %v4208
  %4403 = vst.msk [vmem:[%s1 + $0x10] sm:$0xff] %vm4401, %v4222
  %4404 = vst.msk [vmem:[%s1 + $0x20] sm:$0xff] %vm4401, %v4236
  %4405 = vst.msk [vmem:[%s1 + $0x30] sm:$0xff] %vm4401, %v4250
  %4406 = vst.msk [vmem:[%s1 + $0x40] sm:$0xff] %vm4401, %v4264
  %4407 = vst.msk [vmem:[%s1 + $0x50] sm:$0xff] %vm4401, %v4278
  %4408 = vst.msk [vmem:[%s1 + $0x60] sm:$0xff] %vm4401, %v4292
  %4409 = vst.msk [vmem:[%s1 + $0x70] sm:$0xff] %vm4401, %v4306
  %4410 = vst.msk [vmem:[%s1 + $0x80] sm:$0xff] %vm4401, %v4320
  %4411 = vst.msk [vmem:[%s1 + $0x90] sm:$0xff] %vm4401, %v4334
  %4412 = vst.msk [vmem:[%s1 + $0xa0] sm:$0xff] %vm4401, %v4348
  %4413 = vst.msk [vmem:[%s1 + $0xb0] sm:$0xff] %vm4401, %v4362
  %4414 = vst.msk [vmem:[%s1 + $0xc0] sm:$0xff] %vm4401, %v4376
  %vm4415 = vcmask 283648
  %4416 = vst.msk [vmem:[%s1 + $0xd0] sm:$0x3f] %vm4415, %v4386
  %v4417 = vrot.slane %v574, 1
  %v4418 = vsel %vm4189, %v606, %v4417
  %v4419 = vrot.slane %v638, 7
  %v4420 = vsel %vm4192, %v4419, %v4418
  %v4421 = vrot.slane %v670, 6
  %v4422 = vsel %vm4195, %v4421, %v4420
  %v4423 = vrot.slane %v702, 5
  %v4424 = vsel %vm4198, %v4423, %v4422
  %v4425 = vrot.slane %v734, 4
  %v4426 = vsel %vm4201, %v4425, %v4424
  %v4427 = vrot.slane %v766, 3
  %v4428 = vsel %vm4204, %v4427, %v4426
  %v4429 = vrot.slane %v798, 2
  %v4430 = vsel %vm4207, %v4429, %v4428
  %v4431 = vrot.slane %v830, 1
  %v4432 = vsel %vm4189, %v862, %v4431
  %v4433 = vrot.slane %v894, 7
  %v4434 = vsel %vm4192, %v4433, %v4432
  %v4435 = vrot.slane %v926, 6
  %v4436 = vsel %vm4195, %v4435, %v4434
  %v4437 = vrot.slane %v958, 5
  %v4438 = vsel %vm4198, %v4437, %v4436
  %v4439 = vrot.slane %v990, 4
  %v4440 = vsel %vm4201, %v4439, %v4438
  %v4441 = vrot.slane %v1022, 3
  %v4442 = vsel %vm4204, %v4441, %v4440
  %v4443 = vrot.slane %v1054, 2
  %v4444 = vsel %vm4207, %v4443, %v4442
  %v4445 = vrot.slane %v1086, 1
  %v4446 = vsel %vm4189, %v1118, %v4445
  %v4447 = vrot.slane %v1150, 7
  %v4448 = vsel %vm4192, %v4447, %v4446
  %v4449 = vrot.slane %v1182, 6
  %v4450 = vsel %vm4195, %v4449, %v4448
  %v4451 = vrot.slane %v1214, 5
  %v4452 = vsel %vm4198, %v4451, %v4450
  %v4453 = vrot.slane %v1246, 4
  %v4454 = vsel %vm4201, %v4453, %v4452
  %v4455 = vrot.slane %v1278, 3
  %v4456 = vsel %vm4204, %v4455, %v4454
  %v4457 = vrot.slane %v1310, 2
  %v4458 = vsel %vm4207, %v4457, %v4456
  %v4459 = vrot.slane %v1342, 1
  %v4460 = vsel %vm4189, %v1374, %v4459
  %v4461 = vrot.slane %v1406, 7
  %v4462 = vsel %vm4192, %v4461, %v4460
  %v4463 = vrot.slane %v1438, 6
  %v4464 = vsel %vm4195, %v4463, %v4462
  %v4465 = vrot.slane %v1470, 5
  %v4466 = vsel %vm4198, %v4465, %v4464
  %v4467 = vrot.slane %v1502, 4
  %v4468 = vsel %vm4201, %v4467, %v4466
  %v4469 = vrot.slane %v1534, 3
  %v4470 = vsel %vm4204, %v4469, %v4468
  %v4471 = vrot.slane %v1566, 2
  %v4472 = vsel %vm4207, %v4471, %v4470
  %v4473 = vrot.slane %v1598, 1
  %v4474 = vsel %vm4189, %v1630, %v4473
  %v4475 = vrot.slane %v1662, 7
  %v4476 = vsel %vm4192, %v4475, %v4474
  %v4477 = vrot.slane %v1694, 6
  %v4478 = vsel %vm4195, %v4477, %v4476
  %v4479 = vrot.slane %v1726, 5
  %v4480 = vsel %vm4198, %v4479, %v4478
  %v4481 = vrot.slane %v1758, 4
  %v4482 = vsel %vm4201, %v4481, %v4480
  %v4483 = vrot.slane %v1790, 3
  %v4484 = vsel %vm4204, %v4483, %v4482
  %v4485 = vrot.slane %v1822, 2
  %v4486 = vsel %vm4207, %v4485, %v4484
  %v4487 = vrot.slane %v1854, 1
  %v4488 = vsel %vm4189, %v1886, %v4487
  %v4489 = vrot.slane %v1918, 7
  %v4490 = vsel %vm4192, %v4489, %v4488
  %v4491 = vrot.slane %v1950, 6
  %v4492 = vsel %vm4195, %v4491, %v4490
  %v4493 = vrot.slane %v1982, 5
  %v4494 = vsel %vm4198, %v4493, %v4492
  %v4495 = vrot.slane %v2014, 4
  %v4496 = vsel %vm4201, %v4495, %v4494
  %v4497 = vrot.slane %v2046, 3
  %v4498 = vsel %vm4204, %v4497, %v4496
  %v4499 = vrot.slane %v2078, 2
  %v4500 = vsel %vm4207, %v4499, %v4498
  %v4501 = vrot.slane %v2110, 1
  %v4502 = vsel %vm4189, %v2142, %v4501
  %v4503 = vrot.slane %v2174, 7
  %v4504 = vsel %vm4192, %v4503, %v4502
  %v4505 = vrot.slane %v2206, 6
  %v4506 = vsel %vm4195, %v4505, %v4504
  %v4507 = vrot.slane %v2238, 5
  %v4508 = vsel %vm4198, %v4507, %v4506
  %v4509 = vrot.slane %v2270, 4
  %v4510 = vsel %vm4201, %v4509, %v4508
  %v4511 = vrot.slane %v2302, 3
  %v4512 = vsel %vm4204, %v4511, %v4510
  %v4513 = vrot.slane %v2334, 2
  %v4514 = vsel %vm4207, %v4513, %v4512
  %v4515 = vrot.slane %v2366, 1
  %v4516 = vsel %vm4189, %v2398, %v4515
  %v4517 = vrot.slane %v2430, 7
  %v4518 = vsel %vm4192, %v4517, %v4516
  %v4519 = vrot.slane %v2462, 6
  %v4520 = vsel %vm4195, %v4519, %v4518
  %v4521 = vrot.slane %v2494, 5
  %v4522 = vsel %vm4198, %v4521, %v4520
  %v4523 = vrot.slane %v2526, 4
  %v4524 = vsel %vm4201, %v4523, %v4522
  %v4525 = vrot.slane %v2558, 3
  %v4526 = vsel %vm4204, %v4525, %v4524
  %v4527 = vrot.slane %v2590, 2
  %v4528 = vsel %vm4207, %v4527, %v4526
  %v4529 = vrot.slane %v2622, 1
  %v4530 = vsel %vm4189, %v2654, %v4529
  %v4531 = vrot.slane %v2686, 7
  %v4532 = vsel %vm4192, %v4531, %v4530
  %v4533 = vrot.slane %v2718, 6
  %v4534 = vsel %vm4195, %v4533, %v4532
  %v4535 = vrot.slane %v2750, 5
  %v4536 = vsel %vm4198, %v4535, %v4534
  %v4537 = vrot.slane %v2782, 4
  %v4538 = vsel %vm4201, %v4537, %v4536
  %v4539 = vrot.slane %v2814, 3
  %v4540 = vsel %vm4204, %v4539, %v4538
  %v4541 = vrot.slane %v2846, 2
  %v4542 = vsel %vm4207, %v4541, %v4540
  %v4543 = vrot.slane %v2878, 1
  %v4544 = vsel %vm4189, %v2910, %v4543
  %v4545 = vrot.slane %v2942, 7
  %v4546 = vsel %vm4192, %v4545, %v4544
  %v4547 = vrot.slane %v2974, 6
  %v4548 = vsel %vm4195, %v4547, %v4546
  %v4549 = vrot.slane %v3006, 5
  %v4550 = vsel %vm4198, %v4549, %v4548
  %v4551 = vrot.slane %v3038, 4
  %v4552 = vsel %vm4201, %v4551, %v4550
  %v4553 = vrot.slane %v3070, 3
  %v4554 = vsel %vm4204, %v4553, %v4552
  %v4555 = vrot.slane %v3102, 2
  %v4556 = vsel %vm4207, %v4555, %v4554
  %v4557 = vrot.slane %v3134, 1
  %v4558 = vsel %vm4189, %v3166, %v4557
  %v4559 = vrot.slane %v3198, 7
  %v4560 = vsel %vm4192, %v4559, %v4558
  %v4561 = vrot.slane %v3230, 6
  %v4562 = vsel %vm4195, %v4561, %v4560
  %v4563 = vrot.slane %v3262, 5
  %v4564 = vsel %vm4198, %v4563, %v4562
  %v4565 = vrot.slane %v3294, 4
  %v4566 = vsel %vm4201, %v4565, %v4564
  %v4567 = vrot.slane %v3326, 3
  %v4568 = vsel %vm4204, %v4567, %v4566
  %v4569 = vrot.slane %v3358, 2
  %v4570 = vsel %vm4207, %v4569, %v4568
  %v4571 = vrot.slane %v3390, 1
  %v4572 = vsel %vm4189, %v3422, %v4571
  %v4573 = vrot.slane %v3454, 7
  %v4574 = vsel %vm4192, %v4573, %v4572
  %v4575 = vrot.slane %v3486, 6
  %v4576 = vsel %vm4195, %v4575, %v4574
  %v4577 = vrot.slane %v3518, 5
  %v4578 = vsel %vm4198, %v4577, %v4576
  %v4579 = vrot.slane %v3550, 4
  %v4580 = vsel %vm4201, %v4579, %v4578
  %v4581 = vrot.slane %v3582, 3
  %v4582 = vsel %vm4204, %v4581, %v4580
  %v4583 = vrot.slane %v3614, 2
  %v4584 = vsel %vm4207, %v4583, %v4582
  %v4585 = vrot.slane %v3646, 1
  %v4586 = vsel %vm4189, %v3678, %v4585
  %v4587 = vrot.slane %v3710, 7
  %v4588 = vsel %vm4192, %v4587, %v4586
  %v4589 = vrot.slane %v3742, 6
  %v4590 = vsel %vm4195, %v4589, %v4588
  %v4591 = vrot.slane %v3774, 5
  %v4592 = vsel %vm4198, %v4591, %v4590
  %v4593 = vrot.slane %v3806, 4
  %v4594 = vsel %vm4201, %v4593, %v4592
  %v4595 = vrot.slane %v3838, 3
  %v4596 = vsel %vm4204, %v4595, %v4594
  %v4597 = vrot.slane %v3870, 2
  %v4598 = vsel %vm4207, %v4597, %v4596
  %v4599 = vrot.slane %v3902, 1
  %v4600 = vsel %vm4189, %v3934, %v4599
  %v4601 = vrot.slane %v3966, 7
  %v4602 = vsel %vm4192, %v4601, %v4600
  %v4603 = vrot.slane %v3998, 6
  %v4604 = vsel %vm4195, %v4603, %v4602
  %v4605 = vrot.slane %v4030, 5
  %v4606 = vsel %vm4198, %v4605, %v4604
  %v4607 = vrot.slane %v4062, 4
  %v4608 = vsel %vm4201, %v4607, %v4606
  %4609 = vrot.lane.b32.xlu0 %v4430, 35
  %v4610 = vpop.permute.xlu0 %4609
  %4611 = vrot.lane.b32.xlu0 %v4444, 35
  %v4612 = vpop.permute.xlu0 %4611
  %4613 = vrot.lane.b32.xlu0 %v4458, 35
  %v4614 = vpop.permute.xlu0 %4613
  %4615 = vrot.lane.b32.xlu0 %v4472, 35
  %v4616 = vpop.permute.xlu0 %4615
  %4617 = vrot.lane.b32.xlu0 %v4486, 35
  %v4618 = vpop.permute.xlu0 %4617
  %4619 = vrot.lane.b32.xlu0 %v4500, 35
  %v4620 = vpop.permute.xlu0 %4619
  %4621 = vrot.lane.b32.xlu0 %v4514, 35
  %v4622 = vpop.permute.xlu0 %4621
  %4623 = vrot.lane.b32.xlu0 %v4528, 35
  %v4624 = vpop.permute.xlu0 %4623
  %4625 = vrot.lane.b32.xlu0 %v4542, 35
  %v4626 = vpop.permute.xlu0 %4625
  %4627 = vrot.lane.b32.xlu0 %v4556, 35
  %v4628 = vpop.permute.xlu0 %4627
  %4629 = vrot.lane.b32.xlu0 %v4570, 35
  %v4630 = vpop.permute.xlu0 %4629
  %4631 = vrot.lane.b32.xlu0 %v4584, 35
  %v4632 = vpop.permute.xlu0 %4631
  %4633 = vrot.lane.b32.xlu0 %v4598, 35
  %v4634 = vpop.permute.xlu0 %4633
  %4635 = vrot.lane.b32.xlu0 %v4608, 35
  %v4636 = vpop.permute.xlu0 %4635
  %vm4651 = vcmask 572696
  %4652 = vst.msk [vmem:[%s1] sm:$0xff] %vm4651, %v4610
  %4653 = vst.msk [vmem:[%s1 + $0x10] sm:$0xff] %vm4651, %v4612
  %4654 = vst.msk [vmem:[%s1 + $0x20] sm:$0xff] %vm4651, %v4614
  %4655 = vst.msk [vmem:[%s1 + $0x30] sm:$0xff] %vm4651, %v4616
  %4656 = vst.msk [vmem:[%s1 + $0x40] sm:$0xff] %vm4651, %v4618
  %4657 = vst.msk [vmem:[%s1 + $0x50] sm:$0xff] %vm4651, %v4620
  %4658 = vst.msk [vmem:[%s1 + $0x60] sm:$0xff] %vm4651, %v4622
  %4659 = vst.msk [vmem:[%s1 + $0x70] sm:$0xff] %vm4651, %v4624
  %4660 = vst.msk [vmem:[%s1 + $0x80] sm:$0xff] %vm4651, %v4626
  %4661 = vst.msk [vmem:[%s1 + $0x90] sm:$0xff] %vm4651, %v4628
  %4662 = vst.msk [vmem:[%s1 + $0xa0] sm:$0xff] %vm4651, %v4630
  %4663 = vst.msk [vmem:[%s1 + $0xb0] sm:$0xff] %vm4651, %v4632
  %4664 = vst.msk [vmem:[%s1 + $0xc0] sm:$0xff] %vm4651, %v4634
  %vm4665 = vcmask 570648
  %4666 = vst.msk [vmem:[%s1 + $0xd0] sm:$0x3f] %vm4665, %v4636
  %v4667 = vrot.slane %v574, 2
  %v4668 = vrot.slane %v606, 1
  %v4669 = vsel %vm4189, %v4668, %v4667
  %v4670 = vsel %vm4192, %v638, %v4669
  %v4671 = vrot.slane %v670, 7
  %v4672 = vsel %vm4195, %v4671, %v4670
  %v4673 = vrot.slane %v702, 6
  %v4674 = vsel %vm4198, %v4673, %v4672
  %v4675 = vrot.slane %v734, 5
  %v4676 = vsel %vm4201, %v4675, %v4674
  %v4677 = vrot.slane %v766, 4
  %v4678 = vsel %vm4204, %v4677, %v4676
  %v4679 = vrot.slane %v798, 3
  %v4680 = vsel %vm4207, %v4679, %v4678
  %v4681 = vrot.slane %v830, 2
  %v4682 = vrot.slane %v862, 1
  %v4683 = vsel %vm4189, %v4682, %v4681
  %v4684 = vsel %vm4192, %v894, %v4683
  %v4685 = vrot.slane %v926, 7
  %v4686 = vsel %vm4195, %v4685, %v4684
  %v4687 = vrot.slane %v958, 6
  %v4688 = vsel %vm4198, %v4687, %v4686
  %v4689 = vrot.slane %v990, 5
  %v4690 = vsel %vm4201, %v4689, %v4688
  %v4691 = vrot.slane %v1022, 4
  %v4692 = vsel %vm4204, %v4691, %v4690
  %v4693 = vrot.slane %v1054, 3
  %v4694 = vsel %vm4207, %v4693, %v4692
  %v4695 = vrot.slane %v1086, 2
  %v4696 = vrot.slane %v1118, 1
  %v4697 = vsel %vm4189, %v4696, %v4695
  %v4698 = vsel %vm4192, %v1150, %v4697
  %v4699 = vrot.slane %v1182, 7
  %v4700 = vsel %vm4195, %v4699, %v4698
  %v4701 = vrot.slane %v1214, 6
  %v4702 = vsel %vm4198, %v4701, %v4700
  %v4703 = vrot.slane %v1246, 5
  %v4704 = vsel %vm4201, %v4703, %v4702
  %v4705 = vrot.slane %v1278, 4
  %v4706 = vsel %vm4204, %v4705, %v4704
  %v4707 = vrot.slane %v1310, 3
  %v4708 = vsel %vm4207, %v4707, %v4706
  %v4709 = vrot.slane %v1342, 2
  %v4710 = vrot.slane %v1374, 1
  %v4711 = vsel %vm4189, %v4710, %v4709
  %v4712 = vsel %vm4192, %v1406, %v4711
  %v4713 = vrot.slane %v1438, 7
  %v4714 = vsel %vm4195, %v4713, %v4712
  %v4715 = vrot.slane %v1470, 6
  %v4716 = vsel %vm4198, %v4715, %v4714
  %v4717 = vrot.slane %v1502, 5
  %v4718 = vsel %vm4201, %v4717, %v4716
  %v4719 = vrot.slane %v1534, 4
  %v4720 = vsel %vm4204, %v4719, %v4718
  %v4721 = vrot.slane %v1566, 3
  %v4722 = vsel %vm4207, %v4721, %v4720
  %v4723 = vrot.slane %v1598, 2
  %v4724 = vrot.slane %v1630, 1
  %v4725 = vsel %vm4189, %v4724, %v4723
  %v4726 = vsel %vm4192, %v1662, %v4725
  %v4727 = vrot.slane %v1694, 7
  %v4728 = vsel %vm4195, %v4727, %v4726
  %v4729 = vrot.slane %v1726, 6
  %v4730 = vsel %vm4198, %v4729, %v4728
  %v4731 = vrot.slane %v1758, 5
  %v4732 = vsel %vm4201, %v4731, %v4730
  %v4733 = vrot.slane %v1790, 4
  %v4734 = vsel %vm4204, %v4733, %v4732
  %v4735 = vrot.slane %v1822, 3
  %v4736 = vsel %vm4207, %v4735, %v4734
  %v4737 = vrot.slane %v1854, 2
  %v4738 = vrot.slane %v1886, 1
  %v4739 = vsel %vm4189, %v4738, %v4737
  %v4740 = vsel %vm4192, %v1918, %v4739
  %v4741 = vrot.slane %v1950, 7
  %v4742 = vsel %vm4195, %v4741, %v4740
  %v4743 = vrot.slane %v1982, 6
  %v4744 = vsel %vm4198, %v4743, %v4742
  %v4745 = vrot.slane %v2014, 5
  %v4746 = vsel %vm4201, %v4745, %v4744
  %v4747 = vrot.slane %v2046, 4
  %v4748 = vsel %vm4204, %v4747, %v4746
  %v4749 = vrot.slane %v2078, 3
  %v4750 = vsel %vm4207, %v4749, %v4748
  %v4751 = vrot.slane %v2110, 2
  %v4752 = vrot.slane %v2142, 1
  %v4753 = vsel %vm4189, %v4752, %v4751
  %v4754 = vsel %vm4192, %v2174, %v4753
  %v4755 = vrot.slane %v2206, 7
  %v4756 = vsel %vm4195, %v4755, %v4754
  %v4757 = vrot.slane %v2238, 6
  %v4758 = vsel %vm4198, %v4757, %v4756
  %v4759 = vrot.slane %v2270, 5
  %v4760 = vsel %vm4201, %v4759, %v4758
  %v4761 = vrot.slane %v2302, 4
  %v4762 = vsel %vm4204, %v4761, %v4760
  %v4763 = vrot.slane %v2334, 3
  %v4764 = vsel %vm4207, %v4763, %v4762
  %v4765 = vrot.slane %v2366, 2
  %v4766 = vrot.slane %v2398, 1
  %v4767 = vsel %vm4189, %v4766, %v4765
  %v4768 = vsel %vm4192, %v2430, %v4767
  %v4769 = vrot.slane %v2462, 7
  %v4770 = vsel %vm4195, %v4769, %v4768
  %v4771 = vrot.slane %v2494, 6
  %v4772 = vsel %vm4198, %v4771, %v4770
  %v4773 = vrot.slane %v2526, 5
  %v4774 = vsel %vm4201, %v4773, %v4772
  %v4775 = vrot.slane %v2558, 4
  %v4776 = vsel %vm4204, %v4775, %v4774
  %v4777 = vrot.slane %v2590, 3
  %v4778 = vsel %vm4207, %v4777, %v4776
  %v4779 = vrot.slane %v2622, 2
  %v4780 = vrot.slane %v2654, 1
  %v4781 = vsel %vm4189, %v4780, %v4779
  %v4782 = vsel %vm4192, %v2686, %v4781
  %v4783 = vrot.slane %v2718, 7
  %v4784 = vsel %vm4195, %v4783, %v4782
  %v4785 = vrot.slane %v2750, 6
  %v4786 = vsel %vm4198, %v4785, %v4784
  %v4787 = vrot.slane %v2782, 5
  %v4788 = vsel %vm4201, %v4787, %v4786
  %v4789 = vrot.slane %v2814, 4
  %v4790 = vsel %vm4204, %v4789, %v4788
  %v4791 = vrot.slane %v2846, 3
  %v4792 = vsel %vm4207, %v4791, %v4790
  %v4793 = vrot.slane %v2878, 2
  %v4794 = vrot.slane %v2910, 1
  %v4795 = vsel %vm4189, %v4794, %v4793
  %v4796 = vsel %vm4192, %v2942, %v4795
  %v4797 = vrot.slane %v2974, 7
  %v4798 = vsel %vm4195, %v4797, %v4796
  %v4799 = vrot.slane %v3006, 6
  %v4800 = vsel %vm4198, %v4799, %v4798
  %v4801 = vrot.slane %v3038, 5
  %v4802 = vsel %vm4201, %v4801, %v4800
  %v4803 = vrot.slane %v3070, 4
  %v4804 = vsel %vm4204, %v4803, %v4802
  %v4805 = vrot.slane %v3102, 3
  %v4806 = vsel %vm4207, %v4805, %v4804
  %v4807 = vrot.slane %v3134, 2
  %v4808 = vrot.slane %v3166, 1
  %v4809 = vsel %vm4189, %v4808, %v4807
  %v4810 = vsel %vm4192, %v3198, %v4809
  %v4811 = vrot.slane %v3230, 7
  %v4812 = vsel %vm4195, %v4811, %v4810
  %v4813 = vrot.slane %v3262, 6
  %v4814 = vsel %vm4198, %v4813, %v4812
  %v4815 = vrot.slane %v3294, 5
  %v4816 = vsel %vm4201, %v4815, %v4814
  %v4817 = vrot.slane %v3326, 4
  %v4818 = vsel %vm4204, %v4817, %v4816
  %v4819 = vrot.slane %v3358, 3
  %v4820 = vsel %vm4207, %v4819, %v4818
  %v4821 = vrot.slane %v3390, 2
  %v4822 = vrot.slane %v3422, 1
  %v4823 = vsel %vm4189, %v4822, %v4821
  %v4824 = vsel %vm4192, %v3454, %v4823
  %v4825 = vrot.slane %v3486, 7
  %v4826 = vsel %vm4195, %v4825, %v4824
  %v4827 = vrot.slane %v3518, 6
  %v4828 = vsel %vm4198, %v4827, %v4826
  %v4829 = vrot.slane %v3550, 5
  %v4830 = vsel %vm4201, %v4829, %v4828
  %v4831 = vrot.slane %v3582, 4
  %v4832 = vsel %vm4204, %v4831, %v4830
  %v4833 = vrot.slane %v3614, 3
  %v4834 = vsel %vm4207, %v4833, %v4832
  %v4835 = vrot.slane %v3646, 2
  %v4836 = vrot.slane %v3678, 1
  %v4837 = vsel %vm4189, %v4836, %v4835
  %v4838 = vsel %vm4192, %v3710, %v4837
  %v4839 = vrot.slane %v3742, 7
  %v4840 = vsel %vm4195, %v4839, %v4838
  %v4841 = vrot.slane %v3774, 6
  %v4842 = vsel %vm4198, %v4841, %v4840
  %v4843 = vrot.slane %v3806, 5
  %v4844 = vsel %vm4201, %v4843, %v4842
  %v4845 = vrot.slane %v3838, 4
  %v4846 = vsel %vm4204, %v4845, %v4844
  %v4847 = vrot.slane %v3870, 3
  %v4848 = vsel %vm4207, %v4847, %v4846
  %v4849 = vrot.slane %v3902, 2
  %v4850 = vrot.slane %v3934, 1
  %v4851 = vsel %vm4189, %v4850, %v4849
  %v4852 = vsel %vm4192, %v3966, %v4851
  %v4853 = vrot.slane %v3998, 7
  %v4854 = vsel %vm4195, %v4853, %v4852
  %v4855 = vrot.slane %v4030, 6
  %v4856 = vsel %vm4198, %v4855, %v4854
  %v4857 = vrot.slane %v4062, 5
  %v4858 = vsel %vm4201, %v4857, %v4856
  %4859 = vrot.lane.b32.xlu0 %v4680, 70
  %v4860 = vpop.permute.xlu0 %4859
  %4861 = vrot.lane.b32.xlu0 %v4694, 70
  %v4862 = vpop.permute.xlu0 %4861
  %4863 = vrot.lane.b32.xlu0 %v4708, 70
  %v4864 = vpop.permute.xlu0 %4863
  %4865 = vrot.lane.b32.xlu0 %v4722, 70
  %v4866 = vpop.permute.xlu0 %4865
  %4867 = vrot.lane.b32.xlu0 %v4736, 70
  %v4868 = vpop.permute.xlu0 %4867
  %4869 = vrot.lane.b32.xlu0 %v4750, 70
  %v4870 = vpop.permute.xlu0 %4869
  %4871 = vrot.lane.b32.xlu0 %v4764, 70
  %v4872 = vpop.permute.xlu0 %4871
  %4873 = vrot.lane.b32.xlu0 %v4778, 70
  %v4874 = vpop.permute.xlu0 %4873
  %4875 = vrot.lane.b32.xlu0 %v4792, 70
  %v4876 = vpop.permute.xlu0 %4875
  %4877 = vrot.lane.b32.xlu0 %v4806, 70
  %v4878 = vpop.permute.xlu0 %4877
  %4879 = vrot.lane.b32.xlu0 %v4820, 70
  %v4880 = vpop.permute.xlu0 %4879
  %4881 = vrot.lane.b32.xlu0 %v4834, 70
  %v4882 = vpop.permute.xlu0 %4881
  %4883 = vrot.lane.b32.xlu0 %v4848, 70
  %v4884 = vpop.permute.xlu0 %4883
  %4885 = vrot.lane.b32.xlu0 %v4858, 70
  %v4886 = vpop.permute.xlu0 %4885
  %vm4901 = vcmask 859696
  %4902 = vst.msk [vmem:[%s1] sm:$0xff] %vm4901, %v4860
  %4903 = vst.msk [vmem:[%s1 + $0x10] sm:$0xff] %vm4901, %v4862
  %4904 = vst.msk [vmem:[%s1 + $0x20] sm:$0xff] %vm4901, %v4864
  %4905 = vst.msk [vmem:[%s1 + $0x30] sm:$0xff] %vm4901, %v4866
  %4906 = vst.msk [vmem:[%s1 + $0x40] sm:$0xff] %vm4901, %v4868
  %4907 = vst.msk [vmem:[%s1 + $0x50] sm:$0xff] %vm4901, %v4870
  %4908 = vst.msk [vmem:[%s1 + $0x60] sm:$0xff] %vm4901, %v4872
  %4909 = vst.msk [vmem:[%s1 + $0x70] sm:$0xff] %vm4901, %v4874
  %4910 = vst.msk [vmem:[%s1 + $0x80] sm:$0xff] %vm4901, %v4876
  %4911 = vst.msk [vmem:[%s1 + $0x90] sm:$0xff] %vm4901, %v4878
  %4912 = vst.msk [vmem:[%s1 + $0xa0] sm:$0xff] %vm4901, %v4880
  %4913 = vst.msk [vmem:[%s1 + $0xb0] sm:$0xff] %vm4901, %v4882
  %4914 = vst.msk [vmem:[%s1 + $0xc0] sm:$0xff] %vm4901, %v4884
  %vm4915 = vcmask 857648
  %4916 = vst.msk [vmem:[%s1 + $0xd0] sm:$0x3f] %vm4915, %v4886
  %v4917 = vrot.slane %v574, 3
  %v4918 = vrot.slane %v606, 2
  %v4919 = vsel %vm4189, %v4918, %v4917
  %v4920 = vrot.slane %v638, 1
  %v4921 = vsel %vm4192, %v4920, %v4919
  %v4922 = vsel %vm4195, %v670, %v4921
  %v4923 = vrot.slane %v702, 7
  %v4924 = vsel %vm4198, %v4923, %v4922
  %v4925 = vrot.slane %v734, 6
  %v4926 = vsel %vm4201, %v4925, %v4924
  %v4927 = vrot.slane %v766, 5
  %v4928 = vsel %vm4204, %v4927, %v4926
  %v4929 = vrot.slane %v798, 4
  %v4930 = vsel %vm4207, %v4929, %v4928
  %v4931 = vrot.slane %v830, 3
  %v4932 = vrot.slane %v862, 2
  %v4933 = vsel %vm4189, %v4932, %v4931
  %v4934 = vrot.slane %v894, 1
  %v4935 = vsel %vm4192, %v4934, %v4933
  %v4936 = vsel %vm4195, %v926, %v4935
  %v4937 = vrot.slane %v958, 7
  %v4938 = vsel %vm4198, %v4937, %v4936
  %v4939 = vrot.slane %v990, 6
  %v4940 = vsel %vm4201, %v4939, %v4938
  %v4941 = vrot.slane %v1022, 5
  %v4942 = vsel %vm4204, %v4941, %v4940
  %v4943 = vrot.slane %v1054, 4
  %v4944 = vsel %vm4207, %v4943, %v4942
  %v4945 = vrot.slane %v1086, 3
  %v4946 = vrot.slane %v1118, 2
  %v4947 = vsel %vm4189, %v4946, %v4945
  %v4948 = vrot.slane %v1150, 1
  %v4949 = vsel %vm4192, %v4948, %v4947
  %v4950 = vsel %vm4195, %v1182, %v4949
  %v4951 = vrot.slane %v1214, 7
  %v4952 = vsel %vm4198, %v4951, %v4950
  %v4953 = vrot.slane %v1246, 6
  %v4954 = vsel %vm4201, %v4953, %v4952
  %v4955 = vrot.slane %v1278, 5
  %v4956 = vsel %vm4204, %v4955, %v4954
  %v4957 = vrot.slane %v1310, 4
  %v4958 = vsel %vm4207, %v4957, %v4956
  %v4959 = vrot.slane %v1342, 3
  %v4960 = vrot.slane %v1374, 2
  %v4961 = vsel %vm4189, %v4960, %v4959
  %v4962 = vrot.slane %v1406, 1
  %v4963 = vsel %vm4192, %v4962, %v4961
  %v4964 = vsel %vm4195, %v1438, %v4963
  %v4965 = vrot.slane %v1470, 7
  %v4966 = vsel %vm4198, %v4965, %v4964
  %v4967 = vrot.slane %v1502, 6
  %v4968 = vsel %vm4201, %v4967, %v4966
  %v4969 = vrot.slane %v1534, 5
  %v4970 = vsel %vm4204, %v4969, %v4968
  %v4971 = vrot.slane %v1566, 4
  %v4972 = vsel %vm4207, %v4971, %v4970
  %v4973 = vrot.slane %v1598, 3
  %v4974 = vrot.slane %v1630, 2
  %v4975 = vsel %vm4189, %v4974, %v4973
  %v4976 = vrot.slane %v1662, 1
  %v4977 = vsel %vm4192, %v4976, %v4975
  %v4978 = vsel %vm4195, %v1694, %v4977
  %v4979 = vrot.slane %v1726, 7
  %v4980 = vsel %vm4198, %v4979, %v4978
  %v4981 = vrot.slane %v1758, 6
  %v4982 = vsel %vm4201, %v4981, %v4980
  %v4983 = vrot.slane %v1790, 5
  %v4984 = vsel %vm4204, %v4983, %v4982
  %v4985 = vrot.slane %v1822, 4
  %v4986 = vsel %vm4207, %v4985, %v4984
  %v4987 = vrot.slane %v1854, 3
  %v4988 = vrot.slane %v1886, 2
  %v4989 = vsel %vm4189, %v4988, %v4987
  %v4990 = vrot.slane %v1918, 1
  %v4991 = vsel %vm4192, %v4990, %v4989
  %v4992 = vsel %vm4195, %v1950, %v4991
  %v4993 = vrot.slane %v1982, 7
  %v4994 = vsel %vm4198, %v4993, %v4992
  %v4995 = vrot.slane %v2014, 6
  %v4996 = vsel %vm4201, %v4995, %v4994
  %v4997 = vrot.slane %v2046, 5
  %v4998 = vsel %vm4204, %v4997, %v4996
  %v4999 = vrot.slane %v2078, 4
  %v5000 = vsel %vm4207, %v4999, %v4998
  %v5001 = vrot.slane %v2110, 3
  %v5002 = vrot.slane %v2142, 2
  %v5003 = vsel %vm4189, %v5002, %v5001
  %v5004 = vrot.slane %v2174, 1
  %v5005 = vsel %vm4192, %v5004, %v5003
  %v5006 = vsel %vm4195, %v2206, %v5005
  %v5007 = vrot.slane %v2238, 7
  %v5008 = vsel %vm4198, %v5007, %v5006
  %v5009 = vrot.slane %v2270, 6
  %v5010 = vsel %vm4201, %v5009, %v5008
  %v5011 = vrot.slane %v2302, 5
  %v5012 = vsel %vm4204, %v5011, %v5010
  %v5013 = vrot.slane %v2334, 4
  %v5014 = vsel %vm4207, %v5013, %v5012
  %v5015 = vrot.slane %v2366, 3
  %v5016 = vrot.slane %v2398, 2
  %v5017 = vsel %vm4189, %v5016, %v5015
  %v5018 = vrot.slane %v2430, 1
  %v5019 = vsel %vm4192, %v5018, %v5017
  %v5020 = vsel %vm4195, %v2462, %v5019
  %v5021 = vrot.slane %v2494, 7
  %v5022 = vsel %vm4198, %v5021, %v5020
  %v5023 = vrot.slane %v2526, 6
  %v5024 = vsel %vm4201, %v5023, %v5022
  %v5025 = vrot.slane %v2558, 5
  %v5026 = vsel %vm4204, %v5025, %v5024
  %v5027 = vrot.slane %v2590, 4
  %v5028 = vsel %vm4207, %v5027, %v5026
  %v5029 = vrot.slane %v2622, 3
  %v5030 = vrot.slane %v2654, 2
  %v5031 = vsel %vm4189, %v5030, %v5029
  %v5032 = vrot.slane %v2686, 1
  %v5033 = vsel %vm4192, %v5032, %v5031
  %v5034 = vsel %vm4195, %v2718, %v5033
  %v5035 = vrot.slane %v2750, 7
  %v5036 = vsel %vm4198, %v5035, %v5034
  %v5037 = vrot.slane %v2782, 6
  %v5038 = vsel %vm4201, %v5037, %v5036
  %v5039 = vrot.slane %v2814, 5
  %v5040 = vsel %vm4204, %v5039, %v5038
  %v5041 = vrot.slane %v2846, 4
  %v5042 = vsel %vm4207, %v5041, %v5040
  %v5043 = vrot.slane %v2878, 3
  %v5044 = vrot.slane %v2910, 2
  %v5045 = vsel %vm4189, %v5044, %v5043
  %v5046 = vrot.slane %v2942, 1
  %v5047 = vsel %vm4192, %v5046, %v5045
  %v5048 = vsel %vm4195, %v2974, %v5047
  %v5049 = vrot.slane %v3006, 7
  %v5050 = vsel %vm4198, %v5049, %v5048
  %v5051 = vrot.slane %v3038, 6
  %v5052 = vsel %vm4201, %v5051, %v5050
  %v5053 = vrot.slane %v3070, 5
  %v5054 = vsel %vm4204, %v5053, %v5052
  %v5055 = vrot.slane %v3102, 4
  %v5056 = vsel %vm4207, %v5055, %v5054
  %v5057 = vrot.slane %v3134, 3
  %v5058 = vrot.slane %v3166, 2
  %v5059 = vsel %vm4189, %v5058, %v5057
  %v5060 = vrot.slane %v3198, 1
  %v5061 = vsel %vm4192, %v5060, %v5059
  %v5062 = vsel %vm4195, %v3230, %v5061
  %v5063 = vrot.slane %v3262, 7
  %v5064 = vsel %vm4198, %v5063, %v5062
  %v5065 = vrot.slane %v3294, 6
  %v5066 = vsel %vm4201, %v5065, %v5064
  %v5067 = vrot.slane %v3326, 5
  %v5068 = vsel %vm4204, %v5067, %v5066
  %v5069 = vrot.slane %v3358, 4
  %v5070 = vsel %vm4207, %v5069, %v5068
  %v5071 = vrot.slane %v3390, 3
  %v5072 = vrot.slane %v3422, 2
  %v5073 = vsel %vm4189, %v5072, %v5071
  %v5074 = vrot.slane %v3454, 1
  %v5075 = vsel %vm4192, %v5074, %v5073
  %v5076 = vsel %vm4195, %v3486, %v5075
  %v5077 = vrot.slane %v3518, 7
  %v5078 = vsel %vm4198, %v5077, %v5076
  %v5079 = vrot.slane %v3550, 6
  %v5080 = vsel %vm4201, %v5079, %v5078
  %v5081 = vrot.slane %v3582, 5
  %v5082 = vsel %vm4204, %v5081, %v5080
  %v5083 = vrot.slane %v3614, 4
  %v5084 = vsel %vm4207, %v5083, %v5082
  %v5085 = vrot.slane %v3646, 3
  %v5086 = vrot.slane %v3678, 2
  %v5087 = vsel %vm4189, %v5086, %v5085
  %v5088 = vrot.slane %v3710, 1
  %v5089 = vsel %vm4192, %v5088, %v5087
  %v5090 = vsel %vm4195, %v3742, %v5089
  %v5091 = vrot.slane %v3774, 7
  %v5092 = vsel %vm4198, %v5091, %v5090
  %v5093 = vrot.slane %v3806, 6
  %v5094 = vsel %vm4201, %v5093, %v5092
  %v5095 = vrot.slane %v3838, 5
  %v5096 = vsel %vm4204, %v5095, %v5094
  %v5097 = vrot.slane %v3870, 4
  %v5098 = vsel %vm4207, %v5097, %v5096
  %v5099 = vrot.slane %v3902, 3
  %v5100 = vrot.slane %v3934, 2
  %v5101 = vsel %vm4189, %v5100, %v5099
  %v5102 = vrot.slane %v3966, 1
  %v5103 = vsel %vm4192, %v5102, %v5101
  %v5104 = vsel %vm4195, %v3998, %v5103
  %v5105 = vrot.slane %v4030, 7
  %v5106 = vsel %vm4198, %v5105, %v5104
  %v5107 = vrot.slane %v4062, 6
  %v5108 = vsel %vm4201, %v5107, %v5106
  %5109 = vrot.lane.b32.xlu0 %v4930, 105
  %v5110 = vpop.permute.xlu0 %5109
  %5111 = vrot.lane.b32.xlu0 %v4944, 105
  %v5112 = vpop.permute.xlu0 %5111
  %5113 = vrot.lane.b32.xlu0 %v4958, 105
  %v5114 = vpop.permute.xlu0 %5113
  %5115 = vrot.lane.b32.xlu0 %v4972, 105
  %v5116 = vpop.permute.xlu0 %5115
  %5117 = vrot.lane.b32.xlu0 %v4986, 105
  %v5118 = vpop.permute.xlu0 %5117
  %5119 = vrot.lane.b32.xlu0 %v5000, 105
  %v5120 = vpop.permute.xlu0 %5119
  %5121 = vrot.lane.b32.xlu0 %v5014, 105
  %v5122 = vpop.permute.xlu0 %5121
  %5123 = vrot.lane.b32.xlu0 %v5028, 105
  %v5124 = vpop.permute.xlu0 %5123
  %5125 = vrot.lane.b32.xlu0 %v5042, 105
  %v5126 = vpop.permute.xlu0 %5125
  %5127 = vrot.lane.b32.xlu0 %v5056, 105
  %v5128 = vpop.permute.xlu0 %5127
  %5129 = vrot.lane.b32.xlu0 %v5070, 105
  %v5130 = vpop.permute.xlu0 %5129
  %5131 = vrot.lane.b32.xlu0 %v5084, 105
  %v5132 = vpop.permute.xlu0 %5131
  %5133 = vrot.lane.b32.xlu0 %v5098, 105
  %v5134 = vpop.permute.xlu0 %5133
  %5135 = vrot.lane.b32.xlu0 %v5108, 105
  %v5136 = vpop.permute.xlu0 %5135
  %vm5151 = vcmask 1048392
  %5152 = vst.msk [vmem:[%s1] sm:$0xff] %vm5151, %v5110
  %vm5153 = vcmask 97280
  %5154 = vst.msk [vmem:[%s1 + $0x8] sm:$0xff] %vm5153, %v5110
  %5155 = vst.msk [vmem:[%s1 + $0x10] sm:$0xff] %vm5151, %v5112
  %5156 = vst.msk [vmem:[%s1 + $0x18] sm:$0xff] %vm5153, %v5112
  %5157 = vst.msk [vmem:[%s1 + $0x20] sm:$0xff] %vm5151, %v5114
  %5158 = vst.msk [vmem:[%s1 + $0x28] sm:$0xff] %vm5153, %v5114
  %5159 = vst.msk [vmem:[%s1 + $0x30] sm:$0xff] %vm5151, %v5116
  %5160 = vst.msk [vmem:[%s1 + $0x38] sm:$0xff] %vm5153, %v5116
  %5161 = vst.msk [vmem:[%s1 + $0x40] sm:$0xff] %vm5151, %v5118
  %5162 = vst.msk [vmem:[%s1 + $0x48] sm:$0xff] %vm5153, %v5118
  %5163 = vst.msk [vmem:[%s1 + $0x50] sm:$0xff] %vm5151, %v5120
  %5164 = vst.msk [vmem:[%s1 + $0x58] sm:$0xff] %vm5153, %v5120
  %5165 = vst.msk [vmem:[%s1 + $0x60] sm:$0xff] %vm5151, %v5122
  %5166 = vst.msk [vmem:[%s1 + $0x68] sm:$0xff] %vm5153, %v5122
  %5167 = vst.msk [vmem:[%s1 + $0x70] sm:$0xff] %vm5151, %v5124
  %5168 = vst.msk [vmem:[%s1 + $0x78] sm:$0xff] %vm5153, %v5124
  %5169 = vst.msk [vmem:[%s1 + $0x80] sm:$0xff] %vm5151, %v5126
  %5170 = vst.msk [vmem:[%s1 + $0x88] sm:$0xff] %vm5153, %v5126
  %5171 = vst.msk [vmem:[%s1 + $0x90] sm:$0xff] %vm5151, %v5128
  %5172 = vst.msk [vmem:[%s1 + $0x98] sm:$0xff] %vm5153, %v5128
  %5173 = vst.msk [vmem:[%s1 + $0xa0] sm:$0xff] %vm5151, %v5130
  %5174 = vst.msk [vmem:[%s1 + $0xa8] sm:$0xff] %vm5153, %v5130
  %5175 = vst.msk [vmem:[%s1 + $0xb0] sm:$0xff] %vm5151, %v5132
  %5176 = vst.msk [vmem:[%s1 + $0xb8] sm:$0xff] %vm5153, %v5132
  %5177 = vst.msk [vmem:[%s1 + $0xc0] sm:$0xff] %vm5151, %v5134
  %5178 = vst.msk [vmem:[%s1 + $0xc8] sm:$0xff] %vm5153, %v5134
  %vm5179 = vcmask 1046344
  %5180 = vst.msk [vmem:[%s1 + $0xd0] sm:$0x3f] %vm5179, %v5136
  %vm5181 = vcmask 95232
  %5182 = vst.msk [vmem:[%s1 + $0xd8] sm:$0x3f] %vm5181, %v5136
  %v5183 = vrot.slane %v574, 4
  %v5184 = vrot.slane %v606, 3
  %v5185 = vsel %vm4189, %v5184, %v5183
  %v5186 = vrot.slane %v638, 2
  %v5187 = vsel %vm4192, %v5186, %v5185
  %v5188 = vrot.slane %v670, 1
  %v5189 = vsel %vm4195, %v5188, %v5187
  %v5190 = vsel %vm4198, %v702, %v5189
  %v5191 = vrot.slane %v734, 7
  %v5192 = vsel %vm4201, %v5191, %v5190
  %v5193 = vrot.slane %v766, 6
  %v5194 = vsel %vm4204, %v5193, %v5192
  %v5195 = vrot.slane %v798, 5
  %v5196 = vsel %vm4207, %v5195, %v5194
  %v5197 = vrot.slane %v830, 4
  %v5198 = vrot.slane %v862, 3
  %v5199 = vsel %vm4189, %v5198, %v5197
  %v5200 = vrot.slane %v894, 2
  %v5201 = vsel %vm4192, %v5200, %v5199
  %v5202 = vrot.slane %v926, 1
  %v5203 = vsel %vm4195, %v5202, %v5201
  %v5204 = vsel %vm4198, %v958, %v5203
  %v5205 = vrot.slane %v990, 7
  %v5206 = vsel %vm4201, %v5205, %v5204
  %v5207 = vrot.slane %v1022, 6
  %v5208 = vsel %vm4204, %v5207, %v5206
  %v5209 = vrot.slane %v1054, 5
  %v5210 = vsel %vm4207, %v5209, %v5208
  %v5211 = vrot.slane %v1086, 4
  %v5212 = vrot.slane %v1118, 3
  %v5213 = vsel %vm4189, %v5212, %v5211
  %v5214 = vrot.slane %v1150, 2
  %v5215 = vsel %vm4192, %v5214, %v5213
  %v5216 = vrot.slane %v1182, 1
  %v5217 = vsel %vm4195, %v5216, %v5215
  %v5218 = vsel %vm4198, %v1214, %v5217
  %v5219 = vrot.slane %v1246, 7
  %v5220 = vsel %vm4201, %v5219, %v5218
  %v5221 = vrot.slane %v1278, 6
  %v5222 = vsel %vm4204, %v5221, %v5220
  %v5223 = vrot.slane %v1310, 5
  %v5224 = vsel %vm4207, %v5223, %v5222
  %v5225 = vrot.slane %v1342, 4
  %v5226 = vrot.slane %v1374, 3
  %v5227 = vsel %vm4189, %v5226, %v5225
  %v5228 = vrot.slane %v1406, 2
  %v5229 = vsel %vm4192, %v5228, %v5227
  %v5230 = vrot.slane %v1438, 1
  %v5231 = vsel %vm4195, %v5230, %v5229
  %v5232 = vsel %vm4198, %v1470, %v5231
  %v5233 = vrot.slane %v1502, 7
  %v5234 = vsel %vm4201, %v5233, %v5232
  %v5235 = vrot.slane %v1534, 6
  %v5236 = vsel %vm4204, %v5235, %v5234
  %v5237 = vrot.slane %v1566, 5
  %v5238 = vsel %vm4207, %v5237, %v5236
  %v5239 = vrot.slane %v1598, 4
  %v5240 = vrot.slane %v1630, 3
  %v5241 = vsel %vm4189, %v5240, %v5239
  %v5242 = vrot.slane %v1662, 2
  %v5243 = vsel %vm4192, %v5242, %v5241
  %v5244 = vrot.slane %v1694, 1
  %v5245 = vsel %vm4195, %v5244, %v5243
  %v5246 = vsel %vm4198, %v1726, %v5245
  %v5247 = vrot.slane %v1758, 7
  %v5248 = vsel %vm4201, %v5247, %v5246
  %v5249 = vrot.slane %v1790, 6
  %v5250 = vsel %vm4204, %v5249, %v5248
  %v5251 = vrot.slane %v1822, 5
  %v5252 = vsel %vm4207, %v5251, %v5250
  %v5253 = vrot.slane %v1854, 4
  %v5254 = vrot.slane %v1886, 3
  %v5255 = vsel %vm4189, %v5254, %v5253
  %v5256 = vrot.slane %v1918, 2
  %v5257 = vsel %vm4192, %v5256, %v5255
  %v5258 = vrot.slane %v1950, 1
  %v5259 = vsel %vm4195, %v5258, %v5257
  %v5260 = vsel %vm4198, %v1982, %v5259
  %v5261 = vrot.slane %v2014, 7
  %v5262 = vsel %vm4201, %v5261, %v5260
  %v5263 = vrot.slane %v2046, 6
  %v5264 = vsel %vm4204, %v5263, %v5262
  %v5265 = vrot.slane %v2078, 5
  %v5266 = vsel %vm4207, %v5265, %v5264
  %v5267 = vrot.slane %v2110, 4
  %v5268 = vrot.slane %v2142, 3
  %v5269 = vsel %vm4189, %v5268, %v5267
  %v5270 = vrot.slane %v2174, 2
  %v5271 = vsel %vm4192, %v5270, %v5269
  %v5272 = vrot.slane %v2206, 1
  %v5273 = vsel %vm4195, %v5272, %v5271
  %v5274 = vsel %vm4198, %v2238, %v5273
  %v5275 = vrot.slane %v2270, 7
  %v5276 = vsel %vm4201, %v5275, %v5274
  %v5277 = vrot.slane %v2302, 6
  %v5278 = vsel %vm4204, %v5277, %v5276
  %v5279 = vrot.slane %v2334, 5
  %v5280 = vsel %vm4207, %v5279, %v5278
  %v5281 = vrot.slane %v2366, 4
  %v5282 = vrot.slane %v2398, 3
  %v5283 = vsel %vm4189, %v5282, %v5281
  %v5284 = vrot.slane %v2430, 2
  %v5285 = vsel %vm4192, %v5284, %v5283
  %v5286 = vrot.slane %v2462, 1
  %v5287 = vsel %vm4195, %v5286, %v5285
  %v5288 = vsel %vm4198, %v2494, %v5287
  %v5289 = vrot.slane %v2526, 7
  %v5290 = vsel %vm4201, %v5289, %v5288
  %v5291 = vrot.slane %v2558, 6
  %v5292 = vsel %vm4204, %v5291, %v5290
  %v5293 = vrot.slane %v2590, 5
  %v5294 = vsel %vm4207, %v5293, %v5292
  %v5295 = vrot.slane %v2622, 4
  %v5296 = vrot.slane %v2654, 3
  %v5297 = vsel %vm4189, %v5296, %v5295
  %v5298 = vrot.slane %v2686, 2
  %v5299 = vsel %vm4192, %v5298, %v5297
  %v5300 = vrot.slane %v2718, 1
  %v5301 = vsel %vm4195, %v5300, %v5299
  %v5302 = vsel %vm4198, %v2750, %v5301
  %v5303 = vrot.slane %v2782, 7
  %v5304 = vsel %vm4201, %v5303, %v5302
  %v5305 = vrot.slane %v2814, 6
  %v5306 = vsel %vm4204, %v5305, %v5304
  %v5307 = vrot.slane %v2846, 5
  %v5308 = vsel %vm4207, %v5307, %v5306
  %v5309 = vrot.slane %v2878, 4
  %v5310 = vrot.slane %v2910, 3
  %v5311 = vsel %vm4189, %v5310, %v5309
  %v5312 = vrot.slane %v2942, 2
  %v5313 = vsel %vm4192, %v5312, %v5311
  %v5314 = vrot.slane %v2974, 1
  %v5315 = vsel %vm4195, %v5314, %v5313
  %v5316 = vsel %vm4198, %v3006, %v5315
  %v5317 = vrot.slane %v3038, 7
  %v5318 = vsel %vm4201, %v5317, %v5316
  %v5319 = vrot.slane %v3070, 6
  %v5320 = vsel %vm4204, %v5319, %v5318
  %v5321 = vrot.slane %v3102, 5
  %v5322 = vsel %vm4207, %v5321, %v5320
  %v5323 = vrot.slane %v3134, 4
  %v5324 = vrot.slane %v3166, 3
  %v5325 = vsel %vm4189, %v5324, %v5323
  %v5326 = vrot.slane %v3198, 2
  %v5327 = vsel %vm4192, %v5326, %v5325
  %v5328 = vrot.slane %v3230, 1
  %v5329 = vsel %vm4195, %v5328, %v5327
  %v5330 = vsel %vm4198, %v3262, %v5329
  %v5331 = vrot.slane %v3294, 7
  %v5332 = vsel %vm4201, %v5331, %v5330
  %v5333 = vrot.slane %v3326, 6
  %v5334 = vsel %vm4204, %v5333, %v5332
  %v5335 = vrot.slane %v3358, 5
  %v5336 = vsel %vm4207, %v5335, %v5334
  %v5337 = vrot.slane %v3390, 4
  %v5338 = vrot.slane %v3422, 3
  %v5339 = vsel %vm4189, %v5338, %v5337
  %v5340 = vrot.slane %v3454, 2
  %v5341 = vsel %vm4192, %v5340, %v5339
  %v5342 = vrot.slane %v3486, 1
  %v5343 = vsel %vm4195, %v5342, %v5341
  %v5344 = vsel %vm4198, %v3518, %v5343
  %v5345 = vrot.slane %v3550, 7
  %v5346 = vsel %vm4201, %v5345, %v5344
  %v5347 = vrot.slane %v3582, 6
  %v5348 = vsel %vm4204, %v5347, %v5346
  %v5349 = vrot.slane %v3614, 5
  %v5350 = vsel %vm4207, %v5349, %v5348
  %v5351 = vrot.slane %v3646, 4
  %v5352 = vrot.slane %v3678, 3
  %v5353 = vsel %vm4189, %v5352, %v5351
  %v5354 = vrot.slane %v3710, 2
  %v5355 = vsel %vm4192, %v5354, %v5353
  %v5356 = vrot.slane %v3742, 1
  %v5357 = vsel %vm4195, %v5356, %v5355
  %v5358 = vsel %vm4198, %v3774, %v5357
  %v5359 = vrot.slane %v3806, 7
  %v5360 = vsel %vm4201, %v5359, %v5358
  %v5361 = vrot.slane %v3838, 6
  %v5362 = vsel %vm4204, %v5361, %v5360
  %v5363 = vrot.slane %v3870, 5
  %v5364 = vsel %vm4207, %v5363, %v5362
  %v5365 = vrot.slane %v3902, 4
  %v5366 = vrot.slane %v3934, 3
  %v5367 = vsel %vm4189, %v5366, %v5365
  %v5368 = vrot.slane %v3966, 2
  %v5369 = vsel %vm4192, %v5368, %v5367
  %v5370 = vrot.slane %v3998, 1
  %v5371 = vsel %vm4195, %v5370, %v5369
  %v5372 = vsel %vm4198, %v4030, %v5371
  %v5373 = vrot.slane %v4062, 7
  %v5374 = vsel %vm4201, %v5373, %v5372
  %5375 = vrot.lane.b32.xlu0 %v5196, 12
  %v5376 = vpop.permute.xlu0 %5375
  %5377 = vrot.lane.b32.xlu0 %v5210, 12
  %v5378 = vpop.permute.xlu0 %5377
  %5379 = vrot.lane.b32.xlu0 %v5224, 12
  %v5380 = vpop.permute.xlu0 %5379
  %5381 = vrot.lane.b32.xlu0 %v5238, 12
  %v5382 = vpop.permute.xlu0 %5381
  %5383 = vrot.lane.b32.xlu0 %v5252, 12
  %v5384 = vpop.permute.xlu0 %5383
  %5385 = vrot.lane.b32.xlu0 %v5266, 12
  %v5386 = vpop.permute.xlu0 %5385
  %5387 = vrot.lane.b32.xlu0 %v5280, 12
  %v5388 = vpop.permute.xlu0 %5387
  %5389 = vrot.lane.b32.xlu0 %v5294, 12
  %v5390 = vpop.permute.xlu0 %5389
  %5391 = vrot.lane.b32.xlu0 %v5308, 12
  %v5392 = vpop.permute.xlu0 %5391
  %5393 = vrot.lane.b32.xlu0 %v5322, 12
  %v5394 = vpop.permute.xlu0 %5393
  %5395 = vrot.lane.b32.xlu0 %v5336, 12
  %v5396 = vpop.permute.xlu0 %5395
  %5397 = vrot.lane.b32.xlu0 %v5350, 12
  %v5398 = vpop.permute.xlu0 %5397
  %5399 = vrot.lane.b32.xlu0 %v5364, 12
  %v5400 = vpop.permute.xlu0 %5399
  %5401 = vrot.lane.b32.xlu0 %v5374, 12
  %v5402 = vpop.permute.xlu0 %5401
  %vm5417 = vcmask 384096
  %5418 = vst.msk [vmem:[%s1 + $0x8] sm:$0xff] %vm5417, %v5376
  %5419 = vst.msk [vmem:[%s1 + $0x18] sm:$0xff] %vm5417, %v5378
  %5420 = vst.msk [vmem:[%s1 + $0x28] sm:$0xff] %vm5417, %v5380
  %5421 = vst.msk [vmem:[%s1 + $0x38] sm:$0xff] %vm5417, %v5382
  %5422 = vst.msk [vmem:[%s1 + $0x48] sm:$0xff] %vm5417, %v5384
  %5423 = vst.msk [vmem:[%s1 + $0x58] sm:$0xff] %vm5417, %v5386
  %5424 = vst.msk [vmem:[%s1 + $0x68] sm:$0xff] %vm5417, %v5388
  %5425 = vst.msk [vmem:[%s1 + $0x78] sm:$0xff] %vm5417, %v5390
  %5426 = vst.msk [vmem:[%s1 + $0x88] sm:$0xff] %vm5417, %v5392
  %5427 = vst.msk [vmem:[%s1 + $0x98] sm:$0xff] %vm5417, %v5394
  %5428 = vst.msk [vmem:[%s1 + $0xa8] sm:$0xff] %vm5417, %v5396
  %5429 = vst.msk [vmem:[%s1 + $0xb8] sm:$0xff] %vm5417, %v5398
  %5430 = vst.msk [vmem:[%s1 + $0xc8] sm:$0xff] %vm5417, %v5400
  %vm5431 = vcmask 382048
  %5432 = vst.msk [vmem:[%s1 + $0xd8] sm:$0x3f] %vm5431, %v5402
  %v5433 = vrot.slane %v574, 5
  %v5434 = vrot.slane %v606, 4
  %v5435 = vsel %vm4189, %v5434, %v5433
  %v5436 = vrot.slane %v638, 3
  %v5437 = vsel %vm4192, %v5436, %v5435
  %v5438 = vrot.slane %v670, 2
  %v5439 = vsel %vm4195, %v5438, %v5437
  %v5440 = vrot.slane %v702, 1
  %v5441 = vsel %vm4198, %v5440, %v5439
  %v5442 = vsel %vm4201, %v734, %v5441
  %v5443 = vrot.slane %v766, 7
  %v5444 = vsel %vm4204, %v5443, %v5442
  %v5445 = vrot.slane %v798, 6
  %v5446 = vsel %vm4207, %v5445, %v5444
  %v5447 = vrot.slane %v830, 5
  %v5448 = vrot.slane %v862, 4
  %v5449 = vsel %vm4189, %v5448, %v5447
  %v5450 = vrot.slane %v894, 3
  %v5451 = vsel %vm4192, %v5450, %v5449
  %v5452 = vrot.slane %v926, 2
  %v5453 = vsel %vm4195, %v5452, %v5451
  %v5454 = vrot.slane %v958, 1
  %v5455 = vsel %vm4198, %v5454, %v5453
  %v5456 = vsel %vm4201, %v990, %v5455
  %v5457 = vrot.slane %v1022, 7
  %v5458 = vsel %vm4204, %v5457, %v5456
  %v5459 = vrot.slane %v1054, 6
  %v5460 = vsel %vm4207, %v5459, %v5458
  %v5461 = vrot.slane %v1086, 5
  %v5462 = vrot.slane %v1118, 4
  %v5463 = vsel %vm4189, %v5462, %v5461
  %v5464 = vrot.slane %v1150, 3
  %v5465 = vsel %vm4192, %v5464, %v5463
  %v5466 = vrot.slane %v1182, 2
  %v5467 = vsel %vm4195, %v5466, %v5465
  %v5468 = vrot.slane %v1214, 1
  %v5469 = vsel %vm4198, %v5468, %v5467
  %v5470 = vsel %vm4201, %v1246, %v5469
  %v5471 = vrot.slane %v1278, 7
  %v5472 = vsel %vm4204, %v5471, %v5470
  %v5473 = vrot.slane %v1310, 6
  %v5474 = vsel %vm4207, %v5473, %v5472
  %v5475 = vrot.slane %v1342, 5
  %v5476 = vrot.slane %v1374, 4
  %v5477 = vsel %vm4189, %v5476, %v5475
  %v5478 = vrot.slane %v1406, 3
  %v5479 = vsel %vm4192, %v5478, %v5477
  %v5480 = vrot.slane %v1438, 2
  %v5481 = vsel %vm4195, %v5480, %v5479
  %v5482 = vrot.slane %v1470, 1
  %v5483 = vsel %vm4198, %v5482, %v5481
  %v5484 = vsel %vm4201, %v1502, %v5483
  %v5485 = vrot.slane %v1534, 7
  %v5486 = vsel %vm4204, %v5485, %v5484
  %v5487 = vrot.slane %v1566, 6
  %v5488 = vsel %vm4207, %v5487, %v5486
  %v5489 = vrot.slane %v1598, 5
  %v5490 = vrot.slane %v1630, 4
  %v5491 = vsel %vm4189, %v5490, %v5489
  %v5492 = vrot.slane %v1662, 3
  %v5493 = vsel %vm4192, %v5492, %v5491
  %v5494 = vrot.slane %v1694, 2
  %v5495 = vsel %vm4195, %v5494, %v5493
  %v5496 = vrot.slane %v1726, 1
  %v5497 = vsel %vm4198, %v5496, %v5495
  %v5498 = vsel %vm4201, %v1758, %v5497
  %v5499 = vrot.slane %v1790, 7
  %v5500 = vsel %vm4204, %v5499, %v5498
  %v5501 = vrot.slane %v1822, 6
  %v5502 = vsel %vm4207, %v5501, %v5500
  %v5503 = vrot.slane %v1854, 5
  %v5504 = vrot.slane %v1886, 4
  %v5505 = vsel %vm4189, %v5504, %v5503
  %v5506 = vrot.slane %v1918, 3
  %v5507 = vsel %vm4192, %v5506, %v5505
  %v5508 = vrot.slane %v1950, 2
  %v5509 = vsel %vm4195, %v5508, %v5507
  %v5510 = vrot.slane %v1982, 1
  %v5511 = vsel %vm4198, %v5510, %v5509
  %v5512 = vsel %vm4201, %v2014, %v5511
  %v5513 = vrot.slane %v2046, 7
  %v5514 = vsel %vm4204, %v5513, %v5512
  %v5515 = vrot.slane %v2078, 6
  %v5516 = vsel %vm4207, %v5515, %v5514
  %v5517 = vrot.slane %v2110, 5
  %v5518 = vrot.slane %v2142, 4
  %v5519 = vsel %vm4189, %v5518, %v5517
  %v5520 = vrot.slane %v2174, 3
  %v5521 = vsel %vm4192, %v5520, %v5519
  %v5522 = vrot.slane %v2206, 2
  %v5523 = vsel %vm4195, %v5522, %v5521
  %v5524 = vrot.slane %v2238, 1
  %v5525 = vsel %vm4198, %v5524, %v5523
  %v5526 = vsel %vm4201, %v2270, %v5525
  %v5527 = vrot.slane %v2302, 7
  %v5528 = vsel %vm4204, %v5527, %v5526
  %v5529 = vrot.slane %v2334, 6
  %v5530 = vsel %vm4207, %v5529, %v5528
  %v5531 = vrot.slane %v2366, 5
  %v5532 = vrot.slane %v2398, 4
  %v5533 = vsel %vm4189, %v5532, %v5531
  %v5534 = vrot.slane %v2430, 3
  %v5535 = vsel %vm4192, %v5534, %v5533
  %v5536 = vrot.slane %v2462, 2
  %v5537 = vsel %vm4195, %v5536, %v5535
  %v5538 = vrot.slane %v2494, 1
  %v5539 = vsel %vm4198, %v5538, %v5537
  %v5540 = vsel %vm4201, %v2526, %v5539
  %v5541 = vrot.slane %v2558, 7
  %v5542 = vsel %vm4204, %v5541, %v5540
  %v5543 = vrot.slane %v2590, 6
  %v5544 = vsel %vm4207, %v5543, %v5542
  %v5545 = vrot.slane %v2622, 5
  %v5546 = vrot.slane %v2654, 4
  %v5547 = vsel %vm4189, %v5546, %v5545
  %v5548 = vrot.slane %v2686, 3
  %v5549 = vsel %vm4192, %v5548, %v5547
  %v5550 = vrot.slane %v2718, 2
  %v5551 = vsel %vm4195, %v5550, %v5549
  %v5552 = vrot.slane %v2750, 1
  %v5553 = vsel %vm4198, %v5552, %v5551
  %v5554 = vsel %vm4201, %v2782, %v5553
  %v5555 = vrot.slane %v2814, 7
  %v5556 = vsel %vm4204, %v5555, %v5554
  %v5557 = vrot.slane %v2846, 6
  %v5558 = vsel %vm4207, %v5557, %v5556
  %v5559 = vrot.slane %v2878, 5
  %v5560 = vrot.slane %v2910, 4
  %v5561 = vsel %vm4189, %v5560, %v5559
  %v5562 = vrot.slane %v2942, 3
  %v5563 = vsel %vm4192, %v5562, %v5561
  %v5564 = vrot.slane %v2974, 2
  %v5565 = vsel %vm4195, %v5564, %v5563
  %v5566 = vrot.slane %v3006, 1
  %v5567 = vsel %vm4198, %v5566, %v5565
  %v5568 = vsel %vm4201, %v3038, %v5567
  %v5569 = vrot.slane %v3070, 7
  %v5570 = vsel %vm4204, %v5569, %v5568
  %v5571 = vrot.slane %v3102, 6
  %v5572 = vsel %vm4207, %v5571, %v5570
  %v5573 = vrot.slane %v3134, 5
  %v5574 = vrot.slane %v3166, 4
  %v5575 = vsel %vm4189, %v5574, %v5573
  %v5576 = vrot.slane %v3198, 3
  %v5577 = vsel %vm4192, %v5576, %v5575
  %v5578 = vrot.slane %v3230, 2
  %v5579 = vsel %vm4195, %v5578, %v5577
  %v5580 = vrot.slane %v3262, 1
  %v5581 = vsel %vm4198, %v5580, %v5579
  %v5582 = vsel %vm4201, %v3294, %v5581
  %v5583 = vrot.slane %v3326, 7
  %v5584 = vsel %vm4204, %v5583, %v5582
  %v5585 = vrot.slane %v3358, 6
  %v5586 = vsel %vm4207, %v5585, %v5584
  %v5587 = vrot.slane %v3390, 5
  %v5588 = vrot.slane %v3422, 4
  %v5589 = vsel %vm4189, %v5588, %v5587
  %v5590 = vrot.slane %v3454, 3
  %v5591 = vsel %vm4192, %v5590, %v5589
  %v5592 = vrot.slane %v3486, 2
  %v5593 = vsel %vm4195, %v5592, %v5591
  %v5594 = vrot.slane %v3518, 1
  %v5595 = vsel %vm4198, %v5594, %v5593
  %v5596 = vsel %vm4201, %v3550, %v5595
  %v5597 = vrot.slane %v3582, 7
  %v5598 = vsel %vm4204, %v5597, %v5596
  %v5599 = vrot.slane %v3614, 6
  %v5600 = vsel %vm4207, %v5599, %v5598
  %v5601 = vrot.slane %v3646, 5
  %v5602 = vrot.slane %v3678, 4
  %v5603 = vsel %vm4189, %v5602, %v5601
  %v5604 = vrot.slane %v3710, 3
  %v5605 = vsel %vm4192, %v5604, %v5603
  %v5606 = vrot.slane %v3742, 2
  %v5607 = vsel %vm4195, %v5606, %v5605
  %v5608 = vrot.slane %v3774, 1
  %v5609 = vsel %vm4198, %v5608, %v5607
  %v5610 = vsel %vm4201, %v3806, %v5609
  %v5611 = vrot.slane %v3838, 7
  %v5612 = vsel %vm4204, %v5611, %v5610
  %v5613 = vrot.slane %v3870, 6
  %v5614 = vsel %vm4207, %v5613, %v5612
  %v5615 = vrot.slane %v3902, 5
  %v5616 = vrot.slane %v3934, 4
  %v5617 = vsel %vm4189, %v5616, %v5615
  %v5618 = vrot.slane %v3966, 3
  %v5619 = vsel %vm4192, %v5618, %v5617
  %v5620 = vrot.slane %v3998, 2
  %v5621 = vsel %vm4195, %v5620, %v5619
  %v5622 = vrot.slane %v4030, 1
  %v5623 = vsel %vm4198, %v5622, %v5621
  %v5624 = vsel %vm4201, %v4062, %v5623
  %5625 = vrot.lane.b32.xlu0 %v5446, 47
  %v5626 = vpop.permute.xlu0 %5625
  %5627 = vrot.lane.b32.xlu0 %v5460, 47
  %v5628 = vpop.permute.xlu0 %5627
  %5629 = vrot.lane.b32.xlu0 %v5474, 47
  %v5630 = vpop.permute.xlu0 %5629
  %5631 = vrot.lane.b32.xlu0 %v5488, 47
  %v5632 = vpop.permute.xlu0 %5631
  %5633 = vrot.lane.b32.xlu0 %v5502, 47
  %v5634 = vpop.permute.xlu0 %5633
  %5635 = vrot.lane.b32.xlu0 %v5516, 47
  %v5636 = vpop.permute.xlu0 %5635
  %5637 = vrot.lane.b32.xlu0 %v5530, 47
  %v5638 = vpop.permute.xlu0 %5637
  %5639 = vrot.lane.b32.xlu0 %v5544, 47
  %v5640 = vpop.permute.xlu0 %5639
  %5641 = vrot.lane.b32.xlu0 %v5558, 47
  %v5642 = vpop.permute.xlu0 %5641
  %5643 = vrot.lane.b32.xlu0 %v5572, 47
  %v5644 = vpop.permute.xlu0 %5643
  %5645 = vrot.lane.b32.xlu0 %v5586, 47
  %v5646 = vpop.permute.xlu0 %5645
  %5647 = vrot.lane.b32.xlu0 %v5600, 47
  %v5648 = vpop.permute.xlu0 %5647
  %5649 = vrot.lane.b32.xlu0 %v5614, 47
  %v5650 = vpop.permute.xlu0 %5649
  %5651 = vrot.lane.b32.xlu0 %v5624, 47
  %v5652 = vpop.permute.xlu0 %5651
  %vm5667 = vcmask 671096
  %5668 = vst.msk [vmem:[%s1 + $0x8] sm:$0xff] %vm5667, %v5626
  %5669 = vst.msk [vmem:[%s1 + $0x18] sm:$0xff] %vm5667, %v5628
  %5670 = vst.msk [vmem:[%s1 + $0x28] sm:$0xff] %vm5667, %v5630
  %5671 = vst.msk [vmem:[%s1 + $0x38] sm:$0xff] %vm5667, %v5632
  %5672 = vst.msk [vmem:[%s1 + $0x48] sm:$0xff] %vm5667, %v5634
  %5673 = vst.msk [vmem:[%s1 + $0x58] sm:$0xff] %vm5667, %v5636
  %5674 = vst.msk [vmem:[%s1 + $0x68] sm:$0xff] %vm5667, %v5638
  %5675 = vst.msk [vmem:[%s1 + $0x78] sm:$0xff] %vm5667, %v5640
  %5676 = vst.msk [vmem:[%s1 + $0x88] sm:$0xff] %vm5667, %v5642
  %5677 = vst.msk [vmem:[%s1 + $0x98] sm:$0xff] %vm5667, %v5644
  %5678 = vst.msk [vmem:[%s1 + $0xa8] sm:$0xff] %vm5667, %v5646
  %5679 = vst.msk [vmem:[%s1 + $0xb8] sm:$0xff] %vm5667, %v5648
  %5680 = vst.msk [vmem:[%s1 + $0xc8] sm:$0xff] %vm5667, %v5650
  %vm5681 = vcmask 669048
  %5682 = vst.msk [vmem:[%s1 + $0xd8] sm:$0x3f] %vm5681, %v5652
  // Predicated region
  $region6: #{tpu_custom_call.1} parent=0 // pred_check
    _
  $region7: #{tpu_custom_call.1} parent=0 // pred_check_branch
    %5684 = sbr.rel (0) target = $region9
  $region8: #{tpu_custom_call.1} parent=0 // pred_region
    _
  $region9: #{tpu_custom_call.1} parent=0 // pred_fallthru
    _
  // Predicated region
  $region10: #{tpu_custom_call.1} parent=0 // pred_check
    _
  $region11: #{tpu_custom_call.1} parent=0 // pred_check_branch
    %5686 = sbr.rel (0) target = $region13
  $region12: #{tpu_custom_call.1} parent=0 // pred_region
    _
  $region13: #{tpu_custom_call.1} parent=0 // pred_fallthru
    _

</llo_original>
